<compile_context>
chip_gen: v5e
topology: v5e:2x2
jax: 0.10.0
libtpu: 0.0.40
codegen_flags: <defaults>
</compile_context>

<pallas_src>
import functools

import jax
import jax.numpy as jnp
from jax import lax
from jax.experimental import pallas as pl
from jax.experimental.pallas import tpu as pltpu

BN_EPS = 1e-5
BB = 8          # batch rows per kernel-1 grid step (sublane-dense blocks)


def _round_up(x, m):
    return (x + m - 1) // m * m


# --------------------------------------------------------------------------
# Kernel 1: conv1 -> conv2 -> LSTM input projection, one grid step per batch
# group of BB samples. Output is (T2, B, 8H) f32 TIME-MAJOR: per timestep the
# concatenated [fwd | bwd] pre-activations x@Wih + (b_ih + b_hh), ready for
# the recurrence.
# --------------------------------------------------------------------------
def _cnn_proj_kernel(xp_ref, w1_ref, b1_ref, s1_ref, t1_ref,
                     w2_ref, b2_ref, wih_ref, bih_ref, o_ref, h1_s):
    T1, bb, KC = xp_ref.shape
    K = w2_ref.shape[0]
    C2 = w2_ref.shape[2]
    T2 = o_ref.shape[0]
    G8 = o_ref.shape[2]

    # conv1 (+ReLU + eval-mode BN1) as ONE im2col GEMM over bb samples.
    pat = xp_ref[...].reshape(T1 * bb, KC).astype(jnp.bfloat16)
    a1 = jnp.dot(pat, w1_ref[...], preferred_element_type=jnp.float32)
    h1 = jnp.maximum(a1 + b1_ref[...], 0.0) * s1_ref[...] + t1_ref[...]

    # Stage into 2D scratch; row j*bb + b <-> conv2-padded time j, sample b.
    # Zero ONLY the two conv2 zero-padding time rows (interior rows are fully
    # overwritten below). All stores are 8-row aligned (bb == 8), unmasked.
    h1_s[0:bb] = jnp.zeros((bb, 128), jnp.float32)
    h1_s[(1 + T1) * bb:(2 + T1) * bb] = jnp.zeros((bb, 128), jnp.float32)
    h1_s[bb:(1 + T1) * bb] = h1

    # conv2 (+ReLU; eval-mode BN2 folded into wih/bih): K depth-128 GEMM taps,
    # accumulated in f32. Tap loads start at multiples of 8 rows.
    a2 = jnp.zeros((T2 * bb, C2), jnp.float32)
    for k in range(K):                                   # static unroll
        tap = h1_s[k * bb:(k + T2) * bb].astype(jnp.bfloat16)
        a2 = a2 + jnp.dot(tap, w2_ref[k], preferred_element_type=jnp.float32)
    h2 = jnp.maximum(a2 + b2_ref[...], 0.0)

    # LSTM input projection for BOTH directions; b_ih+b_hh and BN2 folded in
    # (off the recurrence's critical path).
    proj = jnp.dot(h2.astype(jnp.bfloat16), wih_ref[...],
                   preferred_element_type=jnp.float32) + bih_ref[...]
    o_ref[...] = proj.reshape(T2, bb, G8)                # rows are time-major


def cnn_projection(x, p, hidden_size):
    # x: (Bp, T, C_in) f32 with Bp % BB == 0  ->  (T2, Bp, 8H) f32, time-major.
    Bp, T, C_in = x.shape
    K, pad = 5, 1
    T1 = T + 2 * pad - K + 1
    T2 = T1 + 2 * pad - K + 1
    assert T2 >= 1 and Bp % BB == 0
    H = hidden_size
    KC = K * C_in

    # conv1 im2col on the tiny raw input, laid out time-major (T1, Bp, K*C_in).
    x_pad = jnp.pad(x, ((0, 0), (pad, pad), (0, 0)))
    patches = jnp.concatenate([x_pad[:, k:k + T1, :] for k in range(K)], axis=-1)
    patches = jnp.transpose(patches, (1, 0, 2))                 # tiny relayout

    # eval-mode BN folded to scale/shift
    s1 = p['gamma1'] / jnp.sqrt(p['var1'] + BN_EPS)
    t1 = p['beta1'] - p['mean1'] * s1
    s2 = p['gamma2'] / jnp.sqrt(p['var2'] + BN_EPS)
    t2 = p['beta2'] - p['mean2'] * s2

    w1 = p['w1'].reshape(KC, 128).astype(jnp.bfloat16)
    w2 = p['w2'].astype(jnp.bfloat16)                           # (K, 128, 256)

    # Fold BN2 scale/shift into the LSTM input projection (exact):
    #   (relu*s2 + t2) @ Wih + b  ==  relu @ (s2[:,None]*Wih) + (t2 @ Wih + b)
    # (BN1's t1 is NOT folded downstream: conv2's zero pad rows must stay 0.)
    wih = jnp.concatenate([p['wih_f'], p['wih_b']], axis=1)     # (256, 8H) f32
    bih = jnp.concatenate([p['b_f'], p['b_b']], axis=1)         # (1, 8H)
    bih = bih + t2.reshape(1, 256) @ wih
    wih = (s2.reshape(256, 1) * wih).astype(jnp.bfloat16)

    row = lambda v: v.reshape(1, -1)
    return pl.pallas_call(
        _cnn_proj_kernel,
        out_shape=jax.ShapeDtypeStruct((T2, Bp, 8 * H), jnp.float32),
        grid=(Bp // BB,),
        in_specs=[
            pl.BlockSpec((T1, BB, KC), lambda g: (0, g, 0)),
            pl.BlockSpec((KC, 128), lambda g: (0, 0)),
            pl.BlockSpec((1, 128), lambda g: (0, 0)),
            pl.BlockSpec((1, 128), lambda g: (0, 0)),
            pl.BlockSpec((1, 128), lambda g: (0, 0)),
            pl.BlockSpec((K, 128, 256), lambda g: (0, 0, 0)),
            pl.BlockSpec((1, 256), lambda g: (0, 0)),
            pl.BlockSpec((256, 8 * H), lambda g: (0, 0)),
            pl.BlockSpec((1, 8 * H), lambda g: (0, 0)),
        ],
        out_specs=pl.BlockSpec((T2, BB, 8 * H), lambda g: (0, g, 0)),
        scratch_shapes=[pltpu.VMEM(((T1 + 2) * BB, 128), jnp.float32)],
        compiler_params=pltpu.CompilerParams(
            dimension_semantics=("parallel",)),
    )(patches, w1, row(p['b1']), row(s1), row(t1),
      w2, row(p['b2']), wih, bih)


# --------------------------------------------------------------------------
# Kernel 2: BiLSTM recurrence (final hidden states only) + FC head.
# x-projections are precomputed; per step each direction only does h @ Whh.
# Both directions run in one loop so their dependency chains overlap.
# --------------------------------------------------------------------------
def _bilstm_fc_kernel(xp_ref, whhf_ref, whhb_ref, wfc_ref, bfc_ref, o_ref):
    T2, B, _ = xp_ref.shape
    H = whhf_ref.shape[0]
    G = 4 * H

    # Lane mask for the 'g' gate (tanh lanes). Single tanh pass per cell via
    # sigmoid(x) = 0.5*tanh(0.5*x) + 0.5 — halves EUP work on the serial chain.
    lane = lax.broadcasted_iota(jnp.int32, (1, G), 1)
    is_g = (lane >= 2 * H) & (lane < 3 * H)
    scale = jnp.where(is_g, 1.0, 0.5).astype(jnp.float32)
    shift = jnp.where(is_g, 0.0, 0.5).astype(jnp.float32)

    # Hoist recurrent weights into vregs only when they comfortably fit
    # (at large H this would flip the kernel into spill-bound).
    hoist = H <= 64
    whhf_h = whhf_ref[...] if hoist else None
    whhb_h = whhb_ref[...] if hoist else None

    def cell(xrow, h, c, whh_h, whh_ref):
        w = whh_h if hoist else whh_ref[...]
        # xrow already contains x@Wih + (b_ih + b_hh), folded upstream.
        gates = xrow + jnp.dot(h.astype(jnp.bfloat16), w,
                               preferred_element_type=jnp.float32)
        act = jnp.tanh(gates * scale) * scale + shift   # i,f,o: sigmoid; g: tanh
        i = act[:, 0 * H:1 * H]                          # PyTorch order: i,f,g,o
        f = act[:, 1 * H:2 * H]
        g = act[:, 2 * H:3 * H]
        o = act[:, 3 * H:4 * H]
        c_new = f * c + i * g
        h_new = o * jnp.tanh(c_new)
        return h_new, c_new

    def body(t, carry):
        hf, cf, hb, cb = carry
        x_f = xp_ref[t]                # (B, 8H) = [fwd proj | bwd proj] at time t
        x_b = xp_ref[T2 - 1 - t]
        hf, cf = cell(x_f[:, :G], hf, cf, whhf_h, whhf_ref)
        hb, cb = cell(x_b[:, G:], hb, cb, whhb_h, whhb_ref)
        return hf, cf, hb, cb

    z = jnp.zeros((B, H), jnp.float32)
    if T2 <= 64:
        unroll = True                  # short sequences: full unroll (LLO visibility)
    else:
        unroll = next(u for u in (8, 4, 2, 1) if T2 % u == 0)
    hf, _, hb, _ = lax.fori_loop(0, T2, body, (z, z, z, z), unroll=unroll)

    # Fused FC head: fc(cat(h_fwd, h_bwd)) as ONE contraction-2H GEMM,
    # lane-dense (padded) output.
    h_cat = jnp.concatenate([hf, hb], axis=1)
    out = jnp.dot(h_cat, wfc_ref[...],
                  preferred_element_type=jnp.float32) + bfc_ref[...]
    o_ref[...] = out.astype(o_ref.dtype)


def bilstm_fc(xp_tm, p, hidden_size, num_classes):
    # xp_tm: (T2, Bp, 8H) time-major precomputed gate inputs.
    _, Bp, _ = xp_tm.shape
    nc_pad = _round_up(num_classes, 128)   # lane-dense FC output

    wfc = jnp.pad(p['wfc'], ((0, 0), (0, nc_pad - num_classes)))
    bfc = jnp.pad(p['bfc'], ((0, 0), (0, nc_pad - num_classes)))
    whhf = p['whh_f'].astype(jnp.bfloat16)
    whhb = p['whh_b'].astype(jnp.bfloat16)

    out = pl.pallas_call(
        _bilstm_fc_kernel,
        out_shape=jax.ShapeDtypeStruct((Bp, nc_pad), jnp.float32),
    )(xp_tm, whhf, whhb, wfc, bfc)
    return out[:, :num_classes]


def cnn_lstm_forward(x, p, hidden_size, num_classes):
    # x: (B, T, input_size), channels-last (same layout the PyTorch forward takes).
    B = x.shape[0]
    Bp = _round_up(B, BB)          # sublane-dense batch; pad rows sliced off below
    if Bp != B:
        x = jnp.pad(x, ((0, Bp - B), (0, 0), (0, 0)))
    xp_tm = cnn_projection(x, p, hidden_size)             # (T2, Bp, 8H) time-major
    out = bilstm_fc(xp_tm, p, hidden_size, num_classes)   # (Bp, num_classes)
    return out[:B]


# --------------------------------------------------------------------------
# Deterministic parameter init (PyTorch-default-style uniform fan-in bounds).
# --------------------------------------------------------------------------
def init_params(key, input_size, hidden_size, num_classes):
    ks = jax.random.split(key, 32)
    it = iter(ks)

    def u(shape, bound):
        return jax.random.uniform(next(it), shape, jnp.float32, -bound, bound)

    H = hidden_size
    p = {}

    # conv1: Conv1d(input_size, 128, k=5, pad=1) + BN(128)
    k1 = 1.0 / (input_size * 5) ** 0.5
    p['w1'] = u((5, input_size, 128), k1)
    p['b1'] = u((128,), k1)
    p['gamma1'] = jax.random.uniform(next(it), (128,), jnp.float32, 0.5, 1.5)
    p['beta1'] = u((128,), 0.1)
    p['mean1'] = u((128,), 0.1)
    p['var1'] = jax.random.uniform(next(it), (128,), jnp.float32, 0.5, 1.5)

    # conv2: Conv1d(128, 256, k=5, pad=1) + BN(256)
    k2 = 1.0 / (128 * 5) ** 0.5
    p['w2'] = u((5, 128, 256), k2)
    p['b2'] = u((256,), k2)
    p['gamma2'] = jax.random.uniform(next(it), (256,), jnp.float32, 0.5, 1.5)
    p['beta2'] = u((256,), 0.1)
    p['mean2'] = u((256,), 0.1)
    p['var2'] = jax.random.uniform(next(it), (256,), jnp.float32, 0.5, 1.5)

    # bidirectional LSTM(256 -> H); weights stored pre-transposed (in, 4H)
    kh = 1.0 / H ** 0.5
    p['wih_f'] = u((256, 4 * H), kh)
    p['whh_f'] = u((H, 4 * H), kh)
    p['b_f'] = (u((4 * H,), kh) + u((4 * H,), kh)).reshape(1, 4 * H)  # b_ih + b_hh
    p['wih_b'] = u((256, 4 * H), kh)
    p['whh_b'] = u((H, 4 * H), kh)
    p['b_b'] = (u((4 * H,), kh) + u((4 * H,), kh)).reshape(1, 4 * H)

    # fc: Linear(2H -> num_classes)
    kf = 1.0 / (2 * H) ** 0.5
    p['wfc'] = u((2 * H, num_classes), kf)
    p['bfc'] = u((num_classes,), kf).reshape(1, num_classes)
    return p


if __name__ == "__main__":
    input_size, hidden_size, num_classes = 4, 32, 10
    B, T = 2, 16

    key = jax.random.PRNGKey(0)
    kx, kp = jax.random.split(key)
    x = jax.random.normal(kx, (B, T, input_size), jnp.float32)
    params = init_params(kp, input_size, hidden_size, num_classes)

    fwd = jax.jit(functools.partial(cnn_lstm_forward,
                                    hidden_size=hidden_size,
                                    num_classes=num_classes))
    out = jax.block_until_ready(fwd(x, params))

    assert out.shape == (B, num_classes), out.shape
    assert bool(jnp.all(jnp.isfinite(out)))
    print("KERNEL_OK")
</pallas_src>

<mosaic_0001>
module attributes {stable_mosaic.version = 11 : i64} {
  func.func @_cnn_proj_kernel(%arg0: i32, %arg1: memref<14x8x20xf32, #tpu.memory_space<vmem>>, %arg2: memref<20x128xbf16, #tpu.memory_space<vmem>>, %arg3: memref<1x128xf32, #tpu.memory_space<vmem>>, %arg4: memref<1x128xf32, #tpu.memory_space<vmem>>, %arg5: memref<1x128xf32, #tpu.memory_space<vmem>>, %arg6: memref<5x128x256xbf16, #tpu.memory_space<vmem>>, %arg7: memref<1x256xf32, #tpu.memory_space<vmem>>, %arg8: memref<256x256xbf16, #tpu.memory_space<vmem>>, %arg9: memref<1x256xf32, #tpu.memory_space<vmem>>, %arg10: memref<12x8x256xf32, #tpu.memory_space<vmem>>, %arg11: memref<128x128xf32, #tpu.memory_space<vmem>>) attributes {dimension_semantics = [#tpu.dimension_semantics<parallel>], iteration_bounds = array<i64: 1>, scalar_prefetch = 0 : i64, scratch_operands = 1 : i64, tpu.core_type = #tpu.core_type<tc>, window_params = [{transform_indices = @transform_0, window_bounds = array<i64: 14, 8, 20>}, {pipeline_mode = #tpu.pipeline_mode<synchronous>, transform_indices = @transform_1, window_bounds = array<i64: 20, 128>}, {pipeline_mode = #tpu.pipeline_mode<synchronous>, transform_indices = @transform_2, window_bounds = array<i64: 1, 128>}, {pipeline_mode = #tpu.pipeline_mode<synchronous>, transform_indices = @transform_3, window_bounds = array<i64: 1, 128>}, {pipeline_mode = #tpu.pipeline_mode<synchronous>, transform_indices = @transform_4, window_bounds = array<i64: 1, 128>}, {pipeline_mode = #tpu.pipeline_mode<synchronous>, transform_indices = @transform_5, window_bounds = array<i64: 5, 128, 256>}, {pipeline_mode = #tpu.pipeline_mode<synchronous>, transform_indices = @transform_6, window_bounds = array<i64: 1, 256>}, {pipeline_mode = #tpu.pipeline_mode<synchronous>, transform_indices = @transform_7, window_bounds = array<i64: 256, 256>}, {pipeline_mode = #tpu.pipeline_mode<synchronous>, transform_indices = @transform_8, window_bounds = array<i64: 1, 256>}, {transform_indices = @transform_9, window_bounds = array<i64: 12, 8, 256>}]} {
    %c0 = arith.constant 0 : index
    %c0_0 = arith.constant 0 : index
    %c0_1 = arith.constant 0 : index
    %0 = vector.load %arg1[%c0, %c0_0, %c0_1] : memref<14x8x20xf32, #tpu.memory_space<vmem>>, vector<14x8x20xf32>
    %1 = vector.shape_cast %0 : vector<14x8x20xf32> to vector<112x20xf32>
    %2 = arith.truncf %1 : vector<112x20xf32> to vector<112x20xbf16>
    %c0_2 = arith.constant 0 : index
    %c0_3 = arith.constant 0 : index
    %3 = vector.load %arg2[%c0_2, %c0_3] : memref<20x128xbf16, #tpu.memory_space<vmem>>, vector<20x128xbf16>
    %cst = arith.constant dense<0.000000e+00> : vector<112x128xf32>
    %4 = tpu.matmul %2, %3, %cst {dimension_numbers = #tpu.dot_dimension_numbers<[1], [0], [0], [1], [0, 0, 1, 1], [], []>} : vector<112x20xbf16>, vector<20x128xbf16>, vector<112x128xf32> -> vector<112x128xf32>
    %c0_4 = arith.constant 0 : index
    %c0_5 = arith.constant 0 : index
    %5 = vector.load %arg3[%c0_4, %c0_5] : memref<1x128xf32, #tpu.memory_space<vmem>>, vector<1x128xf32>
    %6 = vector.broadcast %5 : vector<1x128xf32> to vector<112x128xf32>
    %7 = arith.addf %4, %6 : vector<112x128xf32>
    %cst_6 = arith.constant 0.000000e+00 : f32
    %8 = vector.broadcast %cst_6 : f32 to vector<112x128xf32>
    %9 = arith.maximumf %7, %8 : vector<112x128xf32>
    %c0_7 = arith.constant 0 : index
    %c0_8 = arith.constant 0 : index
    %10 = vector.load %arg4[%c0_7, %c0_8] : memref<1x128xf32, #tpu.memory_space<vmem>>, vector<1x128xf32>
    %11 = vector.broadcast %10 : vector<1x128xf32> to vector<112x128xf32>
    %12 = arith.mulf %9, %11 : vector<112x128xf32>
    %c0_9 = arith.constant 0 : index
    %c0_10 = arith.constant 0 : index
    %13 = vector.load %arg5[%c0_9, %c0_10] : memref<1x128xf32, #tpu.memory_space<vmem>>, vector<1x128xf32>
    %14 = vector.broadcast %13 : vector<1x128xf32> to vector<112x128xf32>
    %15 = arith.addf %12, %14 : vector<112x128xf32>
    %cst_11 = arith.constant 0.000000e+00 : f32
    %16 = vector.broadcast %cst_11 : f32 to vector<8x128xf32>
    %c0_12 = arith.constant 0 : index
    %c0_13 = arith.constant 0 : index
    %17 = vector.load %arg11[%c0_12, %c0_13] : memref<128x128xf32, #tpu.memory_space<vmem>>, vector<8x128xf32>
    tpu.vector_store %arg11[%c0_12, %c0_13], %16 {strides = array<i32>} : memref<128x128xf32, #tpu.memory_space<vmem>>, vector<8x128xf32>,
    %cst_14 = arith.constant 0.000000e+00 : f32
    %18 = vector.broadcast %cst_14 : f32 to vector<8x128xf32>
    %c120 = arith.constant 120 : index
    %c0_15 = arith.constant 0 : index
    %19 = vector.load %arg11[%c120, %c0_15] : memref<128x128xf32, #tpu.memory_space<vmem>>, vector<8x128xf32>
    tpu.vector_store %arg11[%c120, %c0_15], %18 {strides = array<i32>} : memref<128x128xf32, #tpu.memory_space<vmem>>, vector<8x128xf32>,
    %c8 = arith.constant 8 : index
    %c0_16 = arith.constant 0 : index
    %20 = vector.load %arg11[%c8, %c0_16] : memref<128x128xf32, #tpu.memory_space<vmem>>, vector<112x128xf32>
    tpu.vector_store %arg11[%c8, %c0_16], %15 {strides = array<i32>} : memref<128x128xf32, #tpu.memory_space<vmem>>, vector<112x128xf32>,
    %cst_17 = arith.constant 0.000000e+00 : f32
    %21 = vector.broadcast %cst_17 : f32 to vector<96x256xf32>
    %c0_18 = arith.constant 0 : index
    %c0_19 = arith.constant 0 : index
    %22 = vector.load %arg11[%c0_18, %c0_19] : memref<128x128xf32, #tpu.memory_space<vmem>>, vector<96x128xf32>
    %23 = arith.truncf %22 : vector<96x128xf32> to vector<96x128xbf16>
    %c0_20 = arith.constant 0 : index
    %c0_21 = arith.constant 0 : index
    %c0_22 = arith.constant 0 : index
    %24 = vector.load %arg6[%c0_20, %c0_21, %c0_22] : memref<5x128x256xbf16, #tpu.memory_space<vmem>>, vector<1x128x256xbf16>
    %25 = vector.shape_cast %24 : vector<1x128x256xbf16> to vector<128x256xbf16>
    %cst_23 = arith.constant dense<0.000000e+00> : vector<96x256xf32>
    %26 = tpu.matmul %23, %25, %cst_23 {dimension_numbers = #tpu.dot_dimension_numbers<[1], [0], [0], [1], [0, 0, 1, 1], [], []>} : vector<96x128xbf16>, vector<128x256xbf16>, vector<96x256xf32> -> vector<96x256xf32>
    %27 = arith.addf %21, %26 : vector<96x256xf32>
    %c8_24 = arith.constant 8 : index
    %c0_25 = arith.constant 0 : index
    %28 = vector.load %arg11[%c8_24, %c0_25] : memref<128x128xf32, #tpu.memory_space<vmem>>, vector<96x128xf32>
    %29 = arith.truncf %28 : vector<96x128xf32> to vector<96x128xbf16>
    %c1 = arith.constant 1 : index
    %c0_26 = arith.constant 0 : index
    %c0_27 = arith.constant 0 : index
    %30 = vector.load %arg6[%c1, %c0_26, %c0_27] : memref<5x128x256xbf16, #tpu.memory_space<vmem>>, vector<1x128x256xbf16>
    %31 = vector.shape_cast %30 : vector<1x128x256xbf16> to vector<128x256xbf16>
    %cst_28 = arith.constant dense<0.000000e+00> : vector<96x256xf32>
    %32 = tpu.matmul %29, %31, %cst_28 {dimension_numbers = #tpu.dot_dimension_numbers<[1], [0], [0], [1], [0, 0, 1, 1], [], []>} : vector<96x128xbf16>, vector<128x256xbf16>, vector<96x256xf32> -> vector<96x256xf32>
    %33 = arith.addf %27, %32 : vector<96x256xf32>
    %c16 = arith.constant 16 : index
    %c0_29 = arith.constant 0 : index
    %34 = vector.load %arg11[%c16, %c0_29] : memref<128x128xf32, #tpu.memory_space<vmem>>, vector<96x128xf32>
    %35 = arith.truncf %34 : vector<96x128xf32> to vector<96x128xbf16>
    %c2 = arith.constant 2 : index
    %c0_30 = arith.constant 0 : index
    %c0_31 = arith.constant 0 : index
    %36 = vector.load %arg6[%c2, %c0_30, %c0_31] : memref<5x128x256xbf16, #tpu.memory_space<vmem>>, vector<1x128x256xbf16>
    %37 = vector.shape_cast %36 : vector<1x128x256xbf16> to vector<128x256xbf16>
    %cst_32 = arith.constant dense<0.000000e+00> : vector<96x256xf32>
    %38 = tpu.matmul %35, %37, %cst_32 {dimension_numbers = #tpu.dot_dimension_numbers<[1], [0], [0], [1], [0, 0, 1, 1], [], []>} : vector<96x128xbf16>, vector<128x256xbf16>, vector<96x256xf32> -> vector<96x256xf32>
    %39 = arith.addf %33, %38 : vector<96x256xf32>
    %c24 = arith.constant 24 : index
    %c0_33 = arith.constant 0 : index
    %40 = vector.load %arg11[%c24, %c0_33] : memref<128x128xf32, #tpu.memory_space<vmem>>, vector<96x128xf32>
    %41 = arith.truncf %40 : vector<96x128xf32> to vector<96x128xbf16>
    %c3 = arith.constant 3 : index
    %c0_34 = arith.constant 0 : index
    %c0_35 = arith.constant 0 : index
    %42 = vector.load %arg6[%c3, %c0_34, %c0_35] : memref<5x128x256xbf16, #tpu.memory_space<vmem>>, vector<1x128x256xbf16>
    %43 = vector.shape_cast %42 : vector<1x128x256xbf16> to vector<128x256xbf16>
    %cst_36 = arith.constant dense<0.000000e+00> : vector<96x256xf32>
    %44 = tpu.matmul %41, %43, %cst_36 {dimension_numbers = #tpu.dot_dimension_numbers<[1], [0], [0], [1], [0, 0, 1, 1], [], []>} : vector<96x128xbf16>, vector<128x256xbf16>, vector<96x256xf32> -> vector<96x256xf32>
    %45 = arith.addf %39, %44 : vector<96x256xf32>
    %c32 = arith.constant 32 : index
    %c0_37 = arith.constant 0 : index
    %46 = vector.load %arg11[%c32, %c0_37] : memref<128x128xf32, #tpu.memory_space<vmem>>, vector<96x128xf32>
    %47 = arith.truncf %46 : vector<96x128xf32> to vector<96x128xbf16>
    %c4 = arith.constant 4 : index
    %c0_38 = arith.constant 0 : index
    %c0_39 = arith.constant 0 : index
    %48 = vector.load %arg6[%c4, %c0_38, %c0_39] : memref<5x128x256xbf16, #tpu.memory_space<vmem>>, vector<1x128x256xbf16>
    %49 = vector.shape_cast %48 : vector<1x128x256xbf16> to vector<128x256xbf16>
    %cst_40 = arith.constant dense<0.000000e+00> : vector<96x256xf32>
    %50 = tpu.matmul %47, %49, %cst_40 {dimension_numbers = #tpu.dot_dimension_numbers<[1], [0], [0], [1], [0, 0, 1, 1], [], []>} : vector<96x128xbf16>, vector<128x256xbf16>, vector<96x256xf32> -> vector<96x256xf32>
    %51 = arith.addf %45, %50 : vector<96x256xf32>
    %c0_41 = arith.constant 0 : index
    %c0_42 = arith.constant 0 : index
    %52 = vector.load %arg7[%c0_41, %c0_42] : memref<1x256xf32, #tpu.memory_space<vmem>>, vector<1x256xf32>
    %53 = vector.broadcast %52 : vector<1x256xf32> to vector<96x256xf32>
    %54 = arith.addf %51, %53 : vector<96x256xf32>
    %cst_43 = arith.constant 0.000000e+00 : f32
    %55 = vector.broadcast %cst_43 : f32 to vector<96x256xf32>
    %56 = arith.maximumf %54, %55 : vector<96x256xf32>
    %57 = arith.truncf %56 : vector<96x256xf32> to vector<96x256xbf16>
    %c0_44 = arith.constant 0 : index
    %c0_45 = arith.constant 0 : index
    %58 = vector.load %arg8[%c0_44, %c0_45] : memref<256x256xbf16, #tpu.memory_space<vmem>>, vector<256x256xbf16>
    %cst_46 = arith.constant dense<0.000000e+00> : vector<96x256xf32>
    %59 = tpu.matmul %57, %58, %cst_46 {dimension_numbers = #tpu.dot_dimension_numbers<[1], [0], [0], [1], [0, 0, 1, 1], [], []>} : vector<96x256xbf16>, vector<256x256xbf16>, vector<96x256xf32> -> vector<96x256xf32>
    %c0_47 = arith.constant 0 : index
    %c0_48 = arith.constant 0 : index
    %60 = vector.load %arg9[%c0_47, %c0_48] : memref<1x256xf32, #tpu.memory_space<vmem>>, vector<1x256xf32>
    %61 = vector.broadcast %60 : vector<1x256xf32> to vector<96x256xf32>
    %62 = arith.addf %59, %61 : vector<96x256xf32>
    %63 = vector.shape_cast %62 : vector<96x256xf32> to vector<12x8x256xf32>
    %c0_49 = arith.constant 0 : index
    %c0_50 = arith.constant 0 : index
    %c0_51 = arith.constant 0 : index
    %64 = vector.load %arg10[%c0_49, %c0_50, %c0_51] : memref<12x8x256xf32, #tpu.memory_space<vmem>>, vector<12x8x256xf32>
    tpu.vector_store %arg10[%c0_49, %c0_50, %c0_51], %63 {strides = array<i32>} : memref<12x8x256xf32, #tpu.memory_space<vmem>>, vector<12x8x256xf32>,
    return
  }
  func.func @transform_0(%arg0: i32) -> (i32, i32, i32) {
    %c0_i32 = arith.constant 0 : i32
    %c0_i32_0 = arith.constant 0 : i32
    %c0_i32_1 = arith.constant 0 : i32
    return %c0_i32, %arg0, %c0_i32_0 : i32, i32, i32
  }
  func.func @transform_1(%arg0: i32) -> (i32, i32) {
    %c0_i32 = arith.constant 0 : i32
    %c0_i32_0 = arith.constant 0 : i32
    %c0_i32_1 = arith.constant 0 : i32
    return %c0_i32, %c0_i32_0 : i32, i32
  }
  func.func @transform_2(%arg0: i32) -> (i32, i32) {
    %c0_i32 = arith.constant 0 : i32
    %c0_i32_0 = arith.constant 0 : i32
    %c0_i32_1 = arith.constant 0 : i32
    return %c0_i32, %c0_i32_0 : i32, i32
  }
  func.func @transform_3(%arg0: i32) -> (i32, i32) {
    %c0_i32 = arith.constant 0 : i32
    %c0_i32_0 = arith.constant 0 : i32
    %c0_i32_1 = arith.constant 0 : i32
    return %c0_i32, %c0_i32_0 : i32, i32
  }
  func.func @transform_4(%arg0: i32) -> (i32, i32) {
    %c0_i32 = arith.constant 0 : i32
    %c0_i32_0 = arith.constant 0 : i32
    %c0_i32_1 = arith.constant 0 : i32
    return %c0_i32, %c0_i32_0 : i32, i32
  }
  func.func @transform_5(%arg0: i32) -> (i32, i32, i32) {
    %c0_i32 = arith.constant 0 : i32
    %c0_i32_0 = arith.constant 0 : i32
    %c0_i32_1 = arith.constant 0 : i32
    %c0_i32_2 = arith.constant 0 : i32
    return %c0_i32, %c0_i32_0, %c0_i32_1 : i32, i32, i32
  }
  func.func @transform_6(%arg0: i32) -> (i32, i32) {
    %c0_i32 = arith.constant 0 : i32
    %c0_i32_0 = arith.constant 0 : i32
    %c0_i32_1 = arith.constant 0 : i32
    return %c0_i32, %c0_i32_0 : i32, i32
  }
  func.func @transform_7(%arg0: i32) -> (i32, i32) {
    %c0_i32 = arith.constant 0 : i32
    %c0_i32_0 = arith.constant 0 : i32
    %c0_i32_1 = arith.constant 0 : i32
    return %c0_i32, %c0_i32_0 : i32, i32
  }
  func.func @transform_8(%arg0: i32) -> (i32, i32) {
    %c0_i32 = arith.constant 0 : i32
    %c0_i32_0 = arith.constant 0 : i32
    %c0_i32_1 = arith.constant 0 : i32
    return %c0_i32, %c0_i32_0 : i32, i32
  }
  func.func @transform_9(%arg0: i32) -> (i32, i32, i32) {
    %c0_i32 = arith.constant 0 : i32
    %c0_i32_0 = arith.constant 0 : i32
    %c0_i32_1 = arith.constant 0 : i32
    return %c0_i32, %arg0, %c0_i32_0 : i32, i32, i32
  }
}

module attributes {stable_mosaic.version = 11 : i64} {
  func.func @_bilstm_fc_kernel(%arg0: memref<12x8x256xf32, #tpu.memory_space<vmem>>, %arg1: memref<32x128xbf16, #tpu.memory_space<vmem>>, %arg2: memref<32x128xbf16, #tpu.memory_space<vmem>>, %arg3: memref<64x128xf32, #tpu.memory_space<vmem>>, %arg4: memref<1x128xf32, #tpu.memory_space<vmem>>, %arg5: memref<8x128xf32, #tpu.memory_space<vmem>>) attributes {dimension_semantics = [], scalar_prefetch = 0 : i64, scratch_operands = 0 : i64, tpu.core_type = #tpu.core_type<tc>} {
    %0 = tpu.iota {dimensions = array<i32: 1>} : vector<1x128xi32>
    %c64_i32 = arith.constant 64 : i32
    %1 = vector.broadcast %c64_i32 : i32 to vector<1x128xi32>
    %2 = arith.cmpi sge, %0, %1 : vector<1x128xi32>
    %c96_i32 = arith.constant 96 : i32
    %3 = vector.broadcast %c96_i32 : i32 to vector<1x128xi32>
    %4 = arith.cmpi slt, %0, %3 : vector<1x128xi32>
    %5 = arith.andi %2, %4 : vector<1x128xi1>
    %cst = arith.constant 1.000000e+00 : f32
    %cst_0 = arith.constant 5.000000e-01 : f32
    %6 = vector.broadcast %cst : f32 to vector<1x128xf32>
    %7 = vector.broadcast %cst_0 : f32 to vector<1x128xf32>
    %8 = arith.select %5, %6, %7 : vector<1x128xi1>, vector<1x128xf32>
    %cst_1 = arith.constant 0.000000e+00 : f32
    %cst_2 = arith.constant 5.000000e-01 : f32
    %9 = vector.broadcast %cst_1 : f32 to vector<1x128xf32>
    %10 = vector.broadcast %cst_2 : f32 to vector<1x128xf32>
    %11 = arith.select %5, %9, %10 : vector<1x128xi1>, vector<1x128xf32>
    %c0 = arith.constant 0 : index
    %c0_3 = arith.constant 0 : index
    %12 = vector.load %arg1[%c0, %c0_3] : memref<32x128xbf16, #tpu.memory_space<vmem>>, vector<32x128xbf16>
    %c0_4 = arith.constant 0 : index
    %c0_5 = arith.constant 0 : index
    %13 = vector.load %arg2[%c0_4, %c0_5] : memref<32x128xbf16, #tpu.memory_space<vmem>>, vector<32x128xbf16>
    %cst_6 = arith.constant 0.000000e+00 : f32
    %14 = vector.broadcast %cst_6 : f32 to vector<8x32xf32>
    %c0_i32 = arith.constant 0 : i32
    %15 = arith.index_cast %c0_i32 : i32 to index
    %c0_7 = arith.constant 0 : index
    %c0_8 = arith.constant 0 : index
    %16 = vector.load %arg0[%15, %c0_7, %c0_8] : memref<12x8x256xf32, #tpu.memory_space<vmem>>, vector<1x8x256xf32>
    %17 = vector.shape_cast %16 : vector<1x8x256xf32> to vector<8x256xf32>
    %c11_i32 = arith.constant 11 : i32
    %18 = arith.subi %c11_i32, %c0_i32 : i32
    %19 = arith.index_cast %18 : i32 to index
    %c0_9 = arith.constant 0 : index
    %c0_10 = arith.constant 0 : index
    %20 = vector.load %arg0[%19, %c0_9, %c0_10] : memref<12x8x256xf32, #tpu.memory_space<vmem>>, vector<1x8x256xf32>
    %21 = vector.shape_cast %20 : vector<1x8x256xf32> to vector<8x256xf32>
    %22 = vector.extract_strided_slice %17 {offsets = [0, 0], sizes = [8, 128], strides = [1, 1]} : vector<8x256xf32> to vector<8x128xf32>
    %23 = arith.truncf %14 : vector<8x32xf32> to vector<8x32xbf16>
    %cst_11 = arith.constant dense<0.000000e+00> : vector<8x128xf32>
    %24 = tpu.matmul %23, %12, %cst_11 {dimension_numbers = #tpu.dot_dimension_numbers<[1], [0], [0], [1], [0, 0, 1, 1], [], []>} : vector<8x32xbf16>, vector<32x128xbf16>, vector<8x128xf32> -> vector<8x128xf32>
    %25 = arith.addf %22, %24 : vector<8x128xf32>
    %26 = vector.broadcast %8 : vector<1x128xf32> to vector<8x128xf32>
    %27 = arith.mulf %25, %26 : vector<8x128xf32>
    %28 = math.tanh %27 : vector<8x128xf32>
    %29 = vector.broadcast %8 : vector<1x128xf32> to vector<8x128xf32>
    %30 = arith.mulf %28, %29 : vector<8x128xf32>
    %31 = vector.broadcast %11 : vector<1x128xf32> to vector<8x128xf32>
    %32 = arith.addf %30, %31 : vector<8x128xf32>
    %33 = vector.extract_strided_slice %32 {offsets = [0, 0], sizes = [8, 32], strides = [1, 1]} : vector<8x128xf32> to vector<8x32xf32>
    %34 = vector.extract_strided_slice %32 {offsets = [0, 32], sizes = [8, 32], strides = [1, 1]} : vector<8x128xf32> to vector<8x32xf32>
    %35 = vector.extract_strided_slice %32 {offsets = [0, 64], sizes = [8, 32], strides = [1, 1]} : vector<8x128xf32> to vector<8x32xf32>
    %36 = vector.extract_strided_slice %32 {offsets = [0, 96], sizes = [8, 32], strides = [1, 1]} : vector<8x128xf32> to vector<8x32xf32>
    %37 = arith.mulf %34, %14 : vector<8x32xf32>
    %38 = arith.mulf %33, %35 : vector<8x32xf32>
    %39 = arith.addf %37, %38 : vector<8x32xf32>
    %40 = math.tanh %39 : vector<8x32xf32>
    %41 = arith.mulf %36, %40 : vector<8x32xf32>
    %42 = vector.extract_strided_slice %21 {offsets = [0, 128], sizes = [8, 128], strides = [1, 1]} : vector<8x256xf32> to vector<8x128xf32>
    %43 = arith.truncf %14 : vector<8x32xf32> to vector<8x32xbf16>
    %cst_12 = arith.constant dense<0.000000e+00> : vector<8x128xf32>
    %44 = tpu.matmul %43, %13, %cst_12 {dimension_numbers = #tpu.dot_dimension_numbers<[1], [0], [0], [1], [0, 0, 1, 1], [], []>} : vector<8x32xbf16>, vector<32x128xbf16>, vector<8x128xf32> -> vector<8x128xf32>
    %45 = arith.addf %42, %44 : vector<8x128xf32>
    %46 = vector.broadcast %8 : vector<1x128xf32> to vector<8x128xf32>
    %47 = arith.mulf %45, %46 : vector<8x128xf32>
    %48 = math.tanh %47 : vector<8x128xf32>
    %49 = vector.broadcast %8 : vector<1x128xf32> to vector<8x128xf32>
    %50 = arith.mulf %48, %49 : vector<8x128xf32>
    %51 = vector.broadcast %11 : vector<1x128xf32> to vector<8x128xf32>
    %52 = arith.addf %50, %51 : vector<8x128xf32>
    %53 = vector.extract_strided_slice %52 {offsets = [0, 0], sizes = [8, 32], strides = [1, 1]} : vector<8x128xf32> to vector<8x32xf32>
    %54 = vector.extract_strided_slice %52 {offsets = [0, 32], sizes = [8, 32], strides = [1, 1]} : vector<8x128xf32> to vector<8x32xf32>
    %55 = vector.extract_strided_slice %52 {offsets = [0, 64], sizes = [8, 32], strides = [1, 1]} : vector<8x128xf32> to vector<8x32xf32>
    %56 = vector.extract_strided_slice %52 {offsets = [0, 96], sizes = [8, 32], strides = [1, 1]} : vector<8x128xf32> to vector<8x32xf32>
    %57 = arith.mulf %54, %14 : vector<8x32xf32>
    %58 = arith.mulf %53, %55 : vector<8x32xf32>
    %59 = arith.addf %57, %58 : vector<8x32xf32>
    %60 = math.tanh %59 : vector<8x32xf32>
    %61 = arith.mulf %56, %60 : vector<8x32xf32>
    %c1_i32 = arith.constant 1 : i32
    %62 = arith.index_cast %c1_i32 : i32 to index
    %c0_13 = arith.constant 0 : index
    %c0_14 = arith.constant 0 : index
    %63 = vector.load %arg0[%62, %c0_13, %c0_14] : memref<12x8x256xf32, #tpu.memory_space<vmem>>, vector<1x8x256xf32>
    %64 = vector.shape_cast %63 : vector<1x8x256xf32> to vector<8x256xf32>
    %c11_i32_15 = arith.constant 11 : i32
    %65 = arith.subi %c11_i32_15, %c1_i32 : i32
    %66 = arith.index_cast %65 : i32 to index
    %c0_16 = arith.constant 0 : index
    %c0_17 = arith.constant 0 : index
    %67 = vector.load %arg0[%66, %c0_16, %c0_17] : memref<12x8x256xf32, #tpu.memory_space<vmem>>, vector<1x8x256xf32>
    %68 = vector.shape_cast %67 : vector<1x8x256xf32> to vector<8x256xf32>
    %69 = vector.extract_strided_slice %64 {offsets = [0, 0], sizes = [8, 128], strides = [1, 1]} : vector<8x256xf32> to vector<8x128xf32>
    %70 = arith.truncf %41 : vector<8x32xf32> to vector<8x32xbf16>
    %cst_18 = arith.constant dense<0.000000e+00> : vector<8x128xf32>
    %71 = tpu.matmul %70, %12, %cst_18 {dimension_numbers = #tpu.dot_dimension_numbers<[1], [0], [0], [1], [0, 0, 1, 1], [], []>} : vector<8x32xbf16>, vector<32x128xbf16>, vector<8x128xf32> -> vector<8x128xf32>
    %72 = arith.addf %69, %71 : vector<8x128xf32>
    %73 = vector.broadcast %8 : vector<1x128xf32> to vector<8x128xf32>
    %74 = arith.mulf %72, %73 : vector<8x128xf32>
    %75 = math.tanh %74 : vector<8x128xf32>
    %76 = vector.broadcast %8 : vector<1x128xf32> to vector<8x128xf32>
    %77 = arith.mulf %75, %76 : vector<8x128xf32>
    %78 = vector.broadcast %11 : vector<1x128xf32> to vector<8x128xf32>
    %79 = arith.addf %77, %78 : vector<8x128xf32>
    %80 = vector.extract_strided_slice %79 {offsets = [0, 0], sizes = [8, 32], strides = [1, 1]} : vector<8x128xf32> to vector<8x32xf32>
    %81 = vector.extract_strided_slice %79 {offsets = [0, 32], sizes = [8, 32], strides = [1, 1]} : vector<8x128xf32> to vector<8x32xf32>
    %82 = vector.extract_strided_slice %79 {offsets = [0, 64], sizes = [8, 32], strides = [1, 1]} : vector<8x128xf32> to vector<8x32xf32>
    %83 = vector.extract_strided_slice %79 {offsets = [0, 96], sizes = [8, 32], strides = [1, 1]} : vector<8x128xf32> to vector<8x32xf32>
    %84 = arith.mulf %81, %39 : vector<8x32xf32>
    %85 = arith.mulf %80, %82 : vector<8x32xf32>
    %86 = arith.addf %84, %85 : vector<8x32xf32>
    %87 = math.tanh %86 : vector<8x32xf32>
    %88 = arith.mulf %83, %87 : vector<8x32xf32>
    %89 = vector.extract_strided_slice %68 {offsets = [0, 128], sizes = [8, 128], strides = [1, 1]} : vector<8x256xf32> to vector<8x128xf32>
    %90 = arith.truncf %61 : vector<8x32xf32> to vector<8x32xbf16>
    %cst_19 = arith.constant dense<0.000000e+00> : vector<8x128xf32>
    %91 = tpu.matmul %90, %13, %cst_19 {dimension_numbers = #tpu.dot_dimension_numbers<[1], [0], [0], [1], [0, 0, 1, 1], [], []>} : vector<8x32xbf16>, vector<32x128xbf16>, vector<8x128xf32> -> vector<8x128xf32>
    %92 = arith.addf %89, %91 : vector<8x128xf32>
    %93 = vector.broadcast %8 : vector<1x128xf32> to vector<8x128xf32>
    %94 = arith.mulf %92, %93 : vector<8x128xf32>
    %95 = math.tanh %94 : vector<8x128xf32>
    %96 = vector.broadcast %8 : vector<1x128xf32> to vector<8x128xf32>
    %97 = arith.mulf %95, %96 : vector<8x128xf32>
    %98 = vector.broadcast %11 : vector<1x128xf32> to vector<8x128xf32>
    %99 = arith.addf %97, %98 : vector<8x128xf32>
    %100 = vector.extract_strided_slice %99 {offsets = [0, 0], sizes = [8, 32], strides = [1, 1]} : vector<8x128xf32> to vector<8x32xf32>
    %101 = vector.extract_strided_slice %99 {offsets = [0, 32], sizes = [8, 32], strides = [1, 1]} : vector<8x128xf32> to vector<8x32xf32>
    %102 = vector.extract_strided_slice %99 {offsets = [0, 64], sizes = [8, 32], strides = [1, 1]} : vector<8x128xf32> to vector<8x32xf32>
    %103 = vector.extract_strided_slice %99 {offsets = [0, 96], sizes = [8, 32], strides = [1, 1]} : vector<8x128xf32> to vector<8x32xf32>
    %104 = arith.mulf %101, %59 : vector<8x32xf32>
    %105 = arith.mulf %100, %102 : vector<8x32xf32>
    %106 = arith.addf %104, %105 : vector<8x32xf32>
    %107 = math.tanh %106 : vector<8x32xf32>
    %108 = arith.mulf %103, %107 : vector<8x32xf32>
    %c2_i32 = arith.constant 2 : i32
    %109 = arith.index_cast %c2_i32 : i32 to index
    %c0_20 = arith.constant 0 : index
    %c0_21 = arith.constant 0 : index
    %110 = vector.load %arg0[%109, %c0_20, %c0_21] : memref<12x8x256xf32, #tpu.memory_space<vmem>>, vector<1x8x256xf32>
    %111 = vector.shape_cast %110 : vector<1x8x256xf32> to vector<8x256xf32>
    %c11_i32_22 = arith.constant 11 : i32
    %112 = arith.subi %c11_i32_22, %c2_i32 : i32
    %113 = arith.index_cast %112 : i32 to index
    %c0_23 = arith.constant 0 : index
    %c0_24 = arith.constant 0 : index
    %114 = vector.load %arg0[%113, %c0_23, %c0_24] : memref<12x8x256xf32, #tpu.memory_space<vmem>>, vector<1x8x256xf32>
    %115 = vector.shape_cast %114 : vector<1x8x256xf32> to vector<8x256xf32>
    %116 = vector.extract_strided_slice %111 {offsets = [0, 0], sizes = [8, 128], strides = [1, 1]} : vector<8x256xf32> to vector<8x128xf32>
    %117 = arith.truncf %88 : vector<8x32xf32> to vector<8x32xbf16>
    %cst_25 = arith.constant dense<0.000000e+00> : vector<8x128xf32>
    %118 = tpu.matmul %117, %12, %cst_25 {dimension_numbers = #tpu.dot_dimension_numbers<[1], [0], [0], [1], [0, 0, 1, 1], [], []>} : vector<8x32xbf16>, vector<32x128xbf16>, vector<8x128xf32> -> vector<8x128xf32>
    %119 = arith.addf %116, %118 : vector<8x128xf32>
    %120 = vector.broadcast %8 : vector<1x128xf32> to vector<8x128xf32>
    %121 = arith.mulf %119, %120 : vector<8x128xf32>
    %122 = math.tanh %121 : vector<8x128xf32>
    %123 = vector.broadcast %8 : vector<1x128xf32> to vector<8x128xf32>
    %124 = arith.mulf %122, %123 : vector<8x128xf32>
    %125 = vector.broadcast %11 : vector<1x128xf32> to vector<8x128xf32>
    %126 = arith.addf %124, %125 : vector<8x128xf32>
    %127 = vector.extract_strided_slice %126 {offsets = [0, 0], sizes = [8, 32], strides = [1, 1]} : vector<8x128xf32> to vector<8x32xf32>
    %128 = vector.extract_strided_slice %126 {offsets = [0, 32], sizes = [8, 32], strides = [1, 1]} : vector<8x128xf32> to vector<8x32xf32>
    %129 = vector.extract_strided_slice %126 {offsets = [0, 64], sizes = [8, 32], strides = [1, 1]} : vector<8x128xf32> to vector<8x32xf32>
    %130 = vector.extract_strided_slice %126 {offsets = [0, 96], sizes = [8, 32], strides = [1, 1]} : vector<8x128xf32> to vector<8x32xf32>
    %131 = arith.mulf %128, %86 : vector<8x32xf32>
    %132 = arith.mulf %127, %129 : vector<8x32xf32>
    %133 = arith.addf %131, %132 : vector<8x32xf32>
    %134 = math.tanh %133 : vector<8x32xf32>
    %135 = arith.mulf %130, %134 : vector<8x32xf32>
    %136 = vector.extract_strided_slice %115 {offsets = [0, 128], sizes = [8, 128], strides = [1, 1]} : vector<8x256xf32> to vector<8x128xf32>
    %137 = arith.truncf %108 : vector<8x32xf32> to vector<8x32xbf16>
    %cst_26 = arith.constant dense<0.000000e+00> : vector<8x128xf32>
    %138 = tpu.matmul %137, %13, %cst_26 {dimension_numbers = #tpu.dot_dimension_numbers<[1], [0], [0], [1], [0, 0, 1, 1], [], []>} : vector<8x32xbf16>, vector<32x128xbf16>, vector<8x128xf32> -> vector<8x128xf32>
    %139 = arith.addf %136, %138 : vector<8x128xf32>
    %140 = vector.broadcast %8 : vector<1x128xf32> to vector<8x128xf32>
    %141 = arith.mulf %139, %140 : vector<8x128xf32>
    %142 = math.tanh %141 : vector<8x128xf32>
    %143 = vector.broadcast %8 : vector<1x128xf32> to vector<8x128xf32>
    %144 = arith.mulf %142, %143 : vector<8x128xf32>
    %145 = vector.broadcast %11 : vector<1x128xf32> to vector<8x128xf32>
    %146 = arith.addf %144, %145 : vector<8x128xf32>
    %147 = vector.extract_strided_slice %146 {offsets = [0, 0], sizes = [8, 32], strides = [1, 1]} : vector<8x128xf32> to vector<8x32xf32>
    %148 = vector.extract_strided_slice %146 {offsets = [0, 32], sizes = [8, 32], strides = [1, 1]} : vector<8x128xf32> to vector<8x32xf32>
    %149 = vector.extract_strided_slice %146 {offsets = [0, 64], sizes = [8, 32], strides = [1, 1]} : vector<8x128xf32> to vector<8x32xf32>
    %150 = vector.extract_strided_slice %146 {offsets = [0, 96], sizes = [8, 32], strides = [1, 1]} : vector<8x128xf32> to vector<8x32xf32>
    %151 = arith.mulf %148, %106 : vector<8x32xf32>
    %152 = arith.mulf %147, %149 : vector<8x32xf32>
    %153 = arith.addf %151, %152 : vector<8x32xf32>
    %154 = math.tanh %153 : vector<8x32xf32>
    %155 = arith.mulf %150, %154 : vector<8x32xf32>
    %c3_i32 = arith.constant 3 : i32
    %156 = arith.index_cast %c3_i32 : i32 to index
    %c0_27 = arith.constant 0 : index
    %c0_28 = arith.constant 0 : index
    %157 = vector.load %arg0[%156, %c0_27, %c0_28] : memref<12x8x256xf32, #tpu.memory_space<vmem>>, vector<1x8x256xf32>
    %158 = vector.shape_cast %157 : vector<1x8x256xf32> to vector<8x256xf32>
    %c11_i32_29 = arith.constant 11 : i32
    %159 = arith.subi %c11_i32_29, %c3_i32 : i32
    %160 = arith.index_cast %159 : i32 to index
    %c0_30 = arith.constant 0 : index
    %c0_31 = arith.constant 0 : index
    %161 = vector.load %arg0[%160, %c0_30, %c0_31] : memref<12x8x256xf32, #tpu.memory_space<vmem>>, vector<1x8x256xf32>
    %162 = vector.shape_cast %161 : vector<1x8x256xf32> to vector<8x256xf32>
    %163 = vector.extract_strided_slice %158 {offsets = [0, 0], sizes = [8, 128], strides = [1, 1]} : vector<8x256xf32> to vector<8x128xf32>
    %164 = arith.truncf %135 : vector<8x32xf32> to vector<8x32xbf16>
    %cst_32 = arith.constant dense<0.000000e+00> : vector<8x128xf32>
    %165 = tpu.matmul %164, %12, %cst_32 {dimension_numbers = #tpu.dot_dimension_numbers<[1], [0], [0], [1], [0, 0, 1, 1], [], []>} : vector<8x32xbf16>, vector<32x128xbf16>, vector<8x128xf32> -> vector<8x128xf32>
    %166 = arith.addf %163, %165 : vector<8x128xf32>
    %167 = vector.broadcast %8 : vector<1x128xf32> to vector<8x128xf32>
    %168 = arith.mulf %166, %167 : vector<8x128xf32>
    %169 = math.tanh %168 : vector<8x128xf32>
    %170 = vector.broadcast %8 : vector<1x128xf32> to vector<8x128xf32>
    %171 = arith.mulf %169, %170 : vector<8x128xf32>
    %172 = vector.broadcast %11 : vector<1x128xf32> to vector<8x128xf32>
    %173 = arith.addf %171, %172 : vector<8x128xf32>
    %174 = vector.extract_strided_slice %173 {offsets = [0, 0], sizes = [8, 32], strides = [1, 1]} : vector<8x128xf32> to vector<8x32xf32>
    %175 = vector.extract_strided_slice %173 {offsets = [0, 32], sizes = [8, 32], strides = [1, 1]} : vector<8x128xf32> to vector<8x32xf32>
    %176 = vector.extract_strided_slice %173 {offsets = [0, 64], sizes = [8, 32], strides = [1, 1]} : vector<8x128xf32> to vector<8x32xf32>
    %177 = vector.extract_strided_slice %173 {offsets = [0, 96], sizes = [8, 32], strides = [1, 1]} : vector<8x128xf32> to vector<8x32xf32>
    %178 = arith.mulf %175, %133 : vector<8x32xf32>
    %179 = arith.mulf %174, %176 : vector<8x32xf32>
    %180 = arith.addf %178, %179 : vector<8x32xf32>
    %181 = math.tanh %180 : vector<8x32xf32>
    %182 = arith.mulf %177, %181 : vector<8x32xf32>
    %183 = vector.extract_strided_slice %162 {offsets = [0, 128], sizes = [8, 128], strides = [1, 1]} : vector<8x256xf32> to vector<8x128xf32>
    %184 = arith.truncf %155 : vector<8x32xf32> to vector<8x32xbf16>
    %cst_33 = arith.constant dense<0.000000e+00> : vector<8x128xf32>
    %185 = tpu.matmul %184, %13, %cst_33 {dimension_numbers = #tpu.dot_dimension_numbers<[1], [0], [0], [1], [0, 0, 1, 1], [], []>} : vector<8x32xbf16>, vector<32x128xbf16>, vector<8x128xf32> -> vector<8x128xf32>
    %186 = arith.addf %183, %185 : vector<8x128xf32>
    %187 = vector.broadcast %8 : vector<1x128xf32> to vector<8x128xf32>
    %188 = arith.mulf %186, %187 : vector<8x128xf32>
    %189 = math.tanh %188 : vector<8x128xf32>
    %190 = vector.broadcast %8 : vector<1x128xf32> to vector<8x128xf32>
    %191 = arith.mulf %189, %190 : vector<8x128xf32>
    %192 = vector.broadcast %11 : vector<1x128xf32> to vector<8x128xf32>
    %193 = arith.addf %191, %192 : vector<8x128xf32>
    %194 = vector.extract_strided_slice %193 {offsets = [0, 0], sizes = [8, 32], strides = [1, 1]} : vector<8x128xf32> to vector<8x32xf32>
    %195 = vector.extract_strided_slice %193 {offsets = [0, 32], sizes = [8, 32], strides = [1, 1]} : vector<8x128xf32> to vector<8x32xf32>
    %196 = vector.extract_strided_slice %193 {offsets = [0, 64], sizes = [8, 32], strides = [1, 1]} : vector<8x128xf32> to vector<8x32xf32>
    %197 = vector.extract_strided_slice %193 {offsets = [0, 96], sizes = [8, 32], strides = [1, 1]} : vector<8x128xf32> to vector<8x32xf32>
    %198 = arith.mulf %195, %153 : vector<8x32xf32>
    %199 = arith.mulf %194, %196 : vector<8x32xf32>
    %200 = arith.addf %198, %199 : vector<8x32xf32>
    %201 = math.tanh %200 : vector<8x32xf32>
    %202 = arith.mulf %197, %201 : vector<8x32xf32>
    %c4_i32 = arith.constant 4 : i32
    %203 = arith.index_cast %c4_i32 : i32 to index
    %c0_34 = arith.constant 0 : index
    %c0_35 = arith.constant 0 : index
    %204 = vector.load %arg0[%203, %c0_34, %c0_35] : memref<12x8x256xf32, #tpu.memory_space<vmem>>, vector<1x8x256xf32>
    %205 = vector.shape_cast %204 : vector<1x8x256xf32> to vector<8x256xf32>
    %c11_i32_36 = arith.constant 11 : i32
    %206 = arith.subi %c11_i32_36, %c4_i32 : i32
    %207 = arith.index_cast %206 : i32 to index
    %c0_37 = arith.constant 0 : index
    %c0_38 = arith.constant 0 : index
    %208 = vector.load %arg0[%207, %c0_37, %c0_38] : memref<12x8x256xf32, #tpu.memory_space<vmem>>, vector<1x8x256xf32>
    %209 = vector.shape_cast %208 : vector<1x8x256xf32> to vector<8x256xf32>
    %210 = vector.extract_strided_slice %205 {offsets = [0, 0], sizes = [8, 128], strides = [1, 1]} : vector<8x256xf32> to vector<8x128xf32>
    %211 = arith.truncf %182 : vector<8x32xf32> to vector<8x32xbf16>
    %cst_39 = arith.constant dense<0.000000e+00> : vector<8x128xf32>
    %212 = tpu.matmul %211, %12, %cst_39 {dimension_numbers = #tpu.dot_dimension_numbers<[1], [0], [0], [1], [0, 0, 1, 1], [], []>} : vector<8x32xbf16>, vector<32x128xbf16>, vector<8x128xf32> -> vector<8x128xf32>
    %213 = arith.addf %210, %212 : vector<8x128xf32>
    %214 = vector.broadcast %8 : vector<1x128xf32> to vector<8x128xf32>
    %215 = arith.mulf %213, %214 : vector<8x128xf32>
    %216 = math.tanh %215 : vector<8x128xf32>
    %217 = vector.broadcast %8 : vector<1x128xf32> to vector<8x128xf32>
    %218 = arith.mulf %216, %217 : vector<8x128xf32>
    %219 = vector.broadcast %11 : vector<1x128xf32> to vector<8x128xf32>
    %220 = arith.addf %218, %219 : vector<8x128xf32>
    %221 = vector.extract_strided_slice %220 {offsets = [0, 0], sizes = [8, 32], strides = [1, 1]} : vector<8x128xf32> to vector<8x32xf32>
    %222 = vector.extract_strided_slice %220 {offsets = [0, 32], sizes = [8, 32], strides = [1, 1]} : vector<8x128xf32> to vector<8x32xf32>
    %223 = vector.extract_strided_slice %220 {offsets = [0, 64], sizes = [8, 32], strides = [1, 1]} : vector<8x128xf32> to vector<8x32xf32>
    %224 = vector.extract_strided_slice %220 {offsets = [0, 96], sizes = [8, 32], strides = [1, 1]} : vector<8x128xf32> to vector<8x32xf32>
    %225 = arith.mulf %222, %180 : vector<8x32xf32>
    %226 = arith.mulf %221, %223 : vector<8x32xf32>
    %227 = arith.addf %225, %226 : vector<8x32xf32>
    %228 = math.tanh %227 : vector<8x32xf32>
    %229 = arith.mulf %224, %228 : vector<8x32xf32>
    %230 = vector.extract_strided_slice %209 {offsets = [0, 128], sizes = [8, 128], strides = [1, 1]} : vector<8x256xf32> to vector<8x128xf32>
    %231 = arith.truncf %202 : vector<8x32xf32> to vector<8x32xbf16>
    %cst_40 = arith.constant dense<0.000000e+00> : vector<8x128xf32>
    %232 = tpu.matmul %231, %13, %cst_40 {dimension_numbers = #tpu.dot_dimension_numbers<[1], [0], [0], [1], [0, 0, 1, 1], [], []>} : vector<8x32xbf16>, vector<32x128xbf16>, vector<8x128xf32> -> vector<8x128xf32>
    %233 = arith.addf %230, %232 : vector<8x128xf32>
    %234 = vector.broadcast %8 : vector<1x128xf32> to vector<8x128xf32>
    %235 = arith.mulf %233, %234 : vector<8x128xf32>
    %236 = math.tanh %235 : vector<8x128xf32>
    %237 = vector.broadcast %8 : vector<1x128xf32> to vector<8x128xf32>
    %238 = arith.mulf %236, %237 : vector<8x128xf32>
    %239 = vector.broadcast %11 : vector<1x128xf32> to vector<8x128xf32>
    %240 = arith.addf %238, %239 : vector<8x128xf32>
    %241 = vector.extract_strided_slice %240 {offsets = [0, 0], sizes = [8, 32], strides = [1, 1]} : vector<8x128xf32> to vector<8x32xf32>
    %242 = vector.extract_strided_slice %240 {offsets = [0, 32], sizes = [8, 32], strides = [1, 1]} : vector<8x128xf32> to vector<8x32xf32>
    %243 = vector.extract_strided_slice %240 {offsets = [0, 64], sizes = [8, 32], strides = [1, 1]} : vector<8x128xf32> to vector<8x32xf32>
    %244 = vector.extract_strided_slice %240 {offsets = [0, 96], sizes = [8, 32], strides = [1, 1]} : vector<8x128xf32> to vector<8x32xf32>
    %245 = arith.mulf %242, %200 : vector<8x32xf32>
    %246 = arith.mulf %241, %243 : vector<8x32xf32>
    %247 = arith.addf %245, %246 : vector<8x32xf32>
    %248 = math.tanh %247 : vector<8x32xf32>
    %249 = arith.mulf %244, %248 : vector<8x32xf32>
    %c5_i32 = arith.constant 5 : i32
    %250 = arith.index_cast %c5_i32 : i32 to index
    %c0_41 = arith.constant 0 : index
    %c0_42 = arith.constant 0 : index
    %251 = vector.load %arg0[%250, %c0_41, %c0_42] : memref<12x8x256xf32, #tpu.memory_space<vmem>>, vector<1x8x256xf32>
    %252 = vector.shape_cast %251 : vector<1x8x256xf32> to vector<8x256xf32>
    %c11_i32_43 = arith.constant 11 : i32
    %253 = arith.subi %c11_i32_43, %c5_i32 : i32
    %254 = arith.index_cast %253 : i32 to index
    %c0_44 = arith.constant 0 : index
    %c0_45 = arith.constant 0 : index
    %255 = vector.load %arg0[%254, %c0_44, %c0_45] : memref<12x8x256xf32, #tpu.memory_space<vmem>>, vector<1x8x256xf32>
    %256 = vector.shape_cast %255 : vector<1x8x256xf32> to vector<8x256xf32>
    %257 = vector.extract_strided_slice %252 {offsets = [0, 0], sizes = [8, 128], strides = [1, 1]} : vector<8x256xf32> to vector<8x128xf32>
    %258 = arith.truncf %229 : vector<8x32xf32> to vector<8x32xbf16>
    %cst_46 = arith.constant dense<0.000000e+00> : vector<8x128xf32>
    %259 = tpu.matmul %258, %12, %cst_46 {dimension_numbers = #tpu.dot_dimension_numbers<[1], [0], [0], [1], [0, 0, 1, 1], [], []>} : vector<8x32xbf16>, vector<32x128xbf16>, vector<8x128xf32> -> vector<8x128xf32>
    %260 = arith.addf %257, %259 : vector<8x128xf32>
    %261 = vector.broadcast %8 : vector<1x128xf32> to vector<8x128xf32>
    %262 = arith.mulf %260, %261 : vector<8x128xf32>
    %263 = math.tanh %262 : vector<8x128xf32>
    %264 = vector.broadcast %8 : vector<1x128xf32> to vector<8x128xf32>
    %265 = arith.mulf %263, %264 : vector<8x128xf32>
    %266 = vector.broadcast %11 : vector<1x128xf32> to vector<8x128xf32>
    %267 = arith.addf %265, %266 : vector<8x128xf32>
    %268 = vector.extract_strided_slice %267 {offsets = [0, 0], sizes = [8, 32], strides = [1, 1]} : vector<8x128xf32> to vector<8x32xf32>
    %269 = vector.extract_strided_slice %267 {offsets = [0, 32], sizes = [8, 32], strides = [1, 1]} : vector<8x128xf32> to vector<8x32xf32>
    %270 = vector.extract_strided_slice %267 {offsets = [0, 64], sizes = [8, 32], strides = [1, 1]} : vector<8x128xf32> to vector<8x32xf32>
    %271 = vector.extract_strided_slice %267 {offsets = [0, 96], sizes = [8, 32], strides = [1, 1]} : vector<8x128xf32> to vector<8x32xf32>
    %272 = arith.mulf %269, %227 : vector<8x32xf32>
    %273 = arith.mulf %268, %270 : vector<8x32xf32>
    %274 = arith.addf %272, %273 : vector<8x32xf32>
    %275 = math.tanh %274 : vector<8x32xf32>
    %276 = arith.mulf %271, %275 : vector<8x32xf32>
    %277 = vector.extract_strided_slice %256 {offsets = [0, 128], sizes = [8, 128], strides = [1, 1]} : vector<8x256xf32> to vector<8x128xf32>
    %278 = arith.truncf %249 : vector<8x32xf32> to vector<8x32xbf16>
    %cst_47 = arith.constant dense<0.000000e+00> : vector<8x128xf32>
    %279 = tpu.matmul %278, %13, %cst_47 {dimension_numbers = #tpu.dot_dimension_numbers<[1], [0], [0], [1], [0, 0, 1, 1], [], []>} : vector<8x32xbf16>, vector<32x128xbf16>, vector<8x128xf32> -> vector<8x128xf32>
    %280 = arith.addf %277, %279 : vector<8x128xf32>
    %281 = vector.broadcast %8 : vector<1x128xf32> to vector<8x128xf32>
    %282 = arith.mulf %280, %281 : vector<8x128xf32>
    %283 = math.tanh %282 : vector<8x128xf32>
    %284 = vector.broadcast %8 : vector<1x128xf32> to vector<8x128xf32>
    %285 = arith.mulf %283, %284 : vector<8x128xf32>
    %286 = vector.broadcast %11 : vector<1x128xf32> to vector<8x128xf32>
    %287 = arith.addf %285, %286 : vector<8x128xf32>
    %288 = vector.extract_strided_slice %287 {offsets = [0, 0], sizes = [8, 32], strides = [1, 1]} : vector<8x128xf32> to vector<8x32xf32>
    %289 = vector.extract_strided_slice %287 {offsets = [0, 32], sizes = [8, 32], strides = [1, 1]} : vector<8x128xf32> to vector<8x32xf32>
    %290 = vector.extract_strided_slice %287 {offsets = [0, 64], sizes = [8, 32], strides = [1, 1]} : vector<8x128xf32> to vector<8x32xf32>
    %291 = vector.extract_strided_slice %287 {offsets = [0, 96], sizes = [8, 32], strides = [1, 1]} : vector<8x128xf32> to vector<8x32xf32>
    %292 = arith.mulf %289, %247 : vector<8x32xf32>
    %293 = arith.mulf %288, %290 : vector<8x32xf32>
    %294 = arith.addf %292, %293 : vector<8x32xf32>
    %295 = math.tanh %294 : vector<8x32xf32>
    %296 = arith.mulf %291, %295 : vector<8x32xf32>
    %c6_i32 = arith.constant 6 : i32
    %297 = arith.index_cast %c6_i32 : i32 to index
    %c0_48 = arith.constant 0 : index
    %c0_49 = arith.constant 0 : index
    %298 = vector.load %arg0[%297, %c0_48, %c0_49] : memref<12x8x256xf32, #tpu.memory_space<vmem>>, vector<1x8x256xf32>
    %299 = vector.shape_cast %298 : vector<1x8x256xf32> to vector<8x256xf32>
    %c11_i32_50 = arith.constant 11 : i32
    %300 = arith.subi %c11_i32_50, %c6_i32 : i32
    %301 = arith.index_cast %300 : i32 to index
    %c0_51 = arith.constant 0 : index
    %c0_52 = arith.constant 0 : index
    %302 = vector.load %arg0[%301, %c0_51, %c0_52] : memref<12x8x256xf32, #tpu.memory_space<vmem>>, vector<1x8x256xf32>
    %303 = vector.shape_cast %302 : vector<1x8x256xf32> to vector<8x256xf32>
    %304 = vector.extract_strided_slice %299 {offsets = [0, 0], sizes = [8, 128], strides = [1, 1]} : vector<8x256xf32> to vector<8x128xf32>
    %305 = arith.truncf %276 : vector<8x32xf32> to vector<8x32xbf16>
    %cst_53 = arith.constant dense<0.000000e+00> : vector<8x128xf32>
    %306 = tpu.matmul %305, %12, %cst_53 {dimension_numbers = #tpu.dot_dimension_numbers<[1], [0], [0], [1], [0, 0, 1, 1], [], []>} : vector<8x32xbf16>, vector<32x128xbf16>, vector<8x128xf32> -> vector<8x128xf32>
    %307 = arith.addf %304, %306 : vector<8x128xf32>
    %308 = vector.broadcast %8 : vector<1x128xf32> to vector<8x128xf32>
    %309 = arith.mulf %307, %308 : vector<8x128xf32>
    %310 = math.tanh %309 : vector<8x128xf32>
    %311 = vector.broadcast %8 : vector<1x128xf32> to vector<8x128xf32>
    %312 = arith.mulf %310, %311 : vector<8x128xf32>
    %313 = vector.broadcast %11 : vector<1x128xf32> to vector<8x128xf32>
    %314 = arith.addf %312, %313 : vector<8x128xf32>
    %315 = vector.extract_strided_slice %314 {offsets = [0, 0], sizes = [8, 32], strides = [1, 1]} : vector<8x128xf32> to vector<8x32xf32>
    %316 = vector.extract_strided_slice %314 {offsets = [0, 32], sizes = [8, 32], strides = [1, 1]} : vector<8x128xf32> to vector<8x32xf32>
    %317 = vector.extract_strided_slice %314 {offsets = [0, 64], sizes = [8, 32], strides = [1, 1]} : vector<8x128xf32> to vector<8x32xf32>
    %318 = vector.extract_strided_slice %314 {offsets = [0, 96], sizes = [8, 32], strides = [1, 1]} : vector<8x128xf32> to vector<8x32xf32>
    %319 = arith.mulf %316, %274 : vector<8x32xf32>
    %320 = arith.mulf %315, %317 : vector<8x32xf32>
    %321 = arith.addf %319, %320 : vector<8x32xf32>
    %322 = math.tanh %321 : vector<8x32xf32>
    %323 = arith.mulf %318, %322 : vector<8x32xf32>
    %324 = vector.extract_strided_slice %303 {offsets = [0, 128], sizes = [8, 128], strides = [1, 1]} : vector<8x256xf32> to vector<8x128xf32>
    %325 = arith.truncf %296 : vector<8x32xf32> to vector<8x32xbf16>
    %cst_54 = arith.constant dense<0.000000e+00> : vector<8x128xf32>
    %326 = tpu.matmul %325, %13, %cst_54 {dimension_numbers = #tpu.dot_dimension_numbers<[1], [0], [0], [1], [0, 0, 1, 1], [], []>} : vector<8x32xbf16>, vector<32x128xbf16>, vector<8x128xf32> -> vector<8x128xf32>
    %327 = arith.addf %324, %326 : vector<8x128xf32>
    %328 = vector.broadcast %8 : vector<1x128xf32> to vector<8x128xf32>
    %329 = arith.mulf %327, %328 : vector<8x128xf32>
    %330 = math.tanh %329 : vector<8x128xf32>
    %331 = vector.broadcast %8 : vector<1x128xf32> to vector<8x128xf32>
    %332 = arith.mulf %330, %331 : vector<8x128xf32>
    %333 = vector.broadcast %11 : vector<1x128xf32> to vector<8x128xf32>
    %334 = arith.addf %332, %333 : vector<8x128xf32>
    %335 = vector.extract_strided_slice %334 {offsets = [0, 0], sizes = [8, 32], strides = [1, 1]} : vector<8x128xf32> to vector<8x32xf32>
    %336 = vector.extract_strided_slice %334 {offsets = [0, 32], sizes = [8, 32], strides = [1, 1]} : vector<8x128xf32> to vector<8x32xf32>
    %337 = vector.extract_strided_slice %334 {offsets = [0, 64], sizes = [8, 32], strides = [1, 1]} : vector<8x128xf32> to vector<8x32xf32>
    %338 = vector.extract_strided_slice %334 {offsets = [0, 96], sizes = [8, 32], strides = [1, 1]} : vector<8x128xf32> to vector<8x32xf32>
    %339 = arith.mulf %336, %294 : vector<8x32xf32>
    %340 = arith.mulf %335, %337 : vector<8x32xf32>
    %341 = arith.addf %339, %340 : vector<8x32xf32>
    %342 = math.tanh %341 : vector<8x32xf32>
    %343 = arith.mulf %338, %342 : vector<8x32xf32>
    %c7_i32 = arith.constant 7 : i32
    %344 = arith.index_cast %c7_i32 : i32 to index
    %c0_55 = arith.constant 0 : index
    %c0_56 = arith.constant 0 : index
    %345 = vector.load %arg0[%344, %c0_55, %c0_56] : memref<12x8x256xf32, #tpu.memory_space<vmem>>, vector<1x8x256xf32>
    %346 = vector.shape_cast %345 : vector<1x8x256xf32> to vector<8x256xf32>
    %c11_i32_57 = arith.constant 11 : i32
    %347 = arith.subi %c11_i32_57, %c7_i32 : i32
    %348 = arith.index_cast %347 : i32 to index
    %c0_58 = arith.constant 0 : index
    %c0_59 = arith.constant 0 : index
    %349 = vector.load %arg0[%348, %c0_58, %c0_59] : memref<12x8x256xf32, #tpu.memory_space<vmem>>, vector<1x8x256xf32>
    %350 = vector.shape_cast %349 : vector<1x8x256xf32> to vector<8x256xf32>
    %351 = vector.extract_strided_slice %346 {offsets = [0, 0], sizes = [8, 128], strides = [1, 1]} : vector<8x256xf32> to vector<8x128xf32>
    %352 = arith.truncf %323 : vector<8x32xf32> to vector<8x32xbf16>
    %cst_60 = arith.constant dense<0.000000e+00> : vector<8x128xf32>
    %353 = tpu.matmul %352, %12, %cst_60 {dimension_numbers = #tpu.dot_dimension_numbers<[1], [0], [0], [1], [0, 0, 1, 1], [], []>} : vector<8x32xbf16>, vector<32x128xbf16>, vector<8x128xf32> -> vector<8x128xf32>
    %354 = arith.addf %351, %353 : vector<8x128xf32>
    %355 = vector.broadcast %8 : vector<1x128xf32> to vector<8x128xf32>
    %356 = arith.mulf %354, %355 : vector<8x128xf32>
    %357 = math.tanh %356 : vector<8x128xf32>
    %358 = vector.broadcast %8 : vector<1x128xf32> to vector<8x128xf32>
    %359 = arith.mulf %357, %358 : vector<8x128xf32>
    %360 = vector.broadcast %11 : vector<1x128xf32> to vector<8x128xf32>
    %361 = arith.addf %359, %360 : vector<8x128xf32>
    %362 = vector.extract_strided_slice %361 {offsets = [0, 0], sizes = [8, 32], strides = [1, 1]} : vector<8x128xf32> to vector<8x32xf32>
    %363 = vector.extract_strided_slice %361 {offsets = [0, 32], sizes = [8, 32], strides = [1, 1]} : vector<8x128xf32> to vector<8x32xf32>
    %364 = vector.extract_strided_slice %361 {offsets = [0, 64], sizes = [8, 32], strides = [1, 1]} : vector<8x128xf32> to vector<8x32xf32>
    %365 = vector.extract_strided_slice %361 {offsets = [0, 96], sizes = [8, 32], strides = [1, 1]} : vector<8x128xf32> to vector<8x32xf32>
    %366 = arith.mulf %363, %321 : vector<8x32xf32>
    %367 = arith.mulf %362, %364 : vector<8x32xf32>
    %368 = arith.addf %366, %367 : vector<8x32xf32>
    %369 = math.tanh %368 : vector<8x32xf32>
    %370 = arith.mulf %365, %369 : vector<8x32xf32>
    %371 = vector.extract_strided_slice %350 {offsets = [0, 128], sizes = [8, 128], strides = [1, 1]} : vector<8x256xf32> to vector<8x128xf32>
    %372 = arith.truncf %343 : vector<8x32xf32> to vector<8x32xbf16>
    %cst_61 = arith.constant dense<0.000000e+00> : vector<8x128xf32>
    %373 = tpu.matmul %372, %13, %cst_61 {dimension_numbers = #tpu.dot_dimension_numbers<[1], [0], [0], [1], [0, 0, 1, 1], [], []>} : vector<8x32xbf16>, vector<32x128xbf16>, vector<8x128xf32> -> vector<8x128xf32>
    %374 = arith.addf %371, %373 : vector<8x128xf32>
    %375 = vector.broadcast %8 : vector<1x128xf32> to vector<8x128xf32>
    %376 = arith.mulf %374, %375 : vector<8x128xf32>
    %377 = math.tanh %376 : vector<8x128xf32>
    %378 = vector.broadcast %8 : vector<1x128xf32> to vector<8x128xf32>
    %379 = arith.mulf %377, %378 : vector<8x128xf32>
    %380 = vector.broadcast %11 : vector<1x128xf32> to vector<8x128xf32>
    %381 = arith.addf %379, %380 : vector<8x128xf32>
    %382 = vector.extract_strided_slice %381 {offsets = [0, 0], sizes = [8, 32], strides = [1, 1]} : vector<8x128xf32> to vector<8x32xf32>
    %383 = vector.extract_strided_slice %381 {offsets = [0, 32], sizes = [8, 32], strides = [1, 1]} : vector<8x128xf32> to vector<8x32xf32>
    %384 = vector.extract_strided_slice %381 {offsets = [0, 64], sizes = [8, 32], strides = [1, 1]} : vector<8x128xf32> to vector<8x32xf32>
    %385 = vector.extract_strided_slice %381 {offsets = [0, 96], sizes = [8, 32], strides = [1, 1]} : vector<8x128xf32> to vector<8x32xf32>
    %386 = arith.mulf %383, %341 : vector<8x32xf32>
    %387 = arith.mulf %382, %384 : vector<8x32xf32>
    %388 = arith.addf %386, %387 : vector<8x32xf32>
    %389 = math.tanh %388 : vector<8x32xf32>
    %390 = arith.mulf %385, %389 : vector<8x32xf32>
    %c8_i32 = arith.constant 8 : i32
    %391 = arith.index_cast %c8_i32 : i32 to index
    %c0_62 = arith.constant 0 : index
    %c0_63 = arith.constant 0 : index
    %392 = vector.load %arg0[%391, %c0_62, %c0_63] : memref<12x8x256xf32, #tpu.memory_space<vmem>>, vector<1x8x256xf32>
    %393 = vector.shape_cast %392 : vector<1x8x256xf32> to vector<8x256xf32>
    %c11_i32_64 = arith.constant 11 : i32
    %394 = arith.subi %c11_i32_64, %c8_i32 : i32
    %395 = arith.index_cast %394 : i32 to index
    %c0_65 = arith.constant 0 : index
    %c0_66 = arith.constant 0 : index
    %396 = vector.load %arg0[%395, %c0_65, %c0_66] : memref<12x8x256xf32, #tpu.memory_space<vmem>>, vector<1x8x256xf32>
    %397 = vector.shape_cast %396 : vector<1x8x256xf32> to vector<8x256xf32>
    %398 = vector.extract_strided_slice %393 {offsets = [0, 0], sizes = [8, 128], strides = [1, 1]} : vector<8x256xf32> to vector<8x128xf32>
    %399 = arith.truncf %370 : vector<8x32xf32> to vector<8x32xbf16>
    %cst_67 = arith.constant dense<0.000000e+00> : vector<8x128xf32>
    %400 = tpu.matmul %399, %12, %cst_67 {dimension_numbers = #tpu.dot_dimension_numbers<[1], [0], [0], [1], [0, 0, 1, 1], [], []>} : vector<8x32xbf16>, vector<32x128xbf16>, vector<8x128xf32> -> vector<8x128xf32>
    %401 = arith.addf %398, %400 : vector<8x128xf32>
    %402 = vector.broadcast %8 : vector<1x128xf32> to vector<8x128xf32>
    %403 = arith.mulf %401, %402 : vector<8x128xf32>
    %404 = math.tanh %403 : vector<8x128xf32>
    %405 = vector.broadcast %8 : vector<1x128xf32> to vector<8x128xf32>
    %406 = arith.mulf %404, %405 : vector<8x128xf32>
    %407 = vector.broadcast %11 : vector<1x128xf32> to vector<8x128xf32>
    %408 = arith.addf %406, %407 : vector<8x128xf32>
    %409 = vector.extract_strided_slice %408 {offsets = [0, 0], sizes = [8, 32], strides = [1, 1]} : vector<8x128xf32> to vector<8x32xf32>
    %410 = vector.extract_strided_slice %408 {offsets = [0, 32], sizes = [8, 32], strides = [1, 1]} : vector<8x128xf32> to vector<8x32xf32>
    %411 = vector.extract_strided_slice %408 {offsets = [0, 64], sizes = [8, 32], strides = [1, 1]} : vector<8x128xf32> to vector<8x32xf32>
    %412 = vector.extract_strided_slice %408 {offsets = [0, 96], sizes = [8, 32], strides = [1, 1]} : vector<8x128xf32> to vector<8x32xf32>
    %413 = arith.mulf %410, %368 : vector<8x32xf32>
    %414 = arith.mulf %409, %411 : vector<8x32xf32>
    %415 = arith.addf %413, %414 : vector<8x32xf32>
    %416 = math.tanh %415 : vector<8x32xf32>
    %417 = arith.mulf %412, %416 : vector<8x32xf32>
    %418 = vector.extract_strided_slice %397 {offsets = [0, 128], sizes = [8, 128], strides = [1, 1]} : vector<8x256xf32> to vector<8x128xf32>
    %419 = arith.truncf %390 : vector<8x32xf32> to vector<8x32xbf16>
    %cst_68 = arith.constant dense<0.000000e+00> : vector<8x128xf32>
    %420 = tpu.matmul %419, %13, %cst_68 {dimension_numbers = #tpu.dot_dimension_numbers<[1], [0], [0], [1], [0, 0, 1, 1], [], []>} : vector<8x32xbf16>, vector<32x128xbf16>, vector<8x128xf32> -> vector<8x128xf32>
    %421 = arith.addf %418, %420 : vector<8x128xf32>
    %422 = vector.broadcast %8 : vector<1x128xf32> to vector<8x128xf32>
    %423 = arith.mulf %421, %422 : vector<8x128xf32>
    %424 = math.tanh %423 : vector<8x128xf32>
    %425 = vector.broadcast %8 : vector<1x128xf32> to vector<8x128xf32>
    %426 = arith.mulf %424, %425 : vector<8x128xf32>
    %427 = vector.broadcast %11 : vector<1x128xf32> to vector<8x128xf32>
    %428 = arith.addf %426, %427 : vector<8x128xf32>
    %429 = vector.extract_strided_slice %428 {offsets = [0, 0], sizes = [8, 32], strides = [1, 1]} : vector<8x128xf32> to vector<8x32xf32>
    %430 = vector.extract_strided_slice %428 {offsets = [0, 32], sizes = [8, 32], strides = [1, 1]} : vector<8x128xf32> to vector<8x32xf32>
    %431 = vector.extract_strided_slice %428 {offsets = [0, 64], sizes = [8, 32], strides = [1, 1]} : vector<8x128xf32> to vector<8x32xf32>
    %432 = vector.extract_strided_slice %428 {offsets = [0, 96], sizes = [8, 32], strides = [1, 1]} : vector<8x128xf32> to vector<8x32xf32>
    %433 = arith.mulf %430, %388 : vector<8x32xf32>
    %434 = arith.mulf %429, %431 : vector<8x32xf32>
    %435 = arith.addf %433, %434 : vector<8x32xf32>
    %436 = math.tanh %435 : vector<8x32xf32>
    %437 = arith.mulf %432, %436 : vector<8x32xf32>
    %c9_i32 = arith.constant 9 : i32
    %438 = arith.index_cast %c9_i32 : i32 to index
    %c0_69 = arith.constant 0 : index
    %c0_70 = arith.constant 0 : index
    %439 = vector.load %arg0[%438, %c0_69, %c0_70] : memref<12x8x256xf32, #tpu.memory_space<vmem>>, vector<1x8x256xf32>
    %440 = vector.shape_cast %439 : vector<1x8x256xf32> to vector<8x256xf32>
    %c11_i32_71 = arith.constant 11 : i32
    %441 = arith.subi %c11_i32_71, %c9_i32 : i32
    %442 = arith.index_cast %441 : i32 to index
    %c0_72 = arith.constant 0 : index
    %c0_73 = arith.constant 0 : index
    %443 = vector.load %arg0[%442, %c0_72, %c0_73] : memref<12x8x256xf32, #tpu.memory_space<vmem>>, vector<1x8x256xf32>
    %444 = vector.shape_cast %443 : vector<1x8x256xf32> to vector<8x256xf32>
    %445 = vector.extract_strided_slice %440 {offsets = [0, 0], sizes = [8, 128], strides = [1, 1]} : vector<8x256xf32> to vector<8x128xf32>
    %446 = arith.truncf %417 : vector<8x32xf32> to vector<8x32xbf16>
    %cst_74 = arith.constant dense<0.000000e+00> : vector<8x128xf32>
    %447 = tpu.matmul %446, %12, %cst_74 {dimension_numbers = #tpu.dot_dimension_numbers<[1], [0], [0], [1], [0, 0, 1, 1], [], []>} : vector<8x32xbf16>, vector<32x128xbf16>, vector<8x128xf32> -> vector<8x128xf32>
    %448 = arith.addf %445, %447 : vector<8x128xf32>
    %449 = vector.broadcast %8 : vector<1x128xf32> to vector<8x128xf32>
    %450 = arith.mulf %448, %449 : vector<8x128xf32>
    %451 = math.tanh %450 : vector<8x128xf32>
    %452 = vector.broadcast %8 : vector<1x128xf32> to vector<8x128xf32>
    %453 = arith.mulf %451, %452 : vector<8x128xf32>
    %454 = vector.broadcast %11 : vector<1x128xf32> to vector<8x128xf32>
    %455 = arith.addf %453, %454 : vector<8x128xf32>
    %456 = vector.extract_strided_slice %455 {offsets = [0, 0], sizes = [8, 32], strides = [1, 1]} : vector<8x128xf32> to vector<8x32xf32>
    %457 = vector.extract_strided_slice %455 {offsets = [0, 32], sizes = [8, 32], strides = [1, 1]} : vector<8x128xf32> to vector<8x32xf32>
    %458 = vector.extract_strided_slice %455 {offsets = [0, 64], sizes = [8, 32], strides = [1, 1]} : vector<8x128xf32> to vector<8x32xf32>
    %459 = vector.extract_strided_slice %455 {offsets = [0, 96], sizes = [8, 32], strides = [1, 1]} : vector<8x128xf32> to vector<8x32xf32>
    %460 = arith.mulf %457, %415 : vector<8x32xf32>
    %461 = arith.mulf %456, %458 : vector<8x32xf32>
    %462 = arith.addf %460, %461 : vector<8x32xf32>
    %463 = math.tanh %462 : vector<8x32xf32>
    %464 = arith.mulf %459, %463 : vector<8x32xf32>
    %465 = vector.extract_strided_slice %444 {offsets = [0, 128], sizes = [8, 128], strides = [1, 1]} : vector<8x256xf32> to vector<8x128xf32>
    %466 = arith.truncf %437 : vector<8x32xf32> to vector<8x32xbf16>
    %cst_75 = arith.constant dense<0.000000e+00> : vector<8x128xf32>
    %467 = tpu.matmul %466, %13, %cst_75 {dimension_numbers = #tpu.dot_dimension_numbers<[1], [0], [0], [1], [0, 0, 1, 1], [], []>} : vector<8x32xbf16>, vector<32x128xbf16>, vector<8x128xf32> -> vector<8x128xf32>
    %468 = arith.addf %465, %467 : vector<8x128xf32>
    %469 = vector.broadcast %8 : vector<1x128xf32> to vector<8x128xf32>
    %470 = arith.mulf %468, %469 : vector<8x128xf32>
    %471 = math.tanh %470 : vector<8x128xf32>
    %472 = vector.broadcast %8 : vector<1x128xf32> to vector<8x128xf32>
    %473 = arith.mulf %471, %472 : vector<8x128xf32>
    %474 = vector.broadcast %11 : vector<1x128xf32> to vector<8x128xf32>
    %475 = arith.addf %473, %474 : vector<8x128xf32>
    %476 = vector.extract_strided_slice %475 {offsets = [0, 0], sizes = [8, 32], strides = [1, 1]} : vector<8x128xf32> to vector<8x32xf32>
    %477 = vector.extract_strided_slice %475 {offsets = [0, 32], sizes = [8, 32], strides = [1, 1]} : vector<8x128xf32> to vector<8x32xf32>
    %478 = vector.extract_strided_slice %475 {offsets = [0, 64], sizes = [8, 32], strides = [1, 1]} : vector<8x128xf32> to vector<8x32xf32>
    %479 = vector.extract_strided_slice %475 {offsets = [0, 96], sizes = [8, 32], strides = [1, 1]} : vector<8x128xf32> to vector<8x32xf32>
    %480 = arith.mulf %477, %435 : vector<8x32xf32>
    %481 = arith.mulf %476, %478 : vector<8x32xf32>
    %482 = arith.addf %480, %481 : vector<8x32xf32>
    %483 = math.tanh %482 : vector<8x32xf32>
    %484 = arith.mulf %479, %483 : vector<8x32xf32>
    %c10_i32 = arith.constant 10 : i32
    %485 = arith.index_cast %c10_i32 : i32 to index
    %c0_76 = arith.constant 0 : index
    %c0_77 = arith.constant 0 : index
    %486 = vector.load %arg0[%485, %c0_76, %c0_77] : memref<12x8x256xf32, #tpu.memory_space<vmem>>, vector<1x8x256xf32>
    %487 = vector.shape_cast %486 : vector<1x8x256xf32> to vector<8x256xf32>
    %c11_i32_78 = arith.constant 11 : i32
    %488 = arith.subi %c11_i32_78, %c10_i32 : i32
    %489 = arith.index_cast %488 : i32 to index
    %c0_79 = arith.constant 0 : index
    %c0_80 = arith.constant 0 : index
    %490 = vector.load %arg0[%489, %c0_79, %c0_80] : memref<12x8x256xf32, #tpu.memory_space<vmem>>, vector<1x8x256xf32>
    %491 = vector.shape_cast %490 : vector<1x8x256xf32> to vector<8x256xf32>
    %492 = vector.extract_strided_slice %487 {offsets = [0, 0], sizes = [8, 128], strides = [1, 1]} : vector<8x256xf32> to vector<8x128xf32>
    %493 = arith.truncf %464 : vector<8x32xf32> to vector<8x32xbf16>
    %cst_81 = arith.constant dense<0.000000e+00> : vector<8x128xf32>
    %494 = tpu.matmul %493, %12, %cst_81 {dimension_numbers = #tpu.dot_dimension_numbers<[1], [0], [0], [1], [0, 0, 1, 1], [], []>} : vector<8x32xbf16>, vector<32x128xbf16>, vector<8x128xf32> -> vector<8x128xf32>
    %495 = arith.addf %492, %494 : vector<8x128xf32>
    %496 = vector.broadcast %8 : vector<1x128xf32> to vector<8x128xf32>
    %497 = arith.mulf %495, %496 : vector<8x128xf32>
    %498 = math.tanh %497 : vector<8x128xf32>
    %499 = vector.broadcast %8 : vector<1x128xf32> to vector<8x128xf32>
    %500 = arith.mulf %498, %499 : vector<8x128xf32>
    %501 = vector.broadcast %11 : vector<1x128xf32> to vector<8x128xf32>
    %502 = arith.addf %500, %501 : vector<8x128xf32>
    %503 = vector.extract_strided_slice %502 {offsets = [0, 0], sizes = [8, 32], strides = [1, 1]} : vector<8x128xf32> to vector<8x32xf32>
    %504 = vector.extract_strided_slice %502 {offsets = [0, 32], sizes = [8, 32], strides = [1, 1]} : vector<8x128xf32> to vector<8x32xf32>
    %505 = vector.extract_strided_slice %502 {offsets = [0, 64], sizes = [8, 32], strides = [1, 1]} : vector<8x128xf32> to vector<8x32xf32>
    %506 = vector.extract_strided_slice %502 {offsets = [0, 96], sizes = [8, 32], strides = [1, 1]} : vector<8x128xf32> to vector<8x32xf32>
    %507 = arith.mulf %504, %462 : vector<8x32xf32>
    %508 = arith.mulf %503, %505 : vector<8x32xf32>
    %509 = arith.addf %507, %508 : vector<8x32xf32>
    %510 = math.tanh %509 : vector<8x32xf32>
    %511 = arith.mulf %506, %510 : vector<8x32xf32>
    %512 = vector.extract_strided_slice %491 {offsets = [0, 128], sizes = [8, 128], strides = [1, 1]} : vector<8x256xf32> to vector<8x128xf32>
    %513 = arith.truncf %484 : vector<8x32xf32> to vector<8x32xbf16>
    %cst_82 = arith.constant dense<0.000000e+00> : vector<8x128xf32>
    %514 = tpu.matmul %513, %13, %cst_82 {dimension_numbers = #tpu.dot_dimension_numbers<[1], [0], [0], [1], [0, 0, 1, 1], [], []>} : vector<8x32xbf16>, vector<32x128xbf16>, vector<8x128xf32> -> vector<8x128xf32>
    %515 = arith.addf %512, %514 : vector<8x128xf32>
    %516 = vector.broadcast %8 : vector<1x128xf32> to vector<8x128xf32>
    %517 = arith.mulf %515, %516 : vector<8x128xf32>
    %518 = math.tanh %517 : vector<8x128xf32>
    %519 = vector.broadcast %8 : vector<1x128xf32> to vector<8x128xf32>
    %520 = arith.mulf %518, %519 : vector<8x128xf32>
    %521 = vector.broadcast %11 : vector<1x128xf32> to vector<8x128xf32>
    %522 = arith.addf %520, %521 : vector<8x128xf32>
    %523 = vector.extract_strided_slice %522 {offsets = [0, 0], sizes = [8, 32], strides = [1, 1]} : vector<8x128xf32> to vector<8x32xf32>
    %524 = vector.extract_strided_slice %522 {offsets = [0, 32], sizes = [8, 32], strides = [1, 1]} : vector<8x128xf32> to vector<8x32xf32>
    %525 = vector.extract_strided_slice %522 {offsets = [0, 64], sizes = [8, 32], strides = [1, 1]} : vector<8x128xf32> to vector<8x32xf32>
    %526 = vector.extract_strided_slice %522 {offsets = [0, 96], sizes = [8, 32], strides = [1, 1]} : vector<8x128xf32> to vector<8x32xf32>
    %527 = arith.mulf %524, %482 : vector<8x32xf32>
    %528 = arith.mulf %523, %525 : vector<8x32xf32>
    %529 = arith.addf %527, %528 : vector<8x32xf32>
    %530 = math.tanh %529 : vector<8x32xf32>
    %531 = arith.mulf %526, %530 : vector<8x32xf32>
    %c11_i32_83 = arith.constant 11 : i32
    %532 = arith.index_cast %c11_i32_83 : i32 to index
    %c0_84 = arith.constant 0 : index
    %c0_85 = arith.constant 0 : index
    %533 = vector.load %arg0[%532, %c0_84, %c0_85] : memref<12x8x256xf32, #tpu.memory_space<vmem>>, vector<1x8x256xf32>
    %534 = vector.shape_cast %533 : vector<1x8x256xf32> to vector<8x256xf32>
    %c11_i32_86 = arith.constant 11 : i32
    %535 = arith.subi %c11_i32_86, %c11_i32_83 : i32
    %536 = arith.index_cast %535 : i32 to index
    %c0_87 = arith.constant 0 : index
    %c0_88 = arith.constant 0 : index
    %537 = vector.load %arg0[%536, %c0_87, %c0_88] : memref<12x8x256xf32, #tpu.memory_space<vmem>>, vector<1x8x256xf32>
    %538 = vector.shape_cast %537 : vector<1x8x256xf32> to vector<8x256xf32>
    %539 = vector.extract_strided_slice %534 {offsets = [0, 0], sizes = [8, 128], strides = [1, 1]} : vector<8x256xf32> to vector<8x128xf32>
    %540 = arith.truncf %511 : vector<8x32xf32> to vector<8x32xbf16>
    %cst_89 = arith.constant dense<0.000000e+00> : vector<8x128xf32>
    %541 = tpu.matmul %540, %12, %cst_89 {dimension_numbers = #tpu.dot_dimension_numbers<[1], [0], [0], [1], [0, 0, 1, 1], [], []>} : vector<8x32xbf16>, vector<32x128xbf16>, vector<8x128xf32> -> vector<8x128xf32>
    %542 = arith.addf %539, %541 : vector<8x128xf32>
    %543 = vector.broadcast %8 : vector<1x128xf32> to vector<8x128xf32>
    %544 = arith.mulf %542, %543 : vector<8x128xf32>
    %545 = math.tanh %544 : vector<8x128xf32>
    %546 = vector.broadcast %8 : vector<1x128xf32> to vector<8x128xf32>
    %547 = arith.mulf %545, %546 : vector<8x128xf32>
    %548 = vector.broadcast %11 : vector<1x128xf32> to vector<8x128xf32>
    %549 = arith.addf %547, %548 : vector<8x128xf32>
    %550 = vector.extract_strided_slice %549 {offsets = [0, 0], sizes = [8, 32], strides = [1, 1]} : vector<8x128xf32> to vector<8x32xf32>
    %551 = vector.extract_strided_slice %549 {offsets = [0, 32], sizes = [8, 32], strides = [1, 1]} : vector<8x128xf32> to vector<8x32xf32>
    %552 = vector.extract_strided_slice %549 {offsets = [0, 64], sizes = [8, 32], strides = [1, 1]} : vector<8x128xf32> to vector<8x32xf32>
    %553 = vector.extract_strided_slice %549 {offsets = [0, 96], sizes = [8, 32], strides = [1, 1]} : vector<8x128xf32> to vector<8x32xf32>
    %554 = arith.mulf %551, %509 : vector<8x32xf32>
    %555 = arith.mulf %550, %552 : vector<8x32xf32>
    %556 = arith.addf %554, %555 : vector<8x32xf32>
    %557 = math.tanh %556 : vector<8x32xf32>
    %558 = arith.mulf %553, %557 : vector<8x32xf32>
    %559 = vector.extract_strided_slice %538 {offsets = [0, 128], sizes = [8, 128], strides = [1, 1]} : vector<8x256xf32> to vector<8x128xf32>
    %560 = arith.truncf %531 : vector<8x32xf32> to vector<8x32xbf16>
    %cst_90 = arith.constant dense<0.000000e+00> : vector<8x128xf32>
    %561 = tpu.matmul %560, %13, %cst_90 {dimension_numbers = #tpu.dot_dimension_numbers<[1], [0], [0], [1], [0, 0, 1, 1], [], []>} : vector<8x32xbf16>, vector<32x128xbf16>, vector<8x128xf32> -> vector<8x128xf32>
    %562 = arith.addf %559, %561 : vector<8x128xf32>
    %563 = vector.broadcast %8 : vector<1x128xf32> to vector<8x128xf32>
    %564 = arith.mulf %562, %563 : vector<8x128xf32>
    %565 = math.tanh %564 : vector<8x128xf32>
    %566 = vector.broadcast %8 : vector<1x128xf32> to vector<8x128xf32>
    %567 = arith.mulf %565, %566 : vector<8x128xf32>
    %568 = vector.broadcast %11 : vector<1x128xf32> to vector<8x128xf32>
    %569 = arith.addf %567, %568 : vector<8x128xf32>
    %570 = vector.extract_strided_slice %569 {offsets = [0, 0], sizes = [8, 32], strides = [1, 1]} : vector<8x128xf32> to vector<8x32xf32>
    %571 = vector.extract_strided_slice %569 {offsets = [0, 32], sizes = [8, 32], strides = [1, 1]} : vector<8x128xf32> to vector<8x32xf32>
    %572 = vector.extract_strided_slice %569 {offsets = [0, 64], sizes = [8, 32], strides = [1, 1]} : vector<8x128xf32> to vector<8x32xf32>
    %573 = vector.extract_strided_slice %569 {offsets = [0, 96], sizes = [8, 32], strides = [1, 1]} : vector<8x128xf32> to vector<8x32xf32>
    %574 = arith.mulf %571, %529 : vector<8x32xf32>
    %575 = arith.mulf %570, %572 : vector<8x32xf32>
    %576 = arith.addf %574, %575 : vector<8x32xf32>
    %577 = math.tanh %576 : vector<8x32xf32>
    %578 = arith.mulf %573, %577 : vector<8x32xf32>
    %c12_i32 = arith.constant 12 : i32
    %579 = tpu.concatenate %558, %578 in 1 : vector<8x32xf32>, vector<8x32xf32> -> vector<8x64xf32>
    %c0_91 = arith.constant 0 : index
    %c0_92 = arith.constant 0 : index
    %580 = vector.load %arg3[%c0_91, %c0_92] : memref<64x128xf32, #tpu.memory_space<vmem>>, vector<64x128xf32>
    %cst_93 = arith.constant dense<0.000000e+00> : vector<8x128xf32>
    %581 = tpu.matmul %579, %580, %cst_93 {dimension_numbers = #tpu.dot_dimension_numbers<[1], [0], [0], [1], [0, 0, 1, 1], [], []>} : vector<8x64xf32>, vector<64x128xf32>, vector<8x128xf32> -> vector<8x128xf32>
    %c0_94 = arith.constant 0 : index
    %c0_95 = arith.constant 0 : index
    %582 = vector.load %arg4[%c0_94, %c0_95] : memref<1x128xf32, #tpu.memory_space<vmem>>, vector<1x128xf32>
    %583 = vector.broadcast %582 : vector<1x128xf32> to vector<8x128xf32>
    %584 = arith.addf %581, %583 : vector<8x128xf32>
    %c0_96 = arith.constant 0 : index
    %c0_97 = arith.constant 0 : index
    %585 = vector.load %arg5[%c0_96, %c0_97] : memref<8x128xf32, #tpu.memory_space<vmem>>, vector<8x128xf32>
    tpu.vector_store %arg5[%c0_96, %c0_97], %584 {strides = array<i32>} : memref<8x128xf32, #tpu.memory_space<vmem>>, vector<8x128xf32>,
    return
  }
}

</mosaic_0001>

<llo_original>
// kernel: cnn_lstm_forward.2
$region0: #{cnn_lstm_forward.2}
  #allocation0 [shape = 'u32[]', space=smem, size = 0x4, offset = 0x4, fixed_abs, tag = 'smem constant byte address 0x4 - core index']
  #allocation1 [shape = 'u32[72,128]{1,0:T(1,128)}', space=vmem, size = 0x9000, scoped, tag = 'internal scratch']
  #allocation2 [shape = 'f32[128,128]{1,0:T(8,128)}', space=vmem, size = 0x10000, scoped, tag = 'scratch operand']
  %s0 = inlined_call_operand.vmem [shape: f32[14,8,20], index: 0, kind: input, shape index: {}]
  %s1 = inlined_call_operand.vmem [shape: bf16[20,128], index: 1, kind: input, shape index: {}]
  %s2 = inlined_call_operand.vmem [shape: f32[1,128], index: 2, kind: input, shape index: {}]
  %s3 = inlined_call_operand.vmem [shape: f32[1,128], index: 3, kind: input, shape index: {}]
  %s4 = inlined_call_operand.vmem [shape: f32[1,128], index: 4, kind: input, shape index: {}]
  %s5 = inlined_call_operand.vmem [shape: bf16[5,128,256], index: 5, kind: input, shape index: {}]
  %s6 = inlined_call_operand.vmem [shape: f32[1,256], index: 6, kind: input, shape index: {}]
  %s7 = inlined_call_operand.vmem [shape: bf16[256,256], index: 7, kind: input, shape index: {}]
  %s8 = inlined_call_operand.vmem [shape: f32[1,256], index: 8, kind: input, shape index: {}]
  %s9 = inlined_call_operand.vmem [shape: f32[12,8,256], index: 9, kind: output, shape index: {}]
  %s10 = sld [smem:[#allocation0]]
  $region46: #{cnn_lstm_forward.2} parent=0
    _
  %s12 = ssub.s32 1, %s10
  %s13 = scalar_select 0, %s12, %s10
  // Predicated region
  $region2: #{cnn_lstm_forward.2} parent=0 // pred_check
    _
  $region3: #{cnn_lstm_forward.2} parent=0 // pred_check_branch
    %15 = sbr.rel (0) target = $region5
  $region4: #{cnn_lstm_forward.2} parent=0 // pred_region
    _
  $region5: #{cnn_lstm_forward.2} parent=0 // pred_fallthru
    _
  // Predicated region
  $region6: #{cnn_lstm_forward.2} parent=0 // pred_check
    _
  $region7: #{cnn_lstm_forward.2} parent=0 // pred_check_branch
    %17 = sbr.rel (0) target = $region9
  $region8: #{cnn_lstm_forward.2} parent=0 // pred_region
    _
  $region9: #{cnn_lstm_forward.2} parent=0 // pred_fallthru
    _
  // Predicated region
  $region10: #{cnn_lstm_forward.2} parent=0 // pred_check
    _
  $region11: #{cnn_lstm_forward.2} parent=0 // pred_check_branch
    %19 = sbr.rel (0) target = $region13
  $region12: #{cnn_lstm_forward.2} parent=0 // pred_region
    _
  $region13: #{cnn_lstm_forward.2} parent=0 // pred_fallthru
    _
  // Predicated region
  $region14: #{cnn_lstm_forward.2} parent=0 // pred_check
    _
  $region15: #{cnn_lstm_forward.2} parent=0 // pred_check_branch
    %21 = sbr.rel (0) target = $region17
  $region16: #{cnn_lstm_forward.2} parent=0 // pred_region
    _
  $region17: #{cnn_lstm_forward.2} parent=0 // pred_fallthru
    _
  // Predicated region
  $region18: #{cnn_lstm_forward.2} parent=0 // pred_check
    _
  $region19: #{cnn_lstm_forward.2} parent=0 // pred_check_branch
    %23 = sbr.rel (0) target = $region21
  $region20: #{cnn_lstm_forward.2} parent=0 // pred_region
    _
  $region21: #{cnn_lstm_forward.2} parent=0 // pred_fallthru
    _
  // Predicated region
  $region22: #{cnn_lstm_forward.2} parent=0 // pred_check
    _
  $region23: #{cnn_lstm_forward.2} parent=0 // pred_check_branch
    %25 = sbr.rel (0) target = $region25
  $region24: #{cnn_lstm_forward.2} parent=0 // pred_region
    _
  $region25: #{cnn_lstm_forward.2} parent=0 // pred_fallthru
    _
  // Predicated region
  $region26: #{cnn_lstm_forward.2} parent=0 // pred_check
    _
  $region27: #{cnn_lstm_forward.2} parent=0 // pred_check_branch
    %27 = sbr.rel (0) target = $region29
  $region28: #{cnn_lstm_forward.2} parent=0 // pred_region
    _
  $region29: #{cnn_lstm_forward.2} parent=0 // pred_fallthru
    _
  // Predicated region
  $region30: #{cnn_lstm_forward.2} parent=0 // pred_check
    _
  $region31: #{cnn_lstm_forward.2} parent=0 // pred_check_branch
    %29 = sbr.rel (0) target = $region33
  $region32: #{cnn_lstm_forward.2} parent=0 // pred_region
    _
  $region33: #{cnn_lstm_forward.2} parent=0 // pred_fallthru
    _
  // Predicated region
  $region34: #{cnn_lstm_forward.2} parent=0 // pred_check
    _
  $region35: #{cnn_lstm_forward.2} parent=0 // pred_check_branch
    %31 = sbr.rel (0) target = $region37
  $region36: #{cnn_lstm_forward.2} parent=0 // pred_region
    _
  $region37: #{cnn_lstm_forward.2} parent=0 // pred_fallthru
    _
  %v33 = vld [vmem:[%s0] sm:$0xff]
  %v34 = vld [vmem:[%s0 + $0x8] sm:$0xff]
  %v35 = vld [vmem:[%s0 + $0x10] sm:$0xff]
  %v36 = vld [vmem:[%s0 + $0x18] sm:$0xff]
  %v37 = vld [vmem:[%s0 + $0x20] sm:$0xff]
  %v38 = vld [vmem:[%s0 + $0x28] sm:$0xff]
  %v39 = vld [vmem:[%s0 + $0x30] sm:$0xff]
  %v40 = vld [vmem:[%s0 + $0x38] sm:$0xff]
  %v41 = vld [vmem:[%s0 + $0x40] sm:$0xff]
  %v42 = vld [vmem:[%s0 + $0x48] sm:$0xff]
  %v43 = vld [vmem:[%s0 + $0x50] sm:$0xff]
  %v44 = vld [vmem:[%s0 + $0x58] sm:$0xff]
  %v45 = vld [vmem:[%s0 + $0x60] sm:$0xff]
  %v46 = vld [vmem:[%s0 + $0x68] sm:$0xff]
  %v47 = vpack.c.bf16 %v34, %v33
  %v48 = vpack.c.bf16 %v36, %v35
  %v49 = vpack.c.bf16 %v38, %v37
  %v50 = vpack.c.bf16 %v40, %v39
  %v51 = vpack.c.bf16 %v42, %v41
  %v52 = vpack.c.bf16 %v44, %v43
  %v53 = vpack.c.bf16 %v46, %v45
  %v54 = vld [vmem:[%s1] sm:$0xf]
  %v55 = vld [vmem:[%s1 + $0x4] sm:$0xf]
  %v56 = vld [vmem:[%s1 + $0x8] sm:$0x3]
  %v57 = vld [vmem:[%s2] sm:$0x1]
  %v59 = vperm.slane %v57, 0
  %v64 = vunpack.c.l.b16 %v54
  %v65 = vunpack.c.l.b16 %v55
  %v66 = vunpack.c.l.b16 %v56
  %v67 = vpack.c.b16 %v65, %v64
  %v68 = vpack.c.b16 %v66, %v66
  %vm70 = vcmask 162816
  %v72 = vsel %vm70, %v47, 0
  %v75 = vsel %vm70, %v48, 0
  %v78 = vsel %vm70, %v49, 0
  %v81 = vsel %vm70, %v50, 0
  %v84 = vsel %vm70, %v51, 0
  %v87 = vsel %vm70, %v52, 0
  %v90 = vsel %vm70, %v53, 0
  %vm92 = vcmask 1041408
  %v94 = vsel %vm92, %v68, 0
  %96 = vmatpush.bf16.msra.mxu0 0
  %97 = vmatpush.bf16.msra.mxu0 0
  %98 = vmatpush.bf16.msra.mxu0 0
  %99 = vmatpush.bf16.msra.mxu0 0
  %100 = vmatpush.bf16.msra.mxu0 0
  %101 = vmatpush.bf16.msra.mxu0 0
  %102 = vmatpush.bf16.msra.mxu0 %v94
  %103 = vmatpush.bf16.msra.mxu0 %v67
  %104 = vmatmul.bf16.gmra.mxu0 %v72
  %v105 = vpop.f32.mrf.mxu0
  %v106 = vadd.f32 %v59, %v105
  %v107 = vpop.f32.mrf.mxu0
  %v108 = vadd.f32 %v59, %v107
  %109 = vmatmul.bf16.gmra.mxu0 %v75
  %v110 = vpop.f32.mrf.mxu0
  %v111 = vadd.f32 %v59, %v110
  %v112 = vpop.f32.mrf.mxu0
  %v113 = vadd.f32 %v59, %v112
  %114 = vmatmul.bf16.gmra.mxu0 %v78
  %v115 = vpop.f32.mrf.mxu0
  %v116 = vadd.f32 %v59, %v115
  %v117 = vpop.f32.mrf.mxu0
  %v118 = vadd.f32 %v59, %v117
  %119 = vmatmul.bf16.gmra.mxu0 %v81
  %v120 = vpop.f32.mrf.mxu0
  %v121 = vadd.f32 %v59, %v120
  %v122 = vpop.f32.mrf.mxu0
  %v123 = vadd.f32 %v59, %v122
  %124 = vmatmul.bf16.gmra.mxu0 %v84
  %v125 = vpop.f32.mrf.mxu0
  %v126 = vadd.f32 %v59, %v125
  %v127 = vpop.f32.mrf.mxu0
  %v128 = vadd.f32 %v59, %v127
  %129 = vmatmul.bf16.gmra.mxu0 %v87
  %v130 = vpop.f32.mrf.mxu0
  %v131 = vadd.f32 %v59, %v130
  %v132 = vpop.f32.mrf.mxu0
  %v133 = vadd.f32 %v59, %v132
  %134 = vmatmul.bf16.gmra.mxu0 %v90
  %v135 = vpop.f32.mrf.mxu0
  %v136 = vadd.f32 %v59, %v135
  %v137 = vpop.f32.mrf.mxu0
  %v138 = vadd.f32 %v59, %v137
  %139 = vdwg.mxu0
  %v140 = vmax.f32 %v106, 0.0
  %v141 = vmax.f32 %v108, 0.0
  %v142 = vmax.f32 %v111, 0.0
  %v143 = vmax.f32 %v113, 0.0
  %v144 = vmax.f32 %v116, 0.0
  %v145 = vmax.f32 %v118, 0.0
  %v146 = vmax.f32 %v121, 0.0
  %v147 = vmax.f32 %v123, 0.0
  %v148 = vmax.f32 %v126, 0.0
  %v149 = vmax.f32 %v128, 0.0
  %v150 = vmax.f32 %v131, 0.0
  %v151 = vmax.f32 %v133, 0.0
  %v152 = vmax.f32 %v136, 0.0
  %v153 = vmax.f32 %v138, 0.0
  %v154 = vld [vmem:[%s3] sm:$0x1]
  %v156 = vperm.slane %v154, 0
  %v158 = vmul.f32 %v140, %v156
  %v159 = vmul.f32 %v141, %v156
  %v160 = vmul.f32 %v142, %v156
  %v161 = vmul.f32 %v143, %v156
  %v162 = vmul.f32 %v144, %v156
  %v163 = vmul.f32 %v145, %v156
  %v164 = vmul.f32 %v146, %v156
  %v165 = vmul.f32 %v147, %v156
  %v166 = vmul.f32 %v148, %v156
  %v167 = vmul.f32 %v149, %v156
  %v168 = vmul.f32 %v150, %v156
  %v169 = vmul.f32 %v151, %v156
  %v170 = vmul.f32 %v152, %v156
  %v171 = vmul.f32 %v153, %v156
  %v172 = vld [vmem:[%s4] sm:$0x1]
  %v174 = vperm.slane %v172, 0
  %v176 = vadd.f32 %v158, %v174
  %v177 = vadd.f32 %v159, %v174
  %v178 = vadd.f32 %v160, %v174
  %v179 = vadd.f32 %v161, %v174
  %v180 = vadd.f32 %v162, %v174
  %v181 = vadd.f32 %v163, %v174
  %v182 = vadd.f32 %v164, %v174
  %v183 = vadd.f32 %v165, %v174
  %v184 = vadd.f32 %v166, %v174
  %v185 = vadd.f32 %v167, %v174
  %v186 = vadd.f32 %v168, %v174
  %v187 = vadd.f32 %v169, %v174
  %v188 = vadd.f32 %v170, %v174
  %v189 = vadd.f32 %v171, %v174
  %190 = vst [vmem:[#allocation2] sm:$0xff] 0.0
  %191 = vst [vmem:[#allocation2 + $0x78] sm:$0xff] 0.0
  %192 = vst [vmem:[#allocation2 + $0x8] sm:$0xff] %v176
  %193 = vst [vmem:[#allocation2 + $0x10] sm:$0xff] %v177
  %194 = vst [vmem:[#allocation2 + $0x18] sm:$0xff] %v178
  %195 = vst [vmem:[#allocation2 + $0x20] sm:$0xff] %v179
  %196 = vst [vmem:[#allocation2 + $0x28] sm:$0xff] %v180
  %197 = vst [vmem:[#allocation2 + $0x30] sm:$0xff] %v181
  %198 = vst [vmem:[#allocation2 + $0x38] sm:$0xff] %v182
  %199 = vst [vmem:[#allocation2 + $0x40] sm:$0xff] %v183
  %200 = vst [vmem:[#allocation2 + $0x48] sm:$0xff] %v184
  %201 = vst [vmem:[#allocation2 + $0x50] sm:$0xff] %v185
  %202 = vst [vmem:[#allocation2 + $0x58] sm:$0xff] %v186
  %203 = vst [vmem:[#allocation2 + $0x60] sm:$0xff] %v187
  %204 = vst [vmem:[#allocation2 + $0x68] sm:$0xff] %v188
  %205 = vst [vmem:[#allocation2 + $0x70] sm:$0xff] %v189
  %v206 = vld [vmem:[#allocation2] sm:$0xff]
  %v207 = vld [vmem:[#allocation2 + $0x8] sm:$0xff]
  %v208 = vld [vmem:[#allocation2 + $0x10] sm:$0xff]
  %v209 = vld [vmem:[#allocation2 + $0x18] sm:$0xff]
  %v210 = vld [vmem:[#allocation2 + $0x20] sm:$0xff]
  %v211 = vld [vmem:[#allocation2 + $0x28] sm:$0xff]
  %v212 = vld [vmem:[#allocation2 + $0x30] sm:$0xff]
  %v213 = vld [vmem:[#allocation2 + $0x38] sm:$0xff]
  %v214 = vld [vmem:[#allocation2 + $0x40] sm:$0xff]
  %v215 = vld [vmem:[#allocation2 + $0x48] sm:$0xff]
  %v216 = vld [vmem:[#allocation2 + $0x50] sm:$0xff]
  %v217 = vld [vmem:[#allocation2 + $0x58] sm:$0xff]
  %v218 = vpack.c.bf16 %v207, %v206
  %v219 = vpack.c.bf16 %v209, %v208
  %v220 = vpack.c.bf16 %v211, %v210
  %v221 = vpack.c.bf16 %v213, %v212
  %v222 = vpack.c.bf16 %v215, %v214
  %v223 = vpack.c.bf16 %v217, %v216
  %v224 = vld [vmem:[%s5] sm:$0xff]
  %v225 = vld [vmem:[%s5 + $0x8] sm:$0xff]
  %v226 = vld [vmem:[%s5 + $0x10] sm:$0xff]
  %v227 = vld [vmem:[%s5 + $0x18] sm:$0xff]
  %v228 = vld [vmem:[%s5 + $0x20] sm:$0xff]
  %v229 = vld [vmem:[%s5 + $0x28] sm:$0xff]
  %v230 = vld [vmem:[%s5 + $0x30] sm:$0xff]
  %v231 = vld [vmem:[%s5 + $0x38] sm:$0xff]
  %v232 = vld [vmem:[%s5 + $0x40] sm:$0xff]
  %v233 = vld [vmem:[%s5 + $0x48] sm:$0xff]
  %v234 = vld [vmem:[%s5 + $0x50] sm:$0xff]
  %v235 = vld [vmem:[%s5 + $0x58] sm:$0xff]
  %v236 = vld [vmem:[%s5 + $0x60] sm:$0xff]
  %v237 = vld [vmem:[%s5 + $0x68] sm:$0xff]
  %v238 = vld [vmem:[%s5 + $0x70] sm:$0xff]
  %v239 = vld [vmem:[%s5 + $0x78] sm:$0xff]
  %v240 = vld [vmem:[#allocation2 + $0x60] sm:$0xff]
  %v241 = vpack.c.bf16 %v208, %v207
  %v242 = vpack.c.bf16 %v210, %v209
  %v243 = vpack.c.bf16 %v212, %v211
  %v244 = vpack.c.bf16 %v214, %v213
  %v245 = vpack.c.bf16 %v216, %v215
  %v246 = vpack.c.bf16 %v240, %v217
  %s247 = scalar_lea.vmem %s5, 128
  %v248 = vld [vmem:[%s247] sm:$0xff]
  %v249 = vld [vmem:[%s247 + $0x8] sm:$0xff]
  %v250 = vld [vmem:[%s247 + $0x10] sm:$0xff]
  %v251 = vld [vmem:[%s247 + $0x18] sm:$0xff]
  %v252 = vld [vmem:[%s247 + $0x20] sm:$0xff]
  %v253 = vld [vmem:[%s247 + $0x28] sm:$0xff]
  %v254 = vld [vmem:[%s247 + $0x30] sm:$0xff]
  %v255 = vld [vmem:[%s247 + $0x38] sm:$0xff]
  %v256 = vld [vmem:[%s247 + $0x40] sm:$0xff]
  %v257 = vld [vmem:[%s247 + $0x48] sm:$0xff]
  %v258 = vld [vmem:[%s247 + $0x50] sm:$0xff]
  %v259 = vld [vmem:[%s247 + $0x58] sm:$0xff]
  %v260 = vld [vmem:[%s247 + $0x60] sm:$0xff]
  %v261 = vld [vmem:[%s247 + $0x68] sm:$0xff]
  %v262 = vld [vmem:[%s247 + $0x70] sm:$0xff]
  %v263 = vld [vmem:[%s247 + $0x78] sm:$0xff]
  %v280 = vunpack.c.l.b16 %v248
  %v281 = vunpack.c.h.b16 %v248
  %v282 = vunpack.c.l.b16 %v249
  %v283 = vunpack.c.h.b16 %v249
  %v284 = vunpack.c.l.b16 %v250
  %v285 = vunpack.c.h.b16 %v250
  %v286 = vunpack.c.l.b16 %v251
  %v287 = vunpack.c.h.b16 %v251
  %v288 = vunpack.c.l.b16 %v252
  %v289 = vunpack.c.h.b16 %v252
  %v290 = vunpack.c.l.b16 %v253
  %v291 = vunpack.c.h.b16 %v253
  %v292 = vunpack.c.l.b16 %v254
  %v293 = vunpack.c.h.b16 %v254
  %v294 = vunpack.c.l.b16 %v255
  %v295 = vunpack.c.h.b16 %v255
  %v296 = vunpack.c.l.b16 %v256
  %v297 = vunpack.c.h.b16 %v256
  %v298 = vunpack.c.l.b16 %v257
  %v299 = vunpack.c.h.b16 %v257
  %v300 = vunpack.c.l.b16 %v258
  %v301 = vunpack.c.h.b16 %v258
  %v302 = vunpack.c.l.b16 %v259
  %v303 = vunpack.c.h.b16 %v259
  %v304 = vunpack.c.l.b16 %v260
  %v305 = vunpack.c.h.b16 %v260
  %v306 = vunpack.c.l.b16 %v261
  %v307 = vunpack.c.h.b16 %v261
  %v308 = vunpack.c.l.b16 %v262
  %v309 = vunpack.c.h.b16 %v262
  %v310 = vunpack.c.l.b16 %v263
  %v311 = vunpack.c.h.b16 %v263
  %v312 = vpack.c.b16 %v282, %v280
  %v313 = vpack.c.b16 %v283, %v281
  %v314 = vpack.c.b16 %v286, %v284
  %v315 = vpack.c.b16 %v287, %v285
  %v316 = vpack.c.b16 %v290, %v288
  %v317 = vpack.c.b16 %v291, %v289
  %v318 = vpack.c.b16 %v294, %v292
  %v319 = vpack.c.b16 %v295, %v293
  %v320 = vpack.c.b16 %v298, %v296
  %v321 = vpack.c.b16 %v299, %v297
  %v322 = vpack.c.b16 %v302, %v300
  %v323 = vpack.c.b16 %v303, %v301
  %v324 = vpack.c.b16 %v306, %v304
  %v325 = vpack.c.b16 %v307, %v305
  %v326 = vpack.c.b16 %v310, %v308
  %v327 = vpack.c.b16 %v311, %v309
  %344 = vmatpush.bf16.msra.mxu0 %v326
  %345 = vmatpush.bf16.msra.mxu0 %v324
  %346 = vmatpush.bf16.msra.mxu0 %v322
  %347 = vmatpush.bf16.msra.mxu0 %v320
  %348 = vmatpush.bf16.msra.mxu0 %v318
  %349 = vmatpush.bf16.msra.mxu0 %v316
  %350 = vmatpush.bf16.msra.mxu0 %v314
  %351 = vmatpush.bf16.msra.mxu0 %v312
  %352 = vmatmul.bf16.gmra.mxu0 %v241
  %v353 = vpop.f32.mrf.mxu0
  %v354 = vadd.f32 0.0, %v353
  %v355 = vpop.f32.mrf.mxu0
  %v356 = vadd.f32 0.0, %v355
  %357 = vmatmul.bf16.gmra.mxu0 %v242
  %v358 = vpop.f32.mrf.mxu0
  %v359 = vadd.f32 0.0, %v358
  %v360 = vpop.f32.mrf.mxu0
  %v361 = vadd.f32 0.0, %v360
  %362 = vmatmul.bf16.gmra.mxu0 %v243
  %v363 = vpop.f32.mrf.mxu0
  %v364 = vadd.f32 0.0, %v363
  %v365 = vpop.f32.mrf.mxu0
  %v366 = vadd.f32 0.0, %v365
  %367 = vmatmul.bf16.gmra.mxu0 %v244
  %v368 = vpop.f32.mrf.mxu0
  %v369 = vadd.f32 0.0, %v368
  %v370 = vpop.f32.mrf.mxu0
  %v371 = vadd.f32 0.0, %v370
  %372 = vmatmul.bf16.gmra.mxu0 %v245
  %v373 = vpop.f32.mrf.mxu0
  %v374 = vadd.f32 0.0, %v373
  %v375 = vpop.f32.mrf.mxu0
  %v376 = vadd.f32 0.0, %v375
  %377 = vmatmul.bf16.gmra.mxu0 %v246
  %v378 = vpop.f32.mrf.mxu0
  %v379 = vadd.f32 0.0, %v378
  %v380 = vpop.f32.mrf.mxu0
  %v381 = vadd.f32 0.0, %v380
  %382 = vdwg.mxu0
  %383 = vmatpush.bf16.msra.mxu0 %v327
  %384 = vmatpush.bf16.msra.mxu0 %v325
  %385 = vmatpush.bf16.msra.mxu0 %v323
  %386 = vmatpush.bf16.msra.mxu0 %v321
  %387 = vmatpush.bf16.msra.mxu0 %v319
  %388 = vmatpush.bf16.msra.mxu0 %v317
  %389 = vmatpush.bf16.msra.mxu0 %v315
  %390 = vmatpush.bf16.msra.mxu0 %v313
  %391 = vmatmul.bf16.gmra.mxu0 %v241
  %v392 = vpop.f32.mrf.mxu0
  %v393 = vadd.f32 0.0, %v392
  %v394 = vpop.f32.mrf.mxu0
  %v395 = vadd.f32 0.0, %v394
  %396 = vmatmul.bf16.gmra.mxu0 %v242
  %v397 = vpop.f32.mrf.mxu0
  %v398 = vadd.f32 0.0, %v397
  %v399 = vpop.f32.mrf.mxu0
  %v400 = vadd.f32 0.0, %v399
  %401 = vmatmul.bf16.gmra.mxu0 %v243
  %v402 = vpop.f32.mrf.mxu0
  %v403 = vadd.f32 0.0, %v402
  %v404 = vpop.f32.mrf.mxu0
  %v405 = vadd.f32 0.0, %v404
  %406 = vmatmul.bf16.gmra.mxu0 %v244
  %v407 = vpop.f32.mrf.mxu0
  %v408 = vadd.f32 0.0, %v407
  %v409 = vpop.f32.mrf.mxu0
  %v410 = vadd.f32 0.0, %v409
  %411 = vmatmul.bf16.gmra.mxu0 %v245
  %v412 = vpop.f32.mrf.mxu0
  %v413 = vadd.f32 0.0, %v412
  %v414 = vpop.f32.mrf.mxu0
  %v415 = vadd.f32 0.0, %v414
  %416 = vmatmul.bf16.gmra.mxu0 %v246
  %v417 = vpop.f32.mrf.mxu0
  %v418 = vadd.f32 0.0, %v417
  %v419 = vpop.f32.mrf.mxu0
  %v420 = vadd.f32 0.0, %v419
  %421 = vdwg.mxu0
  %v438 = vunpack.c.l.b16 %v224
  %v439 = vunpack.c.h.b16 %v224
  %v440 = vunpack.c.l.b16 %v225
  %v441 = vunpack.c.h.b16 %v225
  %v442 = vunpack.c.l.b16 %v226
  %v443 = vunpack.c.h.b16 %v226
  %v444 = vunpack.c.l.b16 %v227
  %v445 = vunpack.c.h.b16 %v227
  %v446 = vunpack.c.l.b16 %v228
  %v447 = vunpack.c.h.b16 %v228
  %v448 = vunpack.c.l.b16 %v229
  %v449 = vunpack.c.h.b16 %v229
  %v450 = vunpack.c.l.b16 %v230
  %v451 = vunpack.c.h.b16 %v230
  %v452 = vunpack.c.l.b16 %v231
  %v453 = vunpack.c.h.b16 %v231
  %v454 = vunpack.c.l.b16 %v232
  %v455 = vunpack.c.h.b16 %v232
  %v456 = vunpack.c.l.b16 %v233
  %v457 = vunpack.c.h.b16 %v233
  %v458 = vunpack.c.l.b16 %v234
  %v459 = vunpack.c.h.b16 %v234
  %v460 = vunpack.c.l.b16 %v235
  %v461 = vunpack.c.h.b16 %v235
  %v462 = vunpack.c.l.b16 %v236
  %v463 = vunpack.c.h.b16 %v236
  %v464 = vunpack.c.l.b16 %v237
  %v465 = vunpack.c.h.b16 %v237
  %v466 = vunpack.c.l.b16 %v238
  %v467 = vunpack.c.h.b16 %v238
  %v468 = vunpack.c.l.b16 %v239
  %v469 = vunpack.c.h.b16 %v239
  %v470 = vpack.c.b16 %v440, %v438
  %v471 = vpack.c.b16 %v441, %v439
  %v472 = vpack.c.b16 %v444, %v442
  %v473 = vpack.c.b16 %v445, %v443
  %v474 = vpack.c.b16 %v448, %v446
  %v475 = vpack.c.b16 %v449, %v447
  %v476 = vpack.c.b16 %v452, %v450
  %v477 = vpack.c.b16 %v453, %v451
  %v478 = vpack.c.b16 %v456, %v454
  %v479 = vpack.c.b16 %v457, %v455
  %v480 = vpack.c.b16 %v460, %v458
  %v481 = vpack.c.b16 %v461, %v459
  %v482 = vpack.c.b16 %v464, %v462
  %v483 = vpack.c.b16 %v465, %v463
  %v484 = vpack.c.b16 %v468, %v466
  %v485 = vpack.c.b16 %v469, %v467
  %502 = vmatpush.bf16.msra.mxu0 %v484
  %503 = vmatpush.bf16.msra.mxu0 %v482
  %504 = vmatpush.bf16.msra.mxu0 %v480
  %505 = vmatpush.bf16.msra.mxu0 %v478
  %506 = vmatpush.bf16.msra.mxu0 %v476
  %507 = vmatpush.bf16.msra.mxu0 %v474
  %508 = vmatpush.bf16.msra.mxu0 %v472
  %509 = vmatpush.bf16.msra.mxu0 %v470
  %510 = vmatmul.bf16.gmra.mxu0 %v218
  %v511 = vpop.f32.mrf.mxu0
  %v512 = vadd.f32 %v354, %v511
  %v513 = vpop.f32.mrf.mxu0
  %v514 = vadd.f32 %v356, %v513
  %515 = vmatmul.bf16.gmra.mxu0 %v219
  %v516 = vpop.f32.mrf.mxu0
  %v517 = vadd.f32 %v359, %v516
  %v518 = vpop.f32.mrf.mxu0
  %v519 = vadd.f32 %v361, %v518
  %520 = vmatmul.bf16.gmra.mxu0 %v220
  %v521 = vpop.f32.mrf.mxu0
  %v522 = vadd.f32 %v364, %v521
  %v523 = vpop.f32.mrf.mxu0
  %v524 = vadd.f32 %v366, %v523
  %525 = vmatmul.bf16.gmra.mxu0 %v221
  %v526 = vpop.f32.mrf.mxu0
  %v527 = vadd.f32 %v369, %v526
  %v528 = vpop.f32.mrf.mxu0
  %v529 = vadd.f32 %v371, %v528
  %530 = vmatmul.bf16.gmra.mxu0 %v222
  %v531 = vpop.f32.mrf.mxu0
  %v532 = vadd.f32 %v374, %v531
  %v533 = vpop.f32.mrf.mxu0
  %v534 = vadd.f32 %v376, %v533
  %535 = vmatmul.bf16.gmra.mxu0 %v223
  %v536 = vpop.f32.mrf.mxu0
  %v537 = vadd.f32 %v379, %v536
  %v538 = vpop.f32.mrf.mxu0
  %v539 = vadd.f32 %v381, %v538
  %540 = vdwg.mxu0
  %541 = vmatpush.bf16.msra.mxu0 %v485
  %542 = vmatpush.bf16.msra.mxu0 %v483
  %543 = vmatpush.bf16.msra.mxu0 %v481
  %544 = vmatpush.bf16.msra.mxu0 %v479
  %545 = vmatpush.bf16.msra.mxu0 %v477
  %546 = vmatpush.bf16.msra.mxu0 %v475
  %547 = vmatpush.bf16.msra.mxu0 %v473
  %548 = vmatpush.bf16.msra.mxu0 %v471
  %549 = vmatmul.bf16.gmra.mxu0 %v218
  %v550 = vpop.f32.mrf.mxu0
  %v551 = vadd.f32 %v393, %v550
  %v552 = vpop.f32.mrf.mxu0
  %v553 = vadd.f32 %v395, %v552
  %554 = vmatmul.bf16.gmra.mxu0 %v219
  %v555 = vpop.f32.mrf.mxu0
  %v556 = vadd.f32 %v398, %v555
  %v557 = vpop.f32.mrf.mxu0
  %v558 = vadd.f32 %v400, %v557
  %559 = vmatmul.bf16.gmra.mxu0 %v220
  %v560 = vpop.f32.mrf.mxu0
  %v561 = vadd.f32 %v403, %v560
  %v562 = vpop.f32.mrf.mxu0
  %v563 = vadd.f32 %v405, %v562
  %564 = vmatmul.bf16.gmra.mxu0 %v221
  %v565 = vpop.f32.mrf.mxu0
  %v566 = vadd.f32 %v408, %v565
  %v567 = vpop.f32.mrf.mxu0
  %v568 = vadd.f32 %v410, %v567
  %569 = vmatmul.bf16.gmra.mxu0 %v222
  %v570 = vpop.f32.mrf.mxu0
  %v571 = vadd.f32 %v413, %v570
  %v572 = vpop.f32.mrf.mxu0
  %v573 = vadd.f32 %v415, %v572
  %574 = vmatmul.bf16.gmra.mxu0 %v223
  %v575 = vpop.f32.mrf.mxu0
  %v576 = vadd.f32 %v418, %v575
  %v577 = vpop.f32.mrf.mxu0
  %v578 = vadd.f32 %v420, %v577
  %579 = vdwg.mxu0
  %v580 = vld [vmem:[#allocation2 + $0x10] sm:$0xff]
  %v581 = vld [vmem:[#allocation2 + $0x18] sm:$0xff]
  %v582 = vld [vmem:[#allocation2 + $0x20] sm:$0xff]
  %v583 = vld [vmem:[#allocation2 + $0x28] sm:$0xff]
  %v584 = vld [vmem:[#allocation2 + $0x30] sm:$0xff]
  %v585 = vld [vmem:[#allocation2 + $0x38] sm:$0xff]
  %v586 = vld [vmem:[#allocation2 + $0x40] sm:$0xff]
  %v587 = vld [vmem:[#allocation2 + $0x48] sm:$0xff]
  %v588 = vld [vmem:[#allocation2 + $0x50] sm:$0xff]
  %v589 = vld [vmem:[#allocation2 + $0x58] sm:$0xff]
  %v590 = vld [vmem:[#allocation2 + $0x60] sm:$0xff]
  %v591 = vld [vmem:[#allocation2 + $0x68] sm:$0xff]
  %v592 = vpack.c.bf16 %v581, %v580
  %v593 = vpack.c.bf16 %v583, %v582
  %v594 = vpack.c.bf16 %v585, %v584
  %v595 = vpack.c.bf16 %v587, %v586
  %v596 = vpack.c.bf16 %v589, %v588
  %v597 = vpack.c.bf16 %v591, %v590
  %s598 = scalar_lea.vmem %s5, 256
  %v599 = vld [vmem:[%s598] sm:$0xff]
  %v600 = vld [vmem:[%s598 + $0x8] sm:$0xff]
  %v601 = vld [vmem:[%s598 + $0x10] sm:$0xff]
  %v602 = vld [vmem:[%s598 + $0x18] sm:$0xff]
  %v603 = vld [vmem:[%s598 + $0x20] sm:$0xff]
  %v604 = vld [vmem:[%s598 + $0x28] sm:$0xff]
  %v605 = vld [vmem:[%s598 + $0x30] sm:$0xff]
  %v606 = vld [vmem:[%s598 + $0x38] sm:$0xff]
  %v607 = vld [vmem:[%s598 + $0x40] sm:$0xff]
  %v608 = vld [vmem:[%s598 + $0x48] sm:$0xff]
  %v609 = vld [vmem:[%s598 + $0x50] sm:$0xff]
  %v610 = vld [vmem:[%s598 + $0x58] sm:$0xff]
  %v611 = vld [vmem:[%s598 + $0x60] sm:$0xff]
  %v612 = vld [vmem:[%s598 + $0x68] sm:$0xff]
  %v613 = vld [vmem:[%s598 + $0x70] sm:$0xff]
  %v614 = vld [vmem:[%s598 + $0x78] sm:$0xff]
  %v631 = vunpack.c.l.b16 %v599
  %v632 = vunpack.c.h.b16 %v599
  %v633 = vunpack.c.l.b16 %v600
  %v634 = vunpack.c.h.b16 %v600
  %v635 = vunpack.c.l.b16 %v601
  %v636 = vunpack.c.h.b16 %v601
  %v637 = vunpack.c.l.b16 %v602
  %v638 = vunpack.c.h.b16 %v602
  %v639 = vunpack.c.l.b16 %v603
  %v640 = vunpack.c.h.b16 %v603
  %v641 = vunpack.c.l.b16 %v604
  %v642 = vunpack.c.h.b16 %v604
  %v643 = vunpack.c.l.b16 %v605
  %v644 = vunpack.c.h.b16 %v605
  %v645 = vunpack.c.l.b16 %v606
  %v646 = vunpack.c.h.b16 %v606
  %v647 = vunpack.c.l.b16 %v607
  %v648 = vunpack.c.h.b16 %v607
  %v649 = vunpack.c.l.b16 %v608
  %v650 = vunpack.c.h.b16 %v608
  %v651 = vunpack.c.l.b16 %v609
  %v652 = vunpack.c.h.b16 %v609
  %v653 = vunpack.c.l.b16 %v610
  %v654 = vunpack.c.h.b16 %v610
  %v655 = vunpack.c.l.b16 %v611
  %v656 = vunpack.c.h.b16 %v611
  %v657 = vunpack.c.l.b16 %v612
  %v658 = vunpack.c.h.b16 %v612
  %v659 = vunpack.c.l.b16 %v613
  %v660 = vunpack.c.h.b16 %v613
  %v661 = vunpack.c.l.b16 %v614
  %v662 = vunpack.c.h.b16 %v614
  %v663 = vpack.c.b16 %v633, %v631
  %v664 = vpack.c.b16 %v634, %v632
  %v665 = vpack.c.b16 %v637, %v635
  %v666 = vpack.c.b16 %v638, %v636
  %v667 = vpack.c.b16 %v641, %v639
  %v668 = vpack.c.b16 %v642, %v640
  %v669 = vpack.c.b16 %v645, %v643
  %v670 = vpack.c.b16 %v646, %v644
  %v671 = vpack.c.b16 %v649, %v647
  %v672 = vpack.c.b16 %v650, %v648
  %v673 = vpack.c.b16 %v653, %v651
  %v674 = vpack.c.b16 %v654, %v652
  %v675 = vpack.c.b16 %v657, %v655
  %v676 = vpack.c.b16 %v658, %v656
  %v677 = vpack.c.b16 %v661, %v659
  %v678 = vpack.c.b16 %v662, %v660
  %695 = vmatpush.bf16.msra.mxu0 %v677
  %696 = vmatpush.bf16.msra.mxu0 %v675
  %697 = vmatpush.bf16.msra.mxu0 %v673
  %698 = vmatpush.bf16.msra.mxu0 %v671
  %699 = vmatpush.bf16.msra.mxu0 %v669
  %700 = vmatpush.bf16.msra.mxu0 %v667
  %701 = vmatpush.bf16.msra.mxu0 %v665
  %702 = vmatpush.bf16.msra.mxu0 %v663
  %703 = vmatmul.bf16.gmra.mxu0 %v592
  %v704 = vpop.f32.mrf.mxu0
  %v705 = vadd.f32 0.0, %v704
  %v706 = vpop.f32.mrf.mxu0
  %v707 = vadd.f32 0.0, %v706
  %708 = vmatmul.bf16.gmra.mxu0 %v593
  %v709 = vpop.f32.mrf.mxu0
  %v710 = vadd.f32 0.0, %v709
  %v711 = vpop.f32.mrf.mxu0
  %v712 = vadd.f32 0.0, %v711
  %713 = vmatmul.bf16.gmra.mxu0 %v594
  %v714 = vpop.f32.mrf.mxu0
  %v715 = vadd.f32 0.0, %v714
  %v716 = vpop.f32.mrf.mxu0
  %v717 = vadd.f32 0.0, %v716
  %718 = vmatmul.bf16.gmra.mxu0 %v595
  %v719 = vpop.f32.mrf.mxu0
  %v720 = vadd.f32 0.0, %v719
  %v721 = vpop.f32.mrf.mxu0
  %v722 = vadd.f32 0.0, %v721
  %723 = vmatmul.bf16.gmra.mxu0 %v596
  %v724 = vpop.f32.mrf.mxu0
  %v725 = vadd.f32 0.0, %v724
  %v726 = vpop.f32.mrf.mxu0
  %v727 = vadd.f32 0.0, %v726
  %728 = vmatmul.bf16.gmra.mxu0 %v597
  %v729 = vpop.f32.mrf.mxu0
  %v730 = vadd.f32 0.0, %v729
  %v731 = vpop.f32.mrf.mxu0
  %v732 = vadd.f32 0.0, %v731
  %733 = vdwg.mxu0
  %734 = vmatpush.bf16.msra.mxu0 %v678
  %735 = vmatpush.bf16.msra.mxu0 %v676
  %736 = vmatpush.bf16.msra.mxu0 %v674
  %737 = vmatpush.bf16.msra.mxu0 %v672
  %738 = vmatpush.bf16.msra.mxu0 %v670
  %739 = vmatpush.bf16.msra.mxu0 %v668
  %740 = vmatpush.bf16.msra.mxu0 %v666
  %741 = vmatpush.bf16.msra.mxu0 %v664
  %742 = vmatmul.bf16.gmra.mxu0 %v592
  %v743 = vpop.f32.mrf.mxu0
  %v744 = vadd.f32 0.0, %v743
  %v745 = vpop.f32.mrf.mxu0
  %v746 = vadd.f32 0.0, %v745
  %747 = vmatmul.bf16.gmra.mxu0 %v593
  %v748 = vpop.f32.mrf.mxu0
  %v749 = vadd.f32 0.0, %v748
  %v750 = vpop.f32.mrf.mxu0
  %v751 = vadd.f32 0.0, %v750
  %752 = vmatmul.bf16.gmra.mxu0 %v594
  %v753 = vpop.f32.mrf.mxu0
  %v754 = vadd.f32 0.0, %v753
  %v755 = vpop.f32.mrf.mxu0
  %v756 = vadd.f32 0.0, %v755
  %757 = vmatmul.bf16.gmra.mxu0 %v595
  %v758 = vpop.f32.mrf.mxu0
  %v759 = vadd.f32 0.0, %v758
  %v760 = vpop.f32.mrf.mxu0
  %v761 = vadd.f32 0.0, %v760
  %762 = vmatmul.bf16.gmra.mxu0 %v596
  %v763 = vpop.f32.mrf.mxu0
  %v764 = vadd.f32 0.0, %v763
  %v765 = vpop.f32.mrf.mxu0
  %v766 = vadd.f32 0.0, %v765
  %767 = vmatmul.bf16.gmra.mxu0 %v597
  %v768 = vpop.f32.mrf.mxu0
  %v769 = vadd.f32 0.0, %v768
  %v770 = vpop.f32.mrf.mxu0
  %v771 = vadd.f32 0.0, %v770
  %772 = vdwg.mxu0
  %v773 = vadd.f32 %v512, %v705
  %v774 = vadd.f32 %v551, %v744
  %v775 = vadd.f32 %v514, %v707
  %v776 = vadd.f32 %v553, %v746
  %v777 = vadd.f32 %v517, %v710
  %v778 = vadd.f32 %v556, %v749
  %v779 = vadd.f32 %v519, %v712
  %v780 = vadd.f32 %v558, %v751
  %v781 = vadd.f32 %v522, %v715
  %v782 = vadd.f32 %v561, %v754
  %v783 = vadd.f32 %v524, %v717
  %v784 = vadd.f32 %v563, %v756
  %v785 = vadd.f32 %v527, %v720
  %v786 = vadd.f32 %v566, %v759
  %v787 = vadd.f32 %v529, %v722
  %v788 = vadd.f32 %v568, %v761
  %v789 = vadd.f32 %v532, %v725
  %v790 = vadd.f32 %v571, %v764
  %v791 = vadd.f32 %v534, %v727
  %v792 = vadd.f32 %v573, %v766
  %v793 = vadd.f32 %v537, %v730
  %v794 = vadd.f32 %v576, %v769
  %v795 = vadd.f32 %v539, %v732
  %v796 = vadd.f32 %v578, %v771
  %v797 = vld [vmem:[#allocation2 + $0x18] sm:$0xff]
  %v798 = vld [vmem:[#allocation2 + $0x20] sm:$0xff]
  %v799 = vld [vmem:[#allocation2 + $0x28] sm:$0xff]
  %v800 = vld [vmem:[#allocation2 + $0x30] sm:$0xff]
  %v801 = vld [vmem:[#allocation2 + $0x38] sm:$0xff]
  %v802 = vld [vmem:[#allocation2 + $0x40] sm:$0xff]
  %v803 = vld [vmem:[#allocation2 + $0x48] sm:$0xff]
  %v804 = vld [vmem:[#allocation2 + $0x50] sm:$0xff]
  %v805 = vld [vmem:[#allocation2 + $0x58] sm:$0xff]
  %v806 = vld [vmem:[#allocation2 + $0x60] sm:$0xff]
  %v807 = vld [vmem:[#allocation2 + $0x68] sm:$0xff]
  %v808 = vld [vmem:[#allocation2 + $0x70] sm:$0xff]
  %v809 = vpack.c.bf16 %v798, %v797
  %v810 = vpack.c.bf16 %v800, %v799
  %v811 = vpack.c.bf16 %v802, %v801
  %v812 = vpack.c.bf16 %v804, %v803
  %v813 = vpack.c.bf16 %v806, %v805
  %v814 = vpack.c.bf16 %v808, %v807
  %s815 = scalar_lea.vmem %s5, 384
  %v816 = vld [vmem:[%s815] sm:$0xff]
  %v817 = vld [vmem:[%s815 + $0x8] sm:$0xff]
  %v818 = vld [vmem:[%s815 + $0x10] sm:$0xff]
  %v819 = vld [vmem:[%s815 + $0x18] sm:$0xff]
  %v820 = vld [vmem:[%s815 + $0x20] sm:$0xff]
  %v821 = vld [vmem:[%s815 + $0x28] sm:$0xff]
  %v822 = vld [vmem:[%s815 + $0x30] sm:$0xff]
  %v823 = vld [vmem:[%s815 + $0x38] sm:$0xff]
  %v824 = vld [vmem:[%s815 + $0x40] sm:$0xff]
  %v825 = vld [vmem:[%s815 + $0x48] sm:$0xff]
  %v826 = vld [vmem:[%s815 + $0x50] sm:$0xff]
  %v827 = vld [vmem:[%s815 + $0x58] sm:$0xff]
  %v828 = vld [vmem:[%s815 + $0x60] sm:$0xff]
  %v829 = vld [vmem:[%s815 + $0x68] sm:$0xff]
  %v830 = vld [vmem:[%s815 + $0x70] sm:$0xff]
  %v831 = vld [vmem:[%s815 + $0x78] sm:$0xff]
  %v848 = vunpack.c.l.b16 %v816
  %v849 = vunpack.c.h.b16 %v816
  %v850 = vunpack.c.l.b16 %v817
  %v851 = vunpack.c.h.b16 %v817
  %v852 = vunpack.c.l.b16 %v818
  %v853 = vunpack.c.h.b16 %v818
  %v854 = vunpack.c.l.b16 %v819
  %v855 = vunpack.c.h.b16 %v819
  %v856 = vunpack.c.l.b16 %v820
  %v857 = vunpack.c.h.b16 %v820
  %v858 = vunpack.c.l.b16 %v821
  %v859 = vunpack.c.h.b16 %v821
  %v860 = vunpack.c.l.b16 %v822
  %v861 = vunpack.c.h.b16 %v822
  %v862 = vunpack.c.l.b16 %v823
  %v863 = vunpack.c.h.b16 %v823
  %v864 = vunpack.c.l.b16 %v824
  %v865 = vunpack.c.h.b16 %v824
  %v866 = vunpack.c.l.b16 %v825
  %v867 = vunpack.c.h.b16 %v825
  %v868 = vunpack.c.l.b16 %v826
  %v869 = vunpack.c.h.b16 %v826
  %v870 = vunpack.c.l.b16 %v827
  %v871 = vunpack.c.h.b16 %v827
  %v872 = vunpack.c.l.b16 %v828
  %v873 = vunpack.c.h.b16 %v828
  %v874 = vunpack.c.l.b16 %v829
  %v875 = vunpack.c.h.b16 %v829
  %v876 = vunpack.c.l.b16 %v830
  %v877 = vunpack.c.h.b16 %v830
  %v878 = vunpack.c.l.b16 %v831
  %v879 = vunpack.c.h.b16 %v831
  %v880 = vpack.c.b16 %v850, %v848
  %v881 = vpack.c.b16 %v851, %v849
  %v882 = vpack.c.b16 %v854, %v852
  %v883 = vpack.c.b16 %v855, %v853
  %v884 = vpack.c.b16 %v858, %v856
  %v885 = vpack.c.b16 %v859, %v857
  %v886 = vpack.c.b16 %v862, %v860
  %v887 = vpack.c.b16 %v863, %v861
  %v888 = vpack.c.b16 %v866, %v864
  %v889 = vpack.c.b16 %v867, %v865
  %v890 = vpack.c.b16 %v870, %v868
  %v891 = vpack.c.b16 %v871, %v869
  %v892 = vpack.c.b16 %v874, %v872
  %v893 = vpack.c.b16 %v875, %v873
  %v894 = vpack.c.b16 %v878, %v876
  %v895 = vpack.c.b16 %v879, %v877
  %912 = vmatpush.bf16.msra.mxu0 %v894
  %913 = vmatpush.bf16.msra.mxu0 %v892
  %914 = vmatpush.bf16.msra.mxu0 %v890
  %915 = vmatpush.bf16.msra.mxu0 %v888
  %916 = vmatpush.bf16.msra.mxu0 %v886
  %917 = vmatpush.bf16.msra.mxu0 %v884
  %918 = vmatpush.bf16.msra.mxu0 %v882
  %919 = vmatpush.bf16.msra.mxu0 %v880
  %920 = vmatmul.bf16.gmra.mxu0 %v809
  %v921 = vpop.f32.mrf.mxu0
  %v922 = vadd.f32 0.0, %v921
  %v923 = vpop.f32.mrf.mxu0
  %v924 = vadd.f32 0.0, %v923
  %925 = vmatmul.bf16.gmra.mxu0 %v810
  %v926 = vpop.f32.mrf.mxu0
  %v927 = vadd.f32 0.0, %v926
  %v928 = vpop.f32.mrf.mxu0
  %v929 = vadd.f32 0.0, %v928
  %930 = vmatmul.bf16.gmra.mxu0 %v811
  %v931 = vpop.f32.mrf.mxu0
  %v932 = vadd.f32 0.0, %v931
  %v933 = vpop.f32.mrf.mxu0
  %v934 = vadd.f32 0.0, %v933
  %935 = vmatmul.bf16.gmra.mxu0 %v812
  %v936 = vpop.f32.mrf.mxu0
  %v937 = vadd.f32 0.0, %v936
  %v938 = vpop.f32.mrf.mxu0
  %v939 = vadd.f32 0.0, %v938
  %940 = vmatmul.bf16.gmra.mxu0 %v813
  %v941 = vpop.f32.mrf.mxu0
  %v942 = vadd.f32 0.0, %v941
  %v943 = vpop.f32.mrf.mxu0
  %v944 = vadd.f32 0.0, %v943
  %945 = vmatmul.bf16.gmra.mxu0 %v814
  %v946 = vpop.f32.mrf.mxu0
  %v947 = vadd.f32 0.0, %v946
  %v948 = vpop.f32.mrf.mxu0
  %v949 = vadd.f32 0.0, %v948
  %950 = vdwg.mxu0
  %951 = vmatpush.bf16.msra.mxu0 %v895
  %952 = vmatpush.bf16.msra.mxu0 %v893
  %953 = vmatpush.bf16.msra.mxu0 %v891
  %954 = vmatpush.bf16.msra.mxu0 %v889
  %955 = vmatpush.bf16.msra.mxu0 %v887
  %956 = vmatpush.bf16.msra.mxu0 %v885
  %957 = vmatpush.bf16.msra.mxu0 %v883
  %958 = vmatpush.bf16.msra.mxu0 %v881
  %959 = vmatmul.bf16.gmra.mxu0 %v809
  %v960 = vpop.f32.mrf.mxu0
  %v961 = vadd.f32 0.0, %v960
  %v962 = vpop.f32.mrf.mxu0
  %v963 = vadd.f32 0.0, %v962
  %964 = vmatmul.bf16.gmra.mxu0 %v810
  %v965 = vpop.f32.mrf.mxu0
  %v966 = vadd.f32 0.0, %v965
  %v967 = vpop.f32.mrf.mxu0
  %v968 = vadd.f32 0.0, %v967
  %969 = vmatmul.bf16.gmra.mxu0 %v811
  %v970 = vpop.f32.mrf.mxu0
  %v971 = vadd.f32 0.0, %v970
  %v972 = vpop.f32.mrf.mxu0
  %v973 = vadd.f32 0.0, %v972
  %974 = vmatmul.bf16.gmra.mxu0 %v812
  %v975 = vpop.f32.mrf.mxu0
  %v976 = vadd.f32 0.0, %v975
  %v977 = vpop.f32.mrf.mxu0
  %v978 = vadd.f32 0.0, %v977
  %979 = vmatmul.bf16.gmra.mxu0 %v813
  %v980 = vpop.f32.mrf.mxu0
  %v981 = vadd.f32 0.0, %v980
  %v982 = vpop.f32.mrf.mxu0
  %v983 = vadd.f32 0.0, %v982
  %984 = vmatmul.bf16.gmra.mxu0 %v814
  %v985 = vpop.f32.mrf.mxu0
  %v986 = vadd.f32 0.0, %v985
  %v987 = vpop.f32.mrf.mxu0
  %v988 = vadd.f32 0.0, %v987
  %989 = vdwg.mxu0
  %v990 = vadd.f32 %v773, %v922
  %v991 = vadd.f32 %v774, %v961
  %v992 = vadd.f32 %v775, %v924
  %v993 = vadd.f32 %v776, %v963
  %v994 = vadd.f32 %v777, %v927
  %v995 = vadd.f32 %v778, %v966
  %v996 = vadd.f32 %v779, %v929
  %v997 = vadd.f32 %v780, %v968
  %v998 = vadd.f32 %v781, %v932
  %v999 = vadd.f32 %v782, %v971
  %v1000 = vadd.f32 %v783, %v934
  %v1001 = vadd.f32 %v784, %v973
  %v1002 = vadd.f32 %v785, %v937
  %v1003 = vadd.f32 %v786, %v976
  %v1004 = vadd.f32 %v787, %v939
  %v1005 = vadd.f32 %v788, %v978
  %v1006 = vadd.f32 %v789, %v942
  %v1007 = vadd.f32 %v790, %v981
  %v1008 = vadd.f32 %v791, %v944
  %v1009 = vadd.f32 %v792, %v983
  %v1010 = vadd.f32 %v793, %v947
  %v1011 = vadd.f32 %v794, %v986
  %v1012 = vadd.f32 %v795, %v949
  %v1013 = vadd.f32 %v796, %v988
  %v1014 = vld [vmem:[#allocation2 + $0x20] sm:$0xff]
  %v1015 = vld [vmem:[#allocation2 + $0x28] sm:$0xff]
  %v1016 = vld [vmem:[#allocation2 + $0x30] sm:$0xff]
  %v1017 = vld [vmem:[#allocation2 + $0x38] sm:$0xff]
  %v1018 = vld [vmem:[#allocation2 + $0x40] sm:$0xff]
  %v1019 = vld [vmem:[#allocation2 + $0x48] sm:$0xff]
  %v1020 = vld [vmem:[#allocation2 + $0x50] sm:$0xff]
  %v1021 = vld [vmem:[#allocation2 + $0x58] sm:$0xff]
  %v1022 = vld [vmem:[#allocation2 + $0x60] sm:$0xff]
  %v1023 = vld [vmem:[#allocation2 + $0x68] sm:$0xff]
  %v1024 = vld [vmem:[#allocation2 + $0x70] sm:$0xff]
  %v1025 = vld [vmem:[#allocation2 + $0x78] sm:$0xff]
  %v1026 = vpack.c.bf16 %v1015, %v1014
  %v1027 = vpack.c.bf16 %v1017, %v1016
  %v1028 = vpack.c.bf16 %v1019, %v1018
  %v1029 = vpack.c.bf16 %v1021, %v1020
  %v1030 = vpack.c.bf16 %v1023, %v1022
  %v1031 = vpack.c.bf16 %v1025, %v1024
  %s1032 = scalar_lea.vmem %s5, 512
  %v1033 = vld [vmem:[%s1032] sm:$0xff]
  %v1034 = vld [vmem:[%s1032 + $0x8] sm:$0xff]
  %v1035 = vld [vmem:[%s1032 + $0x10] sm:$0xff]
  %v1036 = vld [vmem:[%s1032 + $0x18] sm:$0xff]
  %v1037 = vld [vmem:[%s1032 + $0x20] sm:$0xff]
  %v1038 = vld [vmem:[%s1032 + $0x28] sm:$0xff]
  %v1039 = vld [vmem:[%s1032 + $0x30] sm:$0xff]
  %v1040 = vld [vmem:[%s1032 + $0x38] sm:$0xff]
  %v1041 = vld [vmem:[%s1032 + $0x40] sm:$0xff]
  %v1042 = vld [vmem:[%s1032 + $0x48] sm:$0xff]
  %v1043 = vld [vmem:[%s1032 + $0x50] sm:$0xff]
  %v1044 = vld [vmem:[%s1032 + $0x58] sm:$0xff]
  %v1045 = vld [vmem:[%s1032 + $0x60] sm:$0xff]
  %v1046 = vld [vmem:[%s1032 + $0x68] sm:$0xff]
  %v1047 = vld [vmem:[%s1032 + $0x70] sm:$0xff]
  %v1048 = vld [vmem:[%s1032 + $0x78] sm:$0xff]
  %v1065 = vunpack.c.l.b16 %v1033
  %v1066 = vunpack.c.h.b16 %v1033
  %v1067 = vunpack.c.l.b16 %v1034
  %v1068 = vunpack.c.h.b16 %v1034
  %v1069 = vunpack.c.l.b16 %v1035
  %v1070 = vunpack.c.h.b16 %v1035
  %v1071 = vunpack.c.l.b16 %v1036
  %v1072 = vunpack.c.h.b16 %v1036
  %v1073 = vunpack.c.l.b16 %v1037
  %v1074 = vunpack.c.h.b16 %v1037
  %v1075 = vunpack.c.l.b16 %v1038
  %v1076 = vunpack.c.h.b16 %v1038
  %v1077 = vunpack.c.l.b16 %v1039
  %v1078 = vunpack.c.h.b16 %v1039
  %v1079 = vunpack.c.l.b16 %v1040
  %v1080 = vunpack.c.h.b16 %v1040
  %v1081 = vunpack.c.l.b16 %v1041
  %v1082 = vunpack.c.h.b16 %v1041
  %v1083 = vunpack.c.l.b16 %v1042
  %v1084 = vunpack.c.h.b16 %v1042
  %v1085 = vunpack.c.l.b16 %v1043
  %v1086 = vunpack.c.h.b16 %v1043
  %v1087 = vunpack.c.l.b16 %v1044
  %v1088 = vunpack.c.h.b16 %v1044
  %v1089 = vunpack.c.l.b16 %v1045
  %v1090 = vunpack.c.h.b16 %v1045
  %v1091 = vunpack.c.l.b16 %v1046
  %v1092 = vunpack.c.h.b16 %v1046
  %v1093 = vunpack.c.l.b16 %v1047
  %v1094 = vunpack.c.h.b16 %v1047
  %v1095 = vunpack.c.l.b16 %v1048
  %v1096 = vunpack.c.h.b16 %v1048
  %v1097 = vpack.c.b16 %v1067, %v1065
  %v1098 = vpack.c.b16 %v1068, %v1066
  %v1099 = vpack.c.b16 %v1071, %v1069
  %v1100 = vpack.c.b16 %v1072, %v1070
  %v1101 = vpack.c.b16 %v1075, %v1073
  %v1102 = vpack.c.b16 %v1076, %v1074
  %v1103 = vpack.c.b16 %v1079, %v1077
  %v1104 = vpack.c.b16 %v1080, %v1078
  %v1105 = vpack.c.b16 %v1083, %v1081
  %v1106 = vpack.c.b16 %v1084, %v1082
  %v1107 = vpack.c.b16 %v1087, %v1085
  %v1108 = vpack.c.b16 %v1088, %v1086
  %v1109 = vpack.c.b16 %v1091, %v1089
  %v1110 = vpack.c.b16 %v1092, %v1090
  %v1111 = vpack.c.b16 %v1095, %v1093
  %v1112 = vpack.c.b16 %v1096, %v1094
  %1129 = vmatpush.bf16.msra.mxu0 %v1111
  %1130 = vmatpush.bf16.msra.mxu0 %v1109
  %1131 = vmatpush.bf16.msra.mxu0 %v1107
  %1132 = vmatpush.bf16.msra.mxu0 %v1105
  %1133 = vmatpush.bf16.msra.mxu0 %v1103
  %1134 = vmatpush.bf16.msra.mxu0 %v1101
  %1135 = vmatpush.bf16.msra.mxu0 %v1099
  %1136 = vmatpush.bf16.msra.mxu0 %v1097
  %1137 = vmatmul.bf16.gmra.mxu0 %v1026
  %v1138 = vpop.f32.mrf.mxu0
  %v1139 = vadd.f32 0.0, %v1138
  %v1140 = vpop.f32.mrf.mxu0
  %v1141 = vadd.f32 0.0, %v1140
  %1142 = vmatmul.bf16.gmra.mxu0 %v1027
  %v1143 = vpop.f32.mrf.mxu0
  %v1144 = vadd.f32 0.0, %v1143
  %v1145 = vpop.f32.mrf.mxu0
  %v1146 = vadd.f32 0.0, %v1145
  %1147 = vmatmul.bf16.gmra.mxu0 %v1028
  %v1148 = vpop.f32.mrf.mxu0
  %v1149 = vadd.f32 0.0, %v1148
  %v1150 = vpop.f32.mrf.mxu0
  %v1151 = vadd.f32 0.0, %v1150
  %1152 = vmatmul.bf16.gmra.mxu0 %v1029
  %v1153 = vpop.f32.mrf.mxu0
  %v1154 = vadd.f32 0.0, %v1153
  %v1155 = vpop.f32.mrf.mxu0
  %v1156 = vadd.f32 0.0, %v1155
  %1157 = vmatmul.bf16.gmra.mxu0 %v1030
  %v1158 = vpop.f32.mrf.mxu0
  %v1159 = vadd.f32 0.0, %v1158
  %v1160 = vpop.f32.mrf.mxu0
  %v1161 = vadd.f32 0.0, %v1160
  %1162 = vmatmul.bf16.gmra.mxu0 %v1031
  %v1163 = vpop.f32.mrf.mxu0
  %v1164 = vadd.f32 0.0, %v1163
  %v1165 = vpop.f32.mrf.mxu0
  %v1166 = vadd.f32 0.0, %v1165
  %1167 = vdwg.mxu0
  %1168 = vmatpush.bf16.msra.mxu0 %v1112
  %1169 = vmatpush.bf16.msra.mxu0 %v1110
  %1170 = vmatpush.bf16.msra.mxu0 %v1108
  %1171 = vmatpush.bf16.msra.mxu0 %v1106
  %1172 = vmatpush.bf16.msra.mxu0 %v1104
  %1173 = vmatpush.bf16.msra.mxu0 %v1102
  %1174 = vmatpush.bf16.msra.mxu0 %v1100
  %1175 = vmatpush.bf16.msra.mxu0 %v1098
  %1176 = vmatmul.bf16.gmra.mxu0 %v1026
  %v1177 = vpop.f32.mrf.mxu0
  %v1178 = vadd.f32 0.0, %v1177
  %v1179 = vpop.f32.mrf.mxu0
  %v1180 = vadd.f32 0.0, %v1179
  %1181 = vmatmul.bf16.gmra.mxu0 %v1027
  %v1182 = vpop.f32.mrf.mxu0
  %v1183 = vadd.f32 0.0, %v1182
  %v1184 = vpop.f32.mrf.mxu0
  %v1185 = vadd.f32 0.0, %v1184
  %1186 = vmatmul.bf16.gmra.mxu0 %v1028
  %v1187 = vpop.f32.mrf.mxu0
  %v1188 = vadd.f32 0.0, %v1187
  %v1189 = vpop.f32.mrf.mxu0
  %v1190 = vadd.f32 0.0, %v1189
  %1191 = vmatmul.bf16.gmra.mxu0 %v1029
  %v1192 = vpop.f32.mrf.mxu0
  %v1193 = vadd.f32 0.0, %v1192
  %v1194 = vpop.f32.mrf.mxu0
  %v1195 = vadd.f32 0.0, %v1194
  %1196 = vmatmul.bf16.gmra.mxu0 %v1030
  %v1197 = vpop.f32.mrf.mxu0
  %v1198 = vadd.f32 0.0, %v1197
  %v1199 = vpop.f32.mrf.mxu0
  %v1200 = vadd.f32 0.0, %v1199
  %1201 = vmatmul.bf16.gmra.mxu0 %v1031
  %v1202 = vpop.f32.mrf.mxu0
  %v1203 = vadd.f32 0.0, %v1202
  %v1204 = vpop.f32.mrf.mxu0
  %v1205 = vadd.f32 0.0, %v1204
  %1206 = vdwg.mxu0
  %v1207 = vadd.f32 %v990, %v1139
  %v1208 = vadd.f32 %v991, %v1178
  %v1209 = vadd.f32 %v992, %v1141
  %v1210 = vadd.f32 %v993, %v1180
  %v1211 = vadd.f32 %v994, %v1144
  %v1212 = vadd.f32 %v995, %v1183
  %v1213 = vadd.f32 %v996, %v1146
  %v1214 = vadd.f32 %v997, %v1185
  %v1215 = vadd.f32 %v998, %v1149
  %v1216 = vadd.f32 %v999, %v1188
  %v1217 = vadd.f32 %v1000, %v1151
  %v1218 = vadd.f32 %v1001, %v1190
  %v1219 = vadd.f32 %v1002, %v1154
  %v1220 = vadd.f32 %v1003, %v1193
  %v1221 = vadd.f32 %v1004, %v1156
  %v1222 = vadd.f32 %v1005, %v1195
  %v1223 = vadd.f32 %v1006, %v1159
  %v1224 = vadd.f32 %v1007, %v1198
  %v1225 = vadd.f32 %v1008, %v1161
  %v1226 = vadd.f32 %v1009, %v1200
  %v1227 = vadd.f32 %v1010, %v1164
  %v1228 = vadd.f32 %v1011, %v1203
  %v1229 = vadd.f32 %v1012, %v1166
  %v1230 = vadd.f32 %v1013, %v1205
  %v1231 = vld [vmem:[%s6] sm:$0x3]
  %v1233 = vperm.slane %v1231, 0
  %v1234 = vperm.slane %v1231, 1
  %v1237 = vadd.f32 %v1207, %v1233
  %v1238 = vadd.f32 %v1208, %v1234
  %v1239 = vadd.f32 %v1209, %v1233
  %v1240 = vadd.f32 %v1210, %v1234
  %v1241 = vadd.f32 %v1211, %v1233
  %v1242 = vadd.f32 %v1212, %v1234
  %v1243 = vadd.f32 %v1213, %v1233
  %v1244 = vadd.f32 %v1214, %v1234
  %v1245 = vadd.f32 %v1215, %v1233
  %v1246 = vadd.f32 %v1216, %v1234
  %v1247 = vadd.f32 %v1217, %v1233
  %v1248 = vadd.f32 %v1218, %v1234
  %v1249 = vadd.f32 %v1219, %v1233
  %v1250 = vadd.f32 %v1220, %v1234
  %v1251 = vadd.f32 %v1221, %v1233
  %v1252 = vadd.f32 %v1222, %v1234
  %v1253 = vadd.f32 %v1223, %v1233
  %v1254 = vadd.f32 %v1224, %v1234
  %v1255 = vadd.f32 %v1225, %v1233
  %v1256 = vadd.f32 %v1226, %v1234
  %v1257 = vadd.f32 %v1227, %v1233
  %v1258 = vadd.f32 %v1228, %v1234
  %v1259 = vadd.f32 %v1229, %v1233
  %v1260 = vadd.f32 %v1230, %v1234
  %v1261 = vmax.f32 %v1237, 0.0
  %v1262 = vmax.f32 %v1238, 0.0
  %v1263 = vmax.f32 %v1239, 0.0
  %v1264 = vmax.f32 %v1240, 0.0
  %v1265 = vmax.f32 %v1241, 0.0
  %v1266 = vmax.f32 %v1242, 0.0
  %v1267 = vmax.f32 %v1243, 0.0
  %v1268 = vmax.f32 %v1244, 0.0
  %v1269 = vmax.f32 %v1245, 0.0
  %v1270 = vmax.f32 %v1246, 0.0
  %v1271 = vmax.f32 %v1247, 0.0
  %v1272 = vmax.f32 %v1248, 0.0
  %v1273 = vmax.f32 %v1249, 0.0
  %v1274 = vmax.f32 %v1250, 0.0
  %v1275 = vmax.f32 %v1251, 0.0
  %v1276 = vmax.f32 %v1252, 0.0
  %v1277 = vmax.f32 %v1253, 0.0
  %v1278 = vmax.f32 %v1254, 0.0
  %v1279 = vmax.f32 %v1255, 0.0
  %v1280 = vmax.f32 %v1256, 0.0
  %v1281 = vmax.f32 %v1257, 0.0
  %v1282 = vmax.f32 %v1258, 0.0
  %v1283 = vmax.f32 %v1259, 0.0
  %v1284 = vmax.f32 %v1260, 0.0
  %v1285 = vpack.c.bf16 %v1263, %v1261
  %v1286 = vpack.c.bf16 %v1264, %v1262
  %v1287 = vpack.c.bf16 %v1267, %v1265
  %v1288 = vpack.c.bf16 %v1268, %v1266
  %v1289 = vpack.c.bf16 %v1271, %v1269
  %v1290 = vpack.c.bf16 %v1272, %v1270
  %v1291 = vpack.c.bf16 %v1275, %v1273
  %v1292 = vpack.c.bf16 %v1276, %v1274
  %v1293 = vpack.c.bf16 %v1279, %v1277
  %v1294 = vpack.c.bf16 %v1280, %v1278
  %v1295 = vpack.c.bf16 %v1283, %v1281
  %v1296 = vpack.c.bf16 %v1284, %v1282
  %v1297 = vld [vmem:[%s7] sm:$0xff]
  %v1298 = vld [vmem:[%s7 + $0x8] sm:$0xff]
  %v1299 = vld [vmem:[%s7 + $0x10] sm:$0xff]
  %v1300 = vld [vmem:[%s7 + $0x18] sm:$0xff]
  %v1301 = vld [vmem:[%s7 + $0x20] sm:$0xff]
  %v1302 = vld [vmem:[%s7 + $0x28] sm:$0xff]
  %v1303 = vld [vmem:[%s7 + $0x30] sm:$0xff]
  %v1304 = vld [vmem:[%s7 + $0x38] sm:$0xff]
  %v1305 = vld [vmem:[%s7 + $0x40] sm:$0xff]
  %v1306 = vld [vmem:[%s7 + $0x48] sm:$0xff]
  %v1307 = vld [vmem:[%s7 + $0x50] sm:$0xff]
  %v1308 = vld [vmem:[%s7 + $0x58] sm:$0xff]
  %v1309 = vld [vmem:[%s7 + $0x60] sm:$0xff]
  %v1310 = vld [vmem:[%s7 + $0x68] sm:$0xff]
  %v1311 = vld [vmem:[%s7 + $0x70] sm:$0xff]
  %v1312 = vld [vmem:[%s7 + $0x78] sm:$0xff]
  %v1313 = vld [vmem:[%s7 + $0x80] sm:$0xff]
  %v1314 = vld [vmem:[%s7 + $0x88] sm:$0xff]
  %v1315 = vld [vmem:[%s7 + $0x90] sm:$0xff]
  %v1316 = vld [vmem:[%s7 + $0x98] sm:$0xff]
  %v1317 = vld [vmem:[%s7 + $0xa0] sm:$0xff]
  %v1318 = vld [vmem:[%s7 + $0xa8] sm:$0xff]
  %v1319 = vld [vmem:[%s7 + $0xb0] sm:$0xff]
  %v1320 = vld [vmem:[%s7 + $0xb8] sm:$0xff]
  %v1321 = vld [vmem:[%s7 + $0xc0] sm:$0xff]
  %v1322 = vld [vmem:[%s7 + $0xc8] sm:$0xff]
  %v1323 = vld [vmem:[%s7 + $0xd0] sm:$0xff]
  %v1324 = vld [vmem:[%s7 + $0xd8] sm:$0xff]
  %v1325 = vld [vmem:[%s7 + $0xe0] sm:$0xff]
  %v1326 = vld [vmem:[%s7 + $0xe8] sm:$0xff]
  %v1327 = vld [vmem:[%s7 + $0xf0] sm:$0xff]
  %v1328 = vld [vmem:[%s7 + $0xf8] sm:$0xff]
  %v1329 = vld [vmem:[%s8] sm:$0x3]
  %v1331 = vperm.slane %v1329, 0
  %v1332 = vperm.slane %v1329, 1
  %v1367 = vunpack.c.l.b16 %v1297
  %v1368 = vunpack.c.h.b16 %v1297
  %v1369 = vunpack.c.l.b16 %v1298
  %v1370 = vunpack.c.h.b16 %v1298
  %v1371 = vunpack.c.l.b16 %v1299
  %v1372 = vunpack.c.h.b16 %v1299
  %v1373 = vunpack.c.l.b16 %v1300
  %v1374 = vunpack.c.h.b16 %v1300
  %v1375 = vunpack.c.l.b16 %v1301
  %v1376 = vunpack.c.h.b16 %v1301
  %v1377 = vunpack.c.l.b16 %v1302
  %v1378 = vunpack.c.h.b16 %v1302
  %v1379 = vunpack.c.l.b16 %v1303
  %v1380 = vunpack.c.h.b16 %v1303
  %v1381 = vunpack.c.l.b16 %v1304
  %v1382 = vunpack.c.h.b16 %v1304
  %v1383 = vunpack.c.l.b16 %v1305
  %v1384 = vunpack.c.h.b16 %v1305
  %v1385 = vunpack.c.l.b16 %v1306
  %v1386 = vunpack.c.h.b16 %v1306
  %v1387 = vunpack.c.l.b16 %v1307
  %v1388 = vunpack.c.h.b16 %v1307
  %v1389 = vunpack.c.l.b16 %v1308
  %v1390 = vunpack.c.h.b16 %v1308
  %v1391 = vunpack.c.l.b16 %v1309
  %v1392 = vunpack.c.h.b16 %v1309
  %v1393 = vunpack.c.l.b16 %v1310
  %v1394 = vunpack.c.h.b16 %v1310
  %v1395 = vunpack.c.l.b16 %v1311
  %v1396 = vunpack.c.h.b16 %v1311
  %v1397 = vunpack.c.l.b16 %v1312
  %v1398 = vunpack.c.h.b16 %v1312
  %v1399 = vunpack.c.l.b16 %v1313
  %v1400 = vunpack.c.h.b16 %v1313
  %v1401 = vunpack.c.l.b16 %v1314
  %v1402 = vunpack.c.h.b16 %v1314
  %v1403 = vunpack.c.l.b16 %v1315
  %v1404 = vunpack.c.h.b16 %v1315
  %v1405 = vunpack.c.l.b16 %v1316
  %v1406 = vunpack.c.h.b16 %v1316
  %v1407 = vunpack.c.l.b16 %v1317
  %v1408 = vunpack.c.h.b16 %v1317
  %v1409 = vunpack.c.l.b16 %v1318
  %v1410 = vunpack.c.h.b16 %v1318
  %v1411 = vunpack.c.l.b16 %v1319
  %v1412 = vunpack.c.h.b16 %v1319
  %v1413 = vunpack.c.l.b16 %v1320
  %v1414 = vunpack.c.h.b16 %v1320
  %v1415 = vunpack.c.l.b16 %v1321
  %v1416 = vunpack.c.h.b16 %v1321
  %v1417 = vunpack.c.l.b16 %v1322
  %v1418 = vunpack.c.h.b16 %v1322
  %v1419 = vunpack.c.l.b16 %v1323
  %v1420 = vunpack.c.h.b16 %v1323
  %v1421 = vunpack.c.l.b16 %v1324
  %v1422 = vunpack.c.h.b16 %v1324
  %v1423 = vunpack.c.l.b16 %v1325
  %v1424 = vunpack.c.h.b16 %v1325
  %v1425 = vunpack.c.l.b16 %v1326
  %v1426 = vunpack.c.h.b16 %v1326
  %v1427 = vunpack.c.l.b16 %v1327
  %v1428 = vunpack.c.h.b16 %v1327
  %v1429 = vunpack.c.l.b16 %v1328
  %v1430 = vunpack.c.h.b16 %v1328
  %v1431 = vpack.c.b16 %v1369, %v1367
  %v1432 = vpack.c.b16 %v1370, %v1368
  %v1433 = vpack.c.b16 %v1373, %v1371
  %v1434 = vpack.c.b16 %v1374, %v1372
  %v1435 = vpack.c.b16 %v1377, %v1375
  %v1436 = vpack.c.b16 %v1378, %v1376
  %v1437 = vpack.c.b16 %v1381, %v1379
  %v1438 = vpack.c.b16 %v1382, %v1380
  %v1439 = vpack.c.b16 %v1385, %v1383
  %v1440 = vpack.c.b16 %v1386, %v1384
  %v1441 = vpack.c.b16 %v1389, %v1387
  %v1442 = vpack.c.b16 %v1390, %v1388
  %v1443 = vpack.c.b16 %v1393, %v1391
  %v1444 = vpack.c.b16 %v1394, %v1392
  %v1445 = vpack.c.b16 %v1397, %v1395
  %v1446 = vpack.c.b16 %v1398, %v1396
  %v1447 = vpack.c.b16 %v1401, %v1399
  %v1448 = vpack.c.b16 %v1402, %v1400
  %v1449 = vpack.c.b16 %v1405, %v1403
  %v1450 = vpack.c.b16 %v1406, %v1404
  %v1451 = vpack.c.b16 %v1409, %v1407
  %v1452 = vpack.c.b16 %v1410, %v1408
  %v1453 = vpack.c.b16 %v1413, %v1411
  %v1454 = vpack.c.b16 %v1414, %v1412
  %v1455 = vpack.c.b16 %v1417, %v1415
  %v1456 = vpack.c.b16 %v1418, %v1416
  %v1457 = vpack.c.b16 %v1421, %v1419
  %v1458 = vpack.c.b16 %v1422, %v1420
  %v1459 = vpack.c.b16 %v1425, %v1423
  %v1460 = vpack.c.b16 %v1426, %v1424
  %v1461 = vpack.c.b16 %v1429, %v1427
  %v1462 = vpack.c.b16 %v1430, %v1428
  %1495 = vmatpush.bf16.msra.mxu0 %v1445
  %1496 = vmatpush.bf16.msra.mxu0 %v1443
  %1497 = vmatpush.bf16.msra.mxu0 %v1441
  %1498 = vmatpush.bf16.msra.mxu0 %v1439
  %1499 = vmatpush.bf16.msra.mxu0 %v1437
  %1500 = vmatpush.bf16.msra.mxu0 %v1435
  %1501 = vmatpush.bf16.msra.mxu0 %v1433
  %1502 = vmatpush.bf16.msra.mxu0 %v1431
  %1503 = vmatmul.bf16.gmra.mxu0 %v1285
  %v1504 = vpop.f32.mrf.mxu0
  %v1505 = vadd.f32 %v1331, %v1504
  %v1506 = vpop.f32.mrf.mxu0
  %v1507 = vadd.f32 %v1331, %v1506
  %1508 = vmatmul.bf16.gmra.mxu0 %v1287
  %v1509 = vpop.f32.mrf.mxu0
  %v1510 = vadd.f32 %v1331, %v1509
  %v1511 = vpop.f32.mrf.mxu0
  %v1512 = vadd.f32 %v1331, %v1511
  %1513 = vmatmul.bf16.gmra.mxu0 %v1289
  %v1514 = vpop.f32.mrf.mxu0
  %v1515 = vadd.f32 %v1331, %v1514
  %v1516 = vpop.f32.mrf.mxu0
  %v1517 = vadd.f32 %v1331, %v1516
  %1518 = vmatmul.bf16.gmra.mxu0 %v1291
  %v1519 = vpop.f32.mrf.mxu0
  %v1520 = vadd.f32 %v1331, %v1519
  %v1521 = vpop.f32.mrf.mxu0
  %v1522 = vadd.f32 %v1331, %v1521
  %1523 = vmatmul.bf16.gmra.mxu0 %v1293
  %v1524 = vpop.f32.mrf.mxu0
  %v1525 = vadd.f32 %v1331, %v1524
  %v1526 = vpop.f32.mrf.mxu0
  %v1527 = vadd.f32 %v1331, %v1526
  %1528 = vmatmul.bf16.gmra.mxu0 %v1295
  %v1529 = vpop.f32.mrf.mxu0
  %v1530 = vadd.f32 %v1331, %v1529
  %v1531 = vpop.f32.mrf.mxu0
  %v1532 = vadd.f32 %v1331, %v1531
  %1533 = vdwg.mxu0
  %1534 = vmatpush.bf16.msra.mxu0 %v1461
  %1535 = vmatpush.bf16.msra.mxu0 %v1459
  %1536 = vmatpush.bf16.msra.mxu0 %v1457
  %1537 = vmatpush.bf16.msra.mxu0 %v1455
  %1538 = vmatpush.bf16.msra.mxu0 %v1453
  %1539 = vmatpush.bf16.msra.mxu0 %v1451
  %1540 = vmatpush.bf16.msra.mxu0 %v1449
  %1541 = vmatpush.bf16.msra.mxu0 %v1447
  %1542 = vmatmul.bf16.gmra.mxu0 %v1286
  %v1543 = vpop.f32.mrf.mxu0
  %v1544 = vadd.f32 %v1505, %v1543
  %v1545 = vpop.f32.mrf.mxu0
  %v1546 = vadd.f32 %v1507, %v1545
  %1547 = vmatmul.bf16.gmra.mxu0 %v1288
  %v1548 = vpop.f32.mrf.mxu0
  %v1549 = vadd.f32 %v1510, %v1548
  %v1550 = vpop.f32.mrf.mxu0
  %v1551 = vadd.f32 %v1512, %v1550
  %1552 = vmatmul.bf16.gmra.mxu0 %v1290
  %v1553 = vpop.f32.mrf.mxu0
  %v1554 = vadd.f32 %v1515, %v1553
  %v1555 = vpop.f32.mrf.mxu0
  %v1556 = vadd.f32 %v1517, %v1555
  %1557 = vmatmul.bf16.gmra.mxu0 %v1292
  %v1558 = vpop.f32.mrf.mxu0
  %v1559 = vadd.f32 %v1520, %v1558
  %v1560 = vpop.f32.mrf.mxu0
  %v1561 = vadd.f32 %v1522, %v1560
  %1562 = vmatmul.bf16.gmra.mxu0 %v1294
  %v1563 = vpop.f32.mrf.mxu0
  %v1564 = vadd.f32 %v1525, %v1563
  %v1565 = vpop.f32.mrf.mxu0
  %v1566 = vadd.f32 %v1527, %v1565
  %1567 = vmatmul.bf16.gmra.mxu0 %v1296
  %v1568 = vpop.f32.mrf.mxu0
  %v1569 = vadd.f32 %v1530, %v1568
  %v1570 = vpop.f32.mrf.mxu0
  %v1571 = vadd.f32 %v1532, %v1570
  %1572 = vdwg.mxu0
  %1573 = vmatpush.bf16.msra.mxu0 %v1446
  %1574 = vmatpush.bf16.msra.mxu0 %v1444
  %1575 = vmatpush.bf16.msra.mxu0 %v1442
  %1576 = vmatpush.bf16.msra.mxu0 %v1440
  %1577 = vmatpush.bf16.msra.mxu0 %v1438
  %1578 = vmatpush.bf16.msra.mxu0 %v1436
  %1579 = vmatpush.bf16.msra.mxu0 %v1434
  %1580 = vmatpush.bf16.msra.mxu0 %v1432
  %1581 = vmatmul.bf16.gmra.mxu0 %v1285
  %v1582 = vpop.f32.mrf.mxu0
  %v1583 = vadd.f32 %v1332, %v1582
  %v1584 = vpop.f32.mrf.mxu0
  %v1585 = vadd.f32 %v1332, %v1584
  %1586 = vmatmul.bf16.gmra.mxu0 %v1287
  %v1587 = vpop.f32.mrf.mxu0
  %v1588 = vadd.f32 %v1332, %v1587
  %v1589 = vpop.f32.mrf.mxu0
  %v1590 = vadd.f32 %v1332, %v1589
  %1591 = vmatmul.bf16.gmra.mxu0 %v1289
  %v1592 = vpop.f32.mrf.mxu0
  %v1593 = vadd.f32 %v1332, %v1592
  %v1594 = vpop.f32.mrf.mxu0
  %v1595 = vadd.f32 %v1332, %v1594
  %1596 = vmatmul.bf16.gmra.mxu0 %v1291
  %v1597 = vpop.f32.mrf.mxu0
  %v1598 = vadd.f32 %v1332, %v1597
  %v1599 = vpop.f32.mrf.mxu0
  %v1600 = vadd.f32 %v1332, %v1599
  %1601 = vmatmul.bf16.gmra.mxu0 %v1293
  %v1602 = vpop.f32.mrf.mxu0
  %v1603 = vadd.f32 %v1332, %v1602
  %v1604 = vpop.f32.mrf.mxu0
  %v1605 = vadd.f32 %v1332, %v1604
  %1606 = vmatmul.bf16.gmra.mxu0 %v1295
  %v1607 = vpop.f32.mrf.mxu0
  %v1608 = vadd.f32 %v1332, %v1607
  %v1609 = vpop.f32.mrf.mxu0
  %v1610 = vadd.f32 %v1332, %v1609
  %1611 = vdwg.mxu0
  %1612 = vmatpush.bf16.msra.mxu0 %v1462
  %1613 = vmatpush.bf16.msra.mxu0 %v1460
  %1614 = vmatpush.bf16.msra.mxu0 %v1458
  %1615 = vmatpush.bf16.msra.mxu0 %v1456
  %1616 = vmatpush.bf16.msra.mxu0 %v1454
  %1617 = vmatpush.bf16.msra.mxu0 %v1452
  %1618 = vmatpush.bf16.msra.mxu0 %v1450
  %1619 = vmatpush.bf16.msra.mxu0 %v1448
  %1620 = vmatmul.bf16.gmra.mxu0 %v1286
  %v1621 = vpop.f32.mrf.mxu0
  %v1622 = vadd.f32 %v1583, %v1621
  %v1623 = vpop.f32.mrf.mxu0
  %v1624 = vadd.f32 %v1585, %v1623
  %1625 = vmatmul.bf16.gmra.mxu0 %v1288
  %v1626 = vpop.f32.mrf.mxu0
  %v1627 = vadd.f32 %v1588, %v1626
  %v1628 = vpop.f32.mrf.mxu0
  %v1629 = vadd.f32 %v1590, %v1628
  %1630 = vmatmul.bf16.gmra.mxu0 %v1290
  %v1631 = vpop.f32.mrf.mxu0
  %v1632 = vadd.f32 %v1593, %v1631
  %v1633 = vpop.f32.mrf.mxu0
  %v1634 = vadd.f32 %v1595, %v1633
  %1635 = vmatmul.bf16.gmra.mxu0 %v1292
  %v1636 = vpop.f32.mrf.mxu0
  %v1637 = vadd.f32 %v1598, %v1636
  %v1638 = vpop.f32.mrf.mxu0
  %v1639 = vadd.f32 %v1600, %v1638
  %1640 = vmatmul.bf16.gmra.mxu0 %v1294
  %v1641 = vpop.f32.mrf.mxu0
  %v1642 = vadd.f32 %v1603, %v1641
  %v1643 = vpop.f32.mrf.mxu0
  %v1644 = vadd.f32 %v1605, %v1643
  %1645 = vmatmul.bf16.gmra.mxu0 %v1296
  %v1646 = vpop.f32.mrf.mxu0
  %v1647 = vadd.f32 %v1608, %v1646
  %v1648 = vpop.f32.mrf.mxu0
  %v1649 = vadd.f32 %v1610, %v1648
  %1650 = vdwg.mxu0
  %1651 = vst [vmem:[%s9] sm:$0xff] %v1544
  %1652 = vst [vmem:[%s9 + $0x8] sm:$0xff] %v1622
  %1653 = vst [vmem:[%s9 + $0x10] sm:$0xff] %v1546
  %1654 = vst [vmem:[%s9 + $0x18] sm:$0xff] %v1624
  %1655 = vst [vmem:[%s9 + $0x20] sm:$0xff] %v1549
  %1656 = vst [vmem:[%s9 + $0x28] sm:$0xff] %v1627
  %1657 = vst [vmem:[%s9 + $0x30] sm:$0xff] %v1551
  %1658 = vst [vmem:[%s9 + $0x38] sm:$0xff] %v1629
  %1659 = vst [vmem:[%s9 + $0x40] sm:$0xff] %v1554
  %1660 = vst [vmem:[%s9 + $0x48] sm:$0xff] %v1632
  %1661 = vst [vmem:[%s9 + $0x50] sm:$0xff] %v1556
  %1662 = vst [vmem:[%s9 + $0x58] sm:$0xff] %v1634
  %1663 = vst [vmem:[%s9 + $0x60] sm:$0xff] %v1559
  %1664 = vst [vmem:[%s9 + $0x68] sm:$0xff] %v1637
  %1665 = vst [vmem:[%s9 + $0x70] sm:$0xff] %v1561
  %1666 = vst [vmem:[%s9 + $0x78] sm:$0xff] %v1639
  %1667 = vst [vmem:[%s9 + $0x80] sm:$0xff] %v1564
  %1668 = vst [vmem:[%s9 + $0x88] sm:$0xff] %v1642
  %1669 = vst [vmem:[%s9 + $0x90] sm:$0xff] %v1566
  %1670 = vst [vmem:[%s9 + $0x98] sm:$0xff] %v1644
  %1671 = vst [vmem:[%s9 + $0xa0] sm:$0xff] %v1569
  %1672 = vst [vmem:[%s9 + $0xa8] sm:$0xff] %v1647
  %1673 = vst [vmem:[%s9 + $0xb0] sm:$0xff] %v1571
  %1674 = vst [vmem:[%s9 + $0xb8] sm:$0xff] %v1649
  // Predicated region
  $region38: #{cnn_lstm_forward.2} parent=0 // pred_check
    _
  $region39: #{cnn_lstm_forward.2} parent=0 // pred_check_branch
    %1676 = sbr.rel (0) target = $region41
  $region40: #{cnn_lstm_forward.2} parent=0 // pred_region
    _
  $region41: #{cnn_lstm_forward.2} parent=0 // pred_fallthru
    _
  // Predicated region
  $region42: #{cnn_lstm_forward.2} parent=0 // pred_check
    _
  $region43: #{cnn_lstm_forward.2} parent=0 // pred_check_branch
    %1678 = sbr.rel (0) target = $region45
  $region44: #{cnn_lstm_forward.2} parent=0 // pred_region
    _
  $region45: #{cnn_lstm_forward.2} parent=0 // pred_fallthru
    _

// kernel: cnn_lstm_forward.3
$region0: #{cnn_lstm_forward.3}
  #allocation0 [shape = 'u32[]', space=smem, size = 0x4, offset = 0x4, fixed_abs, tag = 'smem constant byte address 0x4 - core index']
  #allocation1 [shape = 'u32[72,128]{1,0:T(1,128)}', space=vmem, size = 0x9000, scoped, tag = 'internal scratch']
  %s0 = inlined_call_operand.vmem [shape: f32[12,8,256], index: 0, kind: input, shape index: {}]
  %s1 = inlined_call_operand.vmem [shape: bf16[32,128], index: 1, kind: input, shape index: {}]
  %s2 = inlined_call_operand.vmem [shape: bf16[32,128], index: 2, kind: input, shape index: {}]
  %s3 = inlined_call_operand.vmem [shape: f32[64,128], index: 3, kind: input, shape index: {}]
  %s4 = inlined_call_operand.vmem [shape: f32[1,128], index: 4, kind: input, shape index: {}]
  %s5 = inlined_call_operand.vmem [shape: f32[8,128], index: 5, kind: output, shape index: {}]
  %s6 = sld [smem:[#allocation0]]
  $region30: #{cnn_lstm_forward.3} parent=0
    _
  %s8 = ssub.s32 1, %s6
  %s9 = scalar_select 0, %s8, %s6
  // Predicated region
  $region2: #{cnn_lstm_forward.3} parent=0 // pred_check
    _
  $region3: #{cnn_lstm_forward.3} parent=0 // pred_check_branch
    %11 = sbr.rel (0) target = $region5
  $region4: #{cnn_lstm_forward.3} parent=0 // pred_region
    _
  $region5: #{cnn_lstm_forward.3} parent=0 // pred_fallthru
    _
  // Predicated region
  $region6: #{cnn_lstm_forward.3} parent=0 // pred_check
    _
  $region7: #{cnn_lstm_forward.3} parent=0 // pred_check_branch
    %13 = sbr.rel (0) target = $region9
  $region8: #{cnn_lstm_forward.3} parent=0 // pred_region
    _
  $region9: #{cnn_lstm_forward.3} parent=0 // pred_fallthru
    _
  // Predicated region
  $region10: #{cnn_lstm_forward.3} parent=0 // pred_check
    _
  $region11: #{cnn_lstm_forward.3} parent=0 // pred_check_branch
    %15 = sbr.rel (0) target = $region13
  $region12: #{cnn_lstm_forward.3} parent=0 // pred_region
    _
  $region13: #{cnn_lstm_forward.3} parent=0 // pred_fallthru
    _
  // Predicated region
  $region14: #{cnn_lstm_forward.3} parent=0 // pred_check
    _
  $region15: #{cnn_lstm_forward.3} parent=0 // pred_check_branch
    %17 = sbr.rel (0) target = $region17
  $region16: #{cnn_lstm_forward.3} parent=0 // pred_region
    _
  $region17: #{cnn_lstm_forward.3} parent=0 // pred_fallthru
    _
  // Predicated region
  $region18: #{cnn_lstm_forward.3} parent=0 // pred_check
    _
  $region19: #{cnn_lstm_forward.3} parent=0 // pred_check_branch
    %19 = sbr.rel (0) target = $region21
  $region20: #{cnn_lstm_forward.3} parent=0 // pred_region
    _
  $region21: #{cnn_lstm_forward.3} parent=0 // pred_fallthru
    _
  %v21 = vlaneseq
  %v22 = vand.u32 %v21, 127
  %vm23 = vcmp.ge.s32.totalorder %v22, 64
  %vm24 = vcmp.lt.s32.totalorder %v22, 96
  %vm25 = vmand %vm23, %vm24
  %v26 = vsel %vm25, 1.0, 0.5
  %v27 = vsel %vm25, 0.0, 0.5
  %v28 = vld [vmem:[%s1] sm:$0xf]
  %v29 = vld [vmem:[%s1 + $0x4] sm:$0xf]
  %v30 = vld [vmem:[%s1 + $0x8] sm:$0xf]
  %v31 = vld [vmem:[%s1 + $0xc] sm:$0xf]
  %v32 = vld [vmem:[%s2] sm:$0xf]
  %v33 = vld [vmem:[%s2 + $0x4] sm:$0xf]
  %v34 = vld [vmem:[%s2 + $0x8] sm:$0xf]
  %v35 = vld [vmem:[%s2 + $0xc] sm:$0xf]
  %v36 = vld [vmem:[%s0] sm:$0xff]
  %v37 = vld [vmem:[%s0 + $0x8] sm:$0xff]
  %s38 = scalar_lea.vmem %s0, 176
  %v39 = vld [vmem:[%s38] sm:$0xff]
  %v40 = vld [vmem:[%s38 + $0x8] sm:$0xff]
  %v45 = vunpack.c.l.b16 %v28
  %v46 = vunpack.c.l.b16 %v29
  %v47 = vunpack.c.l.b16 %v30
  %v48 = vunpack.c.l.b16 %v31
  %v49 = vpack.c.b16 %v46, %v45
  %v50 = vpack.c.b16 %v48, %v47
  %vm53 = vcmask 261120
  %v55 = vsel %vm53, 0, 0
  %57 = vmatpush.bf16.msra.mxu0 0
  %58 = vmatpush.bf16.msra.mxu0 0
  %59 = vmatpush.bf16.msra.mxu0 0
  %60 = vmatpush.bf16.msra.mxu0 0
  %61 = vmatpush.bf16.msra.mxu0 0
  %62 = vmatpush.bf16.msra.mxu0 0
  %63 = vmatpush.bf16.msra.mxu0 %v50
  %64 = vmatpush.bf16.msra.mxu0 %v49
  %65 = vmatmul.bf16.gmra.mxu0 %v55
  %v66 = vpop.f32.mrf.mxu0
  %v67 = vadd.f32 0.0, %v66
  %v68 = vpop.f32.mrf.mxu0
  %69 = vdwg.mxu0
  %v70 = vadd.f32 %v36, %v67
  %v71 = vmul.f32 %v70, %v26
  %v72 = vtanh.pop %v71
  %v73 = vmul.f32 %v72, %v26
  %v74 = vadd.f32 %v73, %v27
  %v75 = vmul.f32 %v74, 0.0
  %77 = vrot.lane.b32.xlu0 %v74, 64
  %v78 = vpop.permute.xlu0 %77
  %v80 = vmul.f32 %v74, %v78
  %82 = vrot.lane.b32.xlu0 %v80, 32
  %v83 = vpop.permute.xlu0 %82
  %v85 = vadd.f32 %v75, %v83
  %v86 = vtanh.pop %v85
  %88 = vrot.lane.b32.xlu0 %v86, 64
  %v89 = vpop.permute.xlu0 %88
  %v91 = vmul.f32 %v74, %v89
  %v96 = vunpack.c.l.b16 %v32
  %v97 = vunpack.c.l.b16 %v33
  %v98 = vunpack.c.l.b16 %v34
  %v99 = vunpack.c.l.b16 %v35
  %v100 = vpack.c.b16 %v97, %v96
  %v101 = vpack.c.b16 %v99, %v98
  %104 = vmatpush.bf16.msra.mxu0 0
  %105 = vmatpush.bf16.msra.mxu0 0
  %106 = vmatpush.bf16.msra.mxu0 0
  %107 = vmatpush.bf16.msra.mxu0 0
  %108 = vmatpush.bf16.msra.mxu0 0
  %109 = vmatpush.bf16.msra.mxu0 0
  %110 = vmatpush.bf16.msra.mxu0 %v101
  %111 = vmatpush.bf16.msra.mxu0 %v100
  %112 = vmatmul.bf16.gmra.mxu0 %v55
  %v113 = vpop.f32.mrf.mxu0
  %v114 = vadd.f32 0.0, %v113
  %v115 = vpop.f32.mrf.mxu0
  %116 = vdwg.mxu0
  %v117 = vadd.f32 %v40, %v114
  %v118 = vmul.f32 %v117, %v26
  %v119 = vtanh.pop %v118
  %v120 = vmul.f32 %v119, %v26
  %v121 = vadd.f32 %v120, %v27
  %v122 = vmul.f32 %v121, 0.0
  %124 = vrot.lane.b32.xlu0 %v121, 64
  %v125 = vpop.permute.xlu0 %124
  %v127 = vmul.f32 %v121, %v125
  %129 = vrot.lane.b32.xlu0 %v127, 32
  %v130 = vpop.permute.xlu0 %129
  %v132 = vadd.f32 %v122, %v130
  %v133 = vtanh.pop %v132
  %135 = vrot.lane.b32.xlu0 %v133, 64
  %v136 = vpop.permute.xlu0 %135
  %v138 = vmul.f32 %v121, %v136
  %s139 = scalar_lea.vmem %s0, 16
  %v140 = vld [vmem:[%s139] sm:$0xff]
  %v141 = vld [vmem:[%s139 + $0x8] sm:$0xff]
  %s142 = scalar_lea.vmem %s0, 160
  %v143 = vld [vmem:[%s142] sm:$0xff]
  %v144 = vld [vmem:[%s142 + $0x8] sm:$0xff]
  %v145 = vpack.c.bf16 %v91, %v91
  %147 = vrot.lane.b32.xlu0 %v145, 32
  %v148 = vpop.permute.xlu0 %147
  %v150 = vsel %vm53, %v148, 0
  %152 = vmatpush.bf16.msra.mxu0 0
  %153 = vmatpush.bf16.msra.mxu0 0
  %154 = vmatpush.bf16.msra.mxu0 0
  %155 = vmatpush.bf16.msra.mxu0 0
  %156 = vmatpush.bf16.msra.mxu0 0
  %157 = vmatpush.bf16.msra.mxu0 0
  %158 = vmatpush.bf16.msra.mxu0 %v50
  %159 = vmatpush.bf16.msra.mxu0 %v49
  %160 = vmatmul.bf16.gmra.mxu0 %v150
  %v161 = vpop.f32.mrf.mxu0
  %v162 = vadd.f32 0.0, %v161
  %v163 = vpop.f32.mrf.mxu0
  %164 = vdwg.mxu0
  %v165 = vadd.f32 %v140, %v162
  %v166 = vmul.f32 %v165, %v26
  %v167 = vtanh.pop %v166
  %v168 = vmul.f32 %v167, %v26
  %v169 = vadd.f32 %v168, %v27
  %v170 = vmul.f32 %v169, %v85
  %172 = vrot.lane.b32.xlu0 %v169, 64
  %v173 = vpop.permute.xlu0 %172
  %v175 = vmul.f32 %v169, %v173
  %177 = vrot.lane.b32.xlu0 %v175, 32
  %v178 = vpop.permute.xlu0 %177
  %v180 = vadd.f32 %v170, %v178
  %v181 = vtanh.pop %v180
  %183 = vrot.lane.b32.xlu0 %v181, 64
  %v184 = vpop.permute.xlu0 %183
  %v186 = vmul.f32 %v169, %v184
  %v187 = vpack.c.bf16 %v138, %v138
  %189 = vrot.lane.b32.xlu0 %v187, 32
  %v190 = vpop.permute.xlu0 %189
  %v192 = vsel %vm53, %v190, 0
  %194 = vmatpush.bf16.msra.mxu0 0
  %195 = vmatpush.bf16.msra.mxu0 0
  %196 = vmatpush.bf16.msra.mxu0 0
  %197 = vmatpush.bf16.msra.mxu0 0
  %198 = vmatpush.bf16.msra.mxu0 0
  %199 = vmatpush.bf16.msra.mxu0 0
  %200 = vmatpush.bf16.msra.mxu0 %v101
  %201 = vmatpush.bf16.msra.mxu0 %v100
  %202 = vmatmul.bf16.gmra.mxu0 %v192
  %v203 = vpop.f32.mrf.mxu0
  %v204 = vadd.f32 0.0, %v203
  %v205 = vpop.f32.mrf.mxu0
  %206 = vdwg.mxu0
  %v207 = vadd.f32 %v144, %v204
  %v208 = vmul.f32 %v207, %v26
  %v209 = vtanh.pop %v208
  %v210 = vmul.f32 %v209, %v26
  %v211 = vadd.f32 %v210, %v27
  %v212 = vmul.f32 %v211, %v132
  %214 = vrot.lane.b32.xlu0 %v211, 64
  %v215 = vpop.permute.xlu0 %214
  %v217 = vmul.f32 %v211, %v215
  %219 = vrot.lane.b32.xlu0 %v217, 32
  %v220 = vpop.permute.xlu0 %219
  %v222 = vadd.f32 %v212, %v220
  %v223 = vtanh.pop %v222
  %225 = vrot.lane.b32.xlu0 %v223, 64
  %v226 = vpop.permute.xlu0 %225
  %v228 = vmul.f32 %v211, %v226
  %s229 = scalar_lea.vmem %s0, 32
  %v230 = vld [vmem:[%s229] sm:$0xff]
  %v231 = vld [vmem:[%s229 + $0x8] sm:$0xff]
  %s232 = scalar_lea.vmem %s0, 144
  %v233 = vld [vmem:[%s232] sm:$0xff]
  %v234 = vld [vmem:[%s232 + $0x8] sm:$0xff]
  %v235 = vpack.c.bf16 %v186, %v186
  %237 = vrot.lane.b32.xlu0 %v235, 32
  %v238 = vpop.permute.xlu0 %237
  %v240 = vsel %vm53, %v238, 0
  %242 = vmatpush.bf16.msra.mxu0 0
  %243 = vmatpush.bf16.msra.mxu0 0
  %244 = vmatpush.bf16.msra.mxu0 0
  %245 = vmatpush.bf16.msra.mxu0 0
  %246 = vmatpush.bf16.msra.mxu0 0
  %247 = vmatpush.bf16.msra.mxu0 0
  %248 = vmatpush.bf16.msra.mxu0 %v50
  %249 = vmatpush.bf16.msra.mxu0 %v49
  %250 = vmatmul.bf16.gmra.mxu0 %v240
  %v251 = vpop.f32.mrf.mxu0
  %v252 = vadd.f32 0.0, %v251
  %v253 = vpop.f32.mrf.mxu0
  %254 = vdwg.mxu0
  %v255 = vadd.f32 %v230, %v252
  %v256 = vmul.f32 %v255, %v26
  %v257 = vtanh.pop %v256
  %v258 = vmul.f32 %v257, %v26
  %v259 = vadd.f32 %v258, %v27
  %v260 = vmul.f32 %v259, %v180
  %262 = vrot.lane.b32.xlu0 %v259, 64
  %v263 = vpop.permute.xlu0 %262
  %v265 = vmul.f32 %v259, %v263
  %267 = vrot.lane.b32.xlu0 %v265, 32
  %v268 = vpop.permute.xlu0 %267
  %v270 = vadd.f32 %v260, %v268
  %v271 = vtanh.pop %v270
  %273 = vrot.lane.b32.xlu0 %v271, 64
  %v274 = vpop.permute.xlu0 %273
  %v276 = vmul.f32 %v259, %v274
  %v277 = vpack.c.bf16 %v228, %v228
  %279 = vrot.lane.b32.xlu0 %v277, 32
  %v280 = vpop.permute.xlu0 %279
  %v282 = vsel %vm53, %v280, 0
  %284 = vmatpush.bf16.msra.mxu0 0
  %285 = vmatpush.bf16.msra.mxu0 0
  %286 = vmatpush.bf16.msra.mxu0 0
  %287 = vmatpush.bf16.msra.mxu0 0
  %288 = vmatpush.bf16.msra.mxu0 0
  %289 = vmatpush.bf16.msra.mxu0 0
  %290 = vmatpush.bf16.msra.mxu0 %v101
  %291 = vmatpush.bf16.msra.mxu0 %v100
  %292 = vmatmul.bf16.gmra.mxu0 %v282
  %v293 = vpop.f32.mrf.mxu0
  %v294 = vadd.f32 0.0, %v293
  %v295 = vpop.f32.mrf.mxu0
  %296 = vdwg.mxu0
  %v297 = vadd.f32 %v234, %v294
  %v298 = vmul.f32 %v297, %v26
  %v299 = vtanh.pop %v298
  %v300 = vmul.f32 %v299, %v26
  %v301 = vadd.f32 %v300, %v27
  %v302 = vmul.f32 %v301, %v222
  %304 = vrot.lane.b32.xlu0 %v301, 64
  %v305 = vpop.permute.xlu0 %304
  %v307 = vmul.f32 %v301, %v305
  %309 = vrot.lane.b32.xlu0 %v307, 32
  %v310 = vpop.permute.xlu0 %309
  %v312 = vadd.f32 %v302, %v310
  %v313 = vtanh.pop %v312
  %315 = vrot.lane.b32.xlu0 %v313, 64
  %v316 = vpop.permute.xlu0 %315
  %v318 = vmul.f32 %v301, %v316
  %s319 = scalar_lea.vmem %s0, 48
  %v320 = vld [vmem:[%s319] sm:$0xff]
  %v321 = vld [vmem:[%s319 + $0x8] sm:$0xff]
  %s322 = scalar_lea.vmem %s0, 128
  %v323 = vld [vmem:[%s322] sm:$0xff]
  %v324 = vld [vmem:[%s322 + $0x8] sm:$0xff]
  %v325 = vpack.c.bf16 %v276, %v276
  %327 = vrot.lane.b32.xlu0 %v325, 32
  %v328 = vpop.permute.xlu0 %327
  %v330 = vsel %vm53, %v328, 0
  %332 = vmatpush.bf16.msra.mxu0 0
  %333 = vmatpush.bf16.msra.mxu0 0
  %334 = vmatpush.bf16.msra.mxu0 0
  %335 = vmatpush.bf16.msra.mxu0 0
  %336 = vmatpush.bf16.msra.mxu0 0
  %337 = vmatpush.bf16.msra.mxu0 0
  %338 = vmatpush.bf16.msra.mxu0 %v50
  %339 = vmatpush.bf16.msra.mxu0 %v49
  %340 = vmatmul.bf16.gmra.mxu0 %v330
  %v341 = vpop.f32.mrf.mxu0
  %v342 = vadd.f32 0.0, %v341
  %v343 = vpop.f32.mrf.mxu0
  %344 = vdwg.mxu0
  %v345 = vadd.f32 %v320, %v342
  %v346 = vmul.f32 %v345, %v26
  %v347 = vtanh.pop %v346
  %v348 = vmul.f32 %v347, %v26
  %v349 = vadd.f32 %v348, %v27
  %v350 = vmul.f32 %v349, %v270
  %352 = vrot.lane.b32.xlu0 %v349, 64
  %v353 = vpop.permute.xlu0 %352
  %v355 = vmul.f32 %v349, %v353
  %357 = vrot.lane.b32.xlu0 %v355, 32
  %v358 = vpop.permute.xlu0 %357
  %v360 = vadd.f32 %v350, %v358
  %v361 = vtanh.pop %v360
  %363 = vrot.lane.b32.xlu0 %v361, 64
  %v364 = vpop.permute.xlu0 %363
  %v366 = vmul.f32 %v349, %v364
  %v367 = vpack.c.bf16 %v318, %v318
  %369 = vrot.lane.b32.xlu0 %v367, 32
  %v370 = vpop.permute.xlu0 %369
  %v372 = vsel %vm53, %v370, 0
  %374 = vmatpush.bf16.msra.mxu0 0
  %375 = vmatpush.bf16.msra.mxu0 0
  %376 = vmatpush.bf16.msra.mxu0 0
  %377 = vmatpush.bf16.msra.mxu0 0
  %378 = vmatpush.bf16.msra.mxu0 0
  %379 = vmatpush.bf16.msra.mxu0 0
  %380 = vmatpush.bf16.msra.mxu0 %v101
  %381 = vmatpush.bf16.msra.mxu0 %v100
  %382 = vmatmul.bf16.gmra.mxu0 %v372
  %v383 = vpop.f32.mrf.mxu0
  %v384 = vadd.f32 0.0, %v383
  %v385 = vpop.f32.mrf.mxu0
  %386 = vdwg.mxu0
  %v387 = vadd.f32 %v324, %v384
  %v388 = vmul.f32 %v387, %v26
  %v389 = vtanh.pop %v388
  %v390 = vmul.f32 %v389, %v26
  %v391 = vadd.f32 %v390, %v27
  %v392 = vmul.f32 %v391, %v312
  %394 = vrot.lane.b32.xlu0 %v391, 64
  %v395 = vpop.permute.xlu0 %394
  %v397 = vmul.f32 %v391, %v395
  %399 = vrot.lane.b32.xlu0 %v397, 32
  %v400 = vpop.permute.xlu0 %399
  %v402 = vadd.f32 %v392, %v400
  %v403 = vtanh.pop %v402
  %405 = vrot.lane.b32.xlu0 %v403, 64
  %v406 = vpop.permute.xlu0 %405
  %v408 = vmul.f32 %v391, %v406
  %s409 = scalar_lea.vmem %s0, 64
  %v410 = vld [vmem:[%s409] sm:$0xff]
  %v411 = vld [vmem:[%s409 + $0x8] sm:$0xff]
  %s412 = scalar_lea.vmem %s0, 112
  %v413 = vld [vmem:[%s412] sm:$0xff]
  %v414 = vld [vmem:[%s412 + $0x8] sm:$0xff]
  %v415 = vpack.c.bf16 %v366, %v366
  %417 = vrot.lane.b32.xlu0 %v415, 32
  %v418 = vpop.permute.xlu0 %417
  %v420 = vsel %vm53, %v418, 0
  %422 = vmatpush.bf16.msra.mxu0 0
  %423 = vmatpush.bf16.msra.mxu0 0
  %424 = vmatpush.bf16.msra.mxu0 0
  %425 = vmatpush.bf16.msra.mxu0 0
  %426 = vmatpush.bf16.msra.mxu0 0
  %427 = vmatpush.bf16.msra.mxu0 0
  %428 = vmatpush.bf16.msra.mxu0 %v50
  %429 = vmatpush.bf16.msra.mxu0 %v49
  %430 = vmatmul.bf16.gmra.mxu0 %v420
  %v431 = vpop.f32.mrf.mxu0
  %v432 = vadd.f32 0.0, %v431
  %v433 = vpop.f32.mrf.mxu0
  %434 = vdwg.mxu0
  %v435 = vadd.f32 %v410, %v432
  %v436 = vmul.f32 %v435, %v26
  %v437 = vtanh.pop %v436
  %v438 = vmul.f32 %v437, %v26
  %v439 = vadd.f32 %v438, %v27
  %v440 = vmul.f32 %v439, %v360
  %442 = vrot.lane.b32.xlu0 %v439, 64
  %v443 = vpop.permute.xlu0 %442
  %v445 = vmul.f32 %v439, %v443
  %447 = vrot.lane.b32.xlu0 %v445, 32
  %v448 = vpop.permute.xlu0 %447
  %v450 = vadd.f32 %v440, %v448
  %v451 = vtanh.pop %v450
  %453 = vrot.lane.b32.xlu0 %v451, 64
  %v454 = vpop.permute.xlu0 %453
  %v456 = vmul.f32 %v439, %v454
  %v457 = vpack.c.bf16 %v408, %v408
  %459 = vrot.lane.b32.xlu0 %v457, 32
  %v460 = vpop.permute.xlu0 %459
  %v462 = vsel %vm53, %v460, 0
  %464 = vmatpush.bf16.msra.mxu0 0
  %465 = vmatpush.bf16.msra.mxu0 0
  %466 = vmatpush.bf16.msra.mxu0 0
  %467 = vmatpush.bf16.msra.mxu0 0
  %468 = vmatpush.bf16.msra.mxu0 0
  %469 = vmatpush.bf16.msra.mxu0 0
  %470 = vmatpush.bf16.msra.mxu0 %v101
  %471 = vmatpush.bf16.msra.mxu0 %v100
  %472 = vmatmul.bf16.gmra.mxu0 %v462
  %v473 = vpop.f32.mrf.mxu0
  %v474 = vadd.f32 0.0, %v473
  %v475 = vpop.f32.mrf.mxu0
  %476 = vdwg.mxu0
  %v477 = vadd.f32 %v414, %v474
  %v478 = vmul.f32 %v477, %v26
  %v479 = vtanh.pop %v478
  %v480 = vmul.f32 %v479, %v26
  %v481 = vadd.f32 %v480, %v27
  %v482 = vmul.f32 %v481, %v402
  %484 = vrot.lane.b32.xlu0 %v481, 64
  %v485 = vpop.permute.xlu0 %484
  %v487 = vmul.f32 %v481, %v485
  %489 = vrot.lane.b32.xlu0 %v487, 32
  %v490 = vpop.permute.xlu0 %489
  %v492 = vadd.f32 %v482, %v490
  %v493 = vtanh.pop %v492
  %495 = vrot.lane.b32.xlu0 %v493, 64
  %v496 = vpop.permute.xlu0 %495
  %v498 = vmul.f32 %v481, %v496
  %s499 = scalar_lea.vmem %s0, 80
  %v500 = vld [vmem:[%s499] sm:$0xff]
  %v501 = vld [vmem:[%s499 + $0x8] sm:$0xff]
  %s502 = scalar_lea.vmem %s0, 96
  %v503 = vld [vmem:[%s502] sm:$0xff]
  %v504 = vld [vmem:[%s502 + $0x8] sm:$0xff]
  %v505 = vpack.c.bf16 %v456, %v456
  %507 = vrot.lane.b32.xlu0 %v505, 32
  %v508 = vpop.permute.xlu0 %507
  %v510 = vsel %vm53, %v508, 0
  %512 = vmatpush.bf16.msra.mxu0 0
  %513 = vmatpush.bf16.msra.mxu0 0
  %514 = vmatpush.bf16.msra.mxu0 0
  %515 = vmatpush.bf16.msra.mxu0 0
  %516 = vmatpush.bf16.msra.mxu0 0
  %517 = vmatpush.bf16.msra.mxu0 0
  %518 = vmatpush.bf16.msra.mxu0 %v50
  %519 = vmatpush.bf16.msra.mxu0 %v49
  %520 = vmatmul.bf16.gmra.mxu0 %v510
  %v521 = vpop.f32.mrf.mxu0
  %v522 = vadd.f32 0.0, %v521
  %v523 = vpop.f32.mrf.mxu0
  %524 = vdwg.mxu0
  %v525 = vadd.f32 %v500, %v522
  %v526 = vmul.f32 %v525, %v26
  %v527 = vtanh.pop %v526
  %v528 = vmul.f32 %v527, %v26
  %v529 = vadd.f32 %v528, %v27
  %v530 = vmul.f32 %v529, %v450
  %532 = vrot.lane.b32.xlu0 %v529, 64
  %v533 = vpop.permute.xlu0 %532
  %v535 = vmul.f32 %v529, %v533
  %537 = vrot.lane.b32.xlu0 %v535, 32
  %v538 = vpop.permute.xlu0 %537
  %v540 = vadd.f32 %v530, %v538
  %v541 = vtanh.pop %v540
  %543 = vrot.lane.b32.xlu0 %v541, 64
  %v544 = vpop.permute.xlu0 %543
  %v546 = vmul.f32 %v529, %v544
  %v547 = vpack.c.bf16 %v498, %v498
  %549 = vrot.lane.b32.xlu0 %v547, 32
  %v550 = vpop.permute.xlu0 %549
  %v552 = vsel %vm53, %v550, 0
  %554 = vmatpush.bf16.msra.mxu0 0
  %555 = vmatpush.bf16.msra.mxu0 0
  %556 = vmatpush.bf16.msra.mxu0 0
  %557 = vmatpush.bf16.msra.mxu0 0
  %558 = vmatpush.bf16.msra.mxu0 0
  %559 = vmatpush.bf16.msra.mxu0 0
  %560 = vmatpush.bf16.msra.mxu0 %v101
  %561 = vmatpush.bf16.msra.mxu0 %v100
  %562 = vmatmul.bf16.gmra.mxu0 %v552
  %v563 = vpop.f32.mrf.mxu0
  %v564 = vadd.f32 0.0, %v563
  %v565 = vpop.f32.mrf.mxu0
  %566 = vdwg.mxu0
  %v567 = vadd.f32 %v504, %v564
  %v568 = vmul.f32 %v567, %v26
  %v569 = vtanh.pop %v568
  %v570 = vmul.f32 %v569, %v26
  %v571 = vadd.f32 %v570, %v27
  %v572 = vmul.f32 %v571, %v492
  %574 = vrot.lane.b32.xlu0 %v571, 64
  %v575 = vpop.permute.xlu0 %574
  %v577 = vmul.f32 %v571, %v575
  %579 = vrot.lane.b32.xlu0 %v577, 32
  %v580 = vpop.permute.xlu0 %579
  %v582 = vadd.f32 %v572, %v580
  %v583 = vtanh.pop %v582
  %585 = vrot.lane.b32.xlu0 %v583, 64
  %v586 = vpop.permute.xlu0 %585
  %v588 = vmul.f32 %v571, %v586
  %v589 = vpack.c.bf16 %v546, %v546
  %591 = vrot.lane.b32.xlu0 %v589, 32
  %v592 = vpop.permute.xlu0 %591
  %v594 = vsel %vm53, %v592, 0
  %596 = vmatpush.bf16.msra.mxu0 0
  %597 = vmatpush.bf16.msra.mxu0 0
  %598 = vmatpush.bf16.msra.mxu0 0
  %599 = vmatpush.bf16.msra.mxu0 0
  %600 = vmatpush.bf16.msra.mxu0 0
  %601 = vmatpush.bf16.msra.mxu0 0
  %602 = vmatpush.bf16.msra.mxu0 %v50
  %603 = vmatpush.bf16.msra.mxu0 %v49
  %604 = vmatmul.bf16.gmra.mxu0 %v594
  %v605 = vpop.f32.mrf.mxu0
  %v606 = vadd.f32 0.0, %v605
  %v607 = vpop.f32.mrf.mxu0
  %608 = vdwg.mxu0
  %v609 = vadd.f32 %v503, %v606
  %v610 = vmul.f32 %v609, %v26
  %v611 = vtanh.pop %v610
  %v612 = vmul.f32 %v611, %v26
  %v613 = vadd.f32 %v612, %v27
  %v614 = vmul.f32 %v613, %v540
  %616 = vrot.lane.b32.xlu0 %v613, 64
  %v617 = vpop.permute.xlu0 %616
  %v619 = vmul.f32 %v613, %v617
  %621 = vrot.lane.b32.xlu0 %v619, 32
  %v622 = vpop.permute.xlu0 %621
  %v624 = vadd.f32 %v614, %v622
  %v625 = vtanh.pop %v624
  %627 = vrot.lane.b32.xlu0 %v625, 64
  %v628 = vpop.permute.xlu0 %627
  %v630 = vmul.f32 %v613, %v628
  %v631 = vpack.c.bf16 %v588, %v588
  %633 = vrot.lane.b32.xlu0 %v631, 32
  %v634 = vpop.permute.xlu0 %633
  %v636 = vsel %vm53, %v634, 0
  %638 = vmatpush.bf16.msra.mxu0 0
  %639 = vmatpush.bf16.msra.mxu0 0
  %640 = vmatpush.bf16.msra.mxu0 0
  %641 = vmatpush.bf16.msra.mxu0 0
  %642 = vmatpush.bf16.msra.mxu0 0
  %643 = vmatpush.bf16.msra.mxu0 0
  %644 = vmatpush.bf16.msra.mxu0 %v101
  %645 = vmatpush.bf16.msra.mxu0 %v100
  %646 = vmatmul.bf16.gmra.mxu0 %v636
  %v647 = vpop.f32.mrf.mxu0
  %v648 = vadd.f32 0.0, %v647
  %v649 = vpop.f32.mrf.mxu0
  %650 = vdwg.mxu0
  %v651 = vadd.f32 %v501, %v648
  %v652 = vmul.f32 %v651, %v26
  %v653 = vtanh.pop %v652
  %v654 = vmul.f32 %v653, %v26
  %v655 = vadd.f32 %v654, %v27
  %v656 = vmul.f32 %v655, %v582
  %658 = vrot.lane.b32.xlu0 %v655, 64
  %v659 = vpop.permute.xlu0 %658
  %v661 = vmul.f32 %v655, %v659
  %663 = vrot.lane.b32.xlu0 %v661, 32
  %v664 = vpop.permute.xlu0 %663
  %v666 = vadd.f32 %v656, %v664
  %v667 = vtanh.pop %v666
  %669 = vrot.lane.b32.xlu0 %v667, 64
  %v670 = vpop.permute.xlu0 %669
  %v672 = vmul.f32 %v655, %v670
  %v673 = vpack.c.bf16 %v630, %v630
  %675 = vrot.lane.b32.xlu0 %v673, 32
  %v676 = vpop.permute.xlu0 %675
  %v678 = vsel %vm53, %v676, 0
  %680 = vmatpush.bf16.msra.mxu0 0
  %681 = vmatpush.bf16.msra.mxu0 0
  %682 = vmatpush.bf16.msra.mxu0 0
  %683 = vmatpush.bf16.msra.mxu0 0
  %684 = vmatpush.bf16.msra.mxu0 0
  %685 = vmatpush.bf16.msra.mxu0 0
  %686 = vmatpush.bf16.msra.mxu0 %v50
  %687 = vmatpush.bf16.msra.mxu0 %v49
  %688 = vmatmul.bf16.gmra.mxu0 %v678
  %v689 = vpop.f32.mrf.mxu0
  %v690 = vadd.f32 0.0, %v689
  %v691 = vpop.f32.mrf.mxu0
  %692 = vdwg.mxu0
  %v693 = vadd.f32 %v413, %v690
  %v694 = vmul.f32 %v693, %v26
  %v695 = vtanh.pop %v694
  %v696 = vmul.f32 %v695, %v26
  %v697 = vadd.f32 %v696, %v27
  %v698 = vmul.f32 %v697, %v624
  %700 = vrot.lane.b32.xlu0 %v697, 64
  %v701 = vpop.permute.xlu0 %700
  %v703 = vmul.f32 %v697, %v701
  %705 = vrot.lane.b32.xlu0 %v703, 32
  %v706 = vpop.permute.xlu0 %705
  %v708 = vadd.f32 %v698, %v706
  %v709 = vtanh.pop %v708
  %711 = vrot.lane.b32.xlu0 %v709, 64
  %v712 = vpop.permute.xlu0 %711
  %v714 = vmul.f32 %v697, %v712
  %v715 = vpack.c.bf16 %v672, %v672
  %717 = vrot.lane.b32.xlu0 %v715, 32
  %v718 = vpop.permute.xlu0 %717
  %v720 = vsel %vm53, %v718, 0
  %722 = vmatpush.bf16.msra.mxu0 0
  %723 = vmatpush.bf16.msra.mxu0 0
  %724 = vmatpush.bf16.msra.mxu0 0
  %725 = vmatpush.bf16.msra.mxu0 0
  %726 = vmatpush.bf16.msra.mxu0 0
  %727 = vmatpush.bf16.msra.mxu0 0
  %728 = vmatpush.bf16.msra.mxu0 %v101
  %729 = vmatpush.bf16.msra.mxu0 %v100
  %730 = vmatmul.bf16.gmra.mxu0 %v720
  %v731 = vpop.f32.mrf.mxu0
  %v732 = vadd.f32 0.0, %v731
  %v733 = vpop.f32.mrf.mxu0
  %734 = vdwg.mxu0
  %v735 = vadd.f32 %v411, %v732
  %v736 = vmul.f32 %v735, %v26
  %v737 = vtanh.pop %v736
  %v738 = vmul.f32 %v737, %v26
  %v739 = vadd.f32 %v738, %v27
  %v740 = vmul.f32 %v739, %v666
  %742 = vrot.lane.b32.xlu0 %v739, 64
  %v743 = vpop.permute.xlu0 %742
  %v745 = vmul.f32 %v739, %v743
  %747 = vrot.lane.b32.xlu0 %v745, 32
  %v748 = vpop.permute.xlu0 %747
  %v750 = vadd.f32 %v740, %v748
  %v751 = vtanh.pop %v750
  %753 = vrot.lane.b32.xlu0 %v751, 64
  %v754 = vpop.permute.xlu0 %753
  %v756 = vmul.f32 %v739, %v754
  %v757 = vpack.c.bf16 %v714, %v714
  %759 = vrot.lane.b32.xlu0 %v757, 32
  %v760 = vpop.permute.xlu0 %759
  %v762 = vsel %vm53, %v760, 0
  %764 = vmatpush.bf16.msra.mxu0 0
  %765 = vmatpush.bf16.msra.mxu0 0
  %766 = vmatpush.bf16.msra.mxu0 0
  %767 = vmatpush.bf16.msra.mxu0 0
  %768 = vmatpush.bf16.msra.mxu0 0
  %769 = vmatpush.bf16.msra.mxu0 0
  %770 = vmatpush.bf16.msra.mxu0 %v50
  %771 = vmatpush.bf16.msra.mxu0 %v49
  %772 = vmatmul.bf16.gmra.mxu0 %v762
  %v773 = vpop.f32.mrf.mxu0
  %v774 = vadd.f32 0.0, %v773
  %v775 = vpop.f32.mrf.mxu0
  %776 = vdwg.mxu0
  %v777 = vadd.f32 %v323, %v774
  %v778 = vmul.f32 %v777, %v26
  %v779 = vtanh.pop %v778
  %v780 = vmul.f32 %v779, %v26
  %v781 = vadd.f32 %v780, %v27
  %v782 = vmul.f32 %v781, %v708
  %784 = vrot.lane.b32.xlu0 %v781, 64
  %v785 = vpop.permute.xlu0 %784
  %v787 = vmul.f32 %v781, %v785
  %789 = vrot.lane.b32.xlu0 %v787, 32
  %v790 = vpop.permute.xlu0 %789
  %v792 = vadd.f32 %v782, %v790
  %v793 = vtanh.pop %v792
  %795 = vrot.lane.b32.xlu0 %v793, 64
  %v796 = vpop.permute.xlu0 %795
  %v798 = vmul.f32 %v781, %v796
  %v799 = vpack.c.bf16 %v756, %v756
  %801 = vrot.lane.b32.xlu0 %v799, 32
  %v802 = vpop.permute.xlu0 %801
  %v804 = vsel %vm53, %v802, 0
  %806 = vmatpush.bf16.msra.mxu0 0
  %807 = vmatpush.bf16.msra.mxu0 0
  %808 = vmatpush.bf16.msra.mxu0 0
  %809 = vmatpush.bf16.msra.mxu0 0
  %810 = vmatpush.bf16.msra.mxu0 0
  %811 = vmatpush.bf16.msra.mxu0 0
  %812 = vmatpush.bf16.msra.mxu0 %v101
  %813 = vmatpush.bf16.msra.mxu0 %v100
  %814 = vmatmul.bf16.gmra.mxu0 %v804
  %v815 = vpop.f32.mrf.mxu0
  %v816 = vadd.f32 0.0, %v815
  %v817 = vpop.f32.mrf.mxu0
  %818 = vdwg.mxu0
  %v819 = vadd.f32 %v321, %v816
  %v820 = vmul.f32 %v819, %v26
  %v821 = vtanh.pop %v820
  %v822 = vmul.f32 %v821, %v26
  %v823 = vadd.f32 %v822, %v27
  %v824 = vmul.f32 %v823, %v750
  %826 = vrot.lane.b32.xlu0 %v823, 64
  %v827 = vpop.permute.xlu0 %826
  %v829 = vmul.f32 %v823, %v827
  %831 = vrot.lane.b32.xlu0 %v829, 32
  %v832 = vpop.permute.xlu0 %831
  %v834 = vadd.f32 %v824, %v832
  %v835 = vtanh.pop %v834
  %837 = vrot.lane.b32.xlu0 %v835, 64
  %v838 = vpop.permute.xlu0 %837
  %v840 = vmul.f32 %v823, %v838
  %v841 = vpack.c.bf16 %v798, %v798
  %843 = vrot.lane.b32.xlu0 %v841, 32
  %v844 = vpop.permute.xlu0 %843
  %v846 = vsel %vm53, %v844, 0
  %848 = vmatpush.bf16.msra.mxu0 0
  %849 = vmatpush.bf16.msra.mxu0 0
  %850 = vmatpush.bf16.msra.mxu0 0
  %851 = vmatpush.bf16.msra.mxu0 0
  %852 = vmatpush.bf16.msra.mxu0 0
  %853 = vmatpush.bf16.msra.mxu0 0
  %854 = vmatpush.bf16.msra.mxu0 %v50
  %855 = vmatpush.bf16.msra.mxu0 %v49
  %856 = vmatmul.bf16.gmra.mxu0 %v846
  %v857 = vpop.f32.mrf.mxu0
  %v858 = vadd.f32 0.0, %v857
  %v859 = vpop.f32.mrf.mxu0
  %860 = vdwg.mxu0
  %v861 = vadd.f32 %v233, %v858
  %v862 = vmul.f32 %v861, %v26
  %v863 = vtanh.pop %v862
  %v864 = vmul.f32 %v863, %v26
  %v865 = vadd.f32 %v864, %v27
  %v866 = vmul.f32 %v865, %v792
  %868 = vrot.lane.b32.xlu0 %v865, 64
  %v869 = vpop.permute.xlu0 %868
  %v871 = vmul.f32 %v865, %v869
  %873 = vrot.lane.b32.xlu0 %v871, 32
  %v874 = vpop.permute.xlu0 %873
  %v876 = vadd.f32 %v866, %v874
  %v877 = vtanh.pop %v876
  %879 = vrot.lane.b32.xlu0 %v877, 64
  %v880 = vpop.permute.xlu0 %879
  %v882 = vmul.f32 %v865, %v880
  %v883 = vpack.c.bf16 %v840, %v840
  %885 = vrot.lane.b32.xlu0 %v883, 32
  %v886 = vpop.permute.xlu0 %885
  %v888 = vsel %vm53, %v886, 0
  %890 = vmatpush.bf16.msra.mxu0 0
  %891 = vmatpush.bf16.msra.mxu0 0
  %892 = vmatpush.bf16.msra.mxu0 0
  %893 = vmatpush.bf16.msra.mxu0 0
  %894 = vmatpush.bf16.msra.mxu0 0
  %895 = vmatpush.bf16.msra.mxu0 0
  %896 = vmatpush.bf16.msra.mxu0 %v101
  %897 = vmatpush.bf16.msra.mxu0 %v100
  %898 = vmatmul.bf16.gmra.mxu0 %v888
  %v899 = vpop.f32.mrf.mxu0
  %v900 = vadd.f32 0.0, %v899
  %v901 = vpop.f32.mrf.mxu0
  %902 = vdwg.mxu0
  %v903 = vadd.f32 %v231, %v900
  %v904 = vmul.f32 %v903, %v26
  %v905 = vtanh.pop %v904
  %v906 = vmul.f32 %v905, %v26
  %v907 = vadd.f32 %v906, %v27
  %v908 = vmul.f32 %v907, %v834
  %910 = vrot.lane.b32.xlu0 %v907, 64
  %v911 = vpop.permute.xlu0 %910
  %v913 = vmul.f32 %v907, %v911
  %915 = vrot.lane.b32.xlu0 %v913, 32
  %v916 = vpop.permute.xlu0 %915
  %v918 = vadd.f32 %v908, %v916
  %v919 = vtanh.pop %v918
  %921 = vrot.lane.b32.xlu0 %v919, 64
  %v922 = vpop.permute.xlu0 %921
  %v924 = vmul.f32 %v907, %v922
  %v925 = vpack.c.bf16 %v882, %v882
  %927 = vrot.lane.b32.xlu0 %v925, 32
  %v928 = vpop.permute.xlu0 %927
  %v930 = vsel %vm53, %v928, 0
  %932 = vmatpush.bf16.msra.mxu0 0
  %933 = vmatpush.bf16.msra.mxu0 0
  %934 = vmatpush.bf16.msra.mxu0 0
  %935 = vmatpush.bf16.msra.mxu0 0
  %936 = vmatpush.bf16.msra.mxu0 0
  %937 = vmatpush.bf16.msra.mxu0 0
  %938 = vmatpush.bf16.msra.mxu0 %v50
  %939 = vmatpush.bf16.msra.mxu0 %v49
  %940 = vmatmul.bf16.gmra.mxu0 %v930
  %v941 = vpop.f32.mrf.mxu0
  %v942 = vadd.f32 0.0, %v941
  %v943 = vpop.f32.mrf.mxu0
  %944 = vdwg.mxu0
  %v945 = vadd.f32 %v143, %v942
  %v946 = vmul.f32 %v945, %v26
  %v947 = vtanh.pop %v946
  %v948 = vmul.f32 %v947, %v26
  %v949 = vadd.f32 %v948, %v27
  %v950 = vmul.f32 %v949, %v876
  %952 = vrot.lane.b32.xlu0 %v949, 64
  %v953 = vpop.permute.xlu0 %952
  %v955 = vmul.f32 %v949, %v953
  %957 = vrot.lane.b32.xlu0 %v955, 32
  %v958 = vpop.permute.xlu0 %957
  %v960 = vadd.f32 %v950, %v958
  %v961 = vtanh.pop %v960
  %963 = vrot.lane.b32.xlu0 %v961, 64
  %v964 = vpop.permute.xlu0 %963
  %v966 = vmul.f32 %v949, %v964
  %v967 = vpack.c.bf16 %v924, %v924
  %969 = vrot.lane.b32.xlu0 %v967, 32
  %v970 = vpop.permute.xlu0 %969
  %v972 = vsel %vm53, %v970, 0
  %974 = vmatpush.bf16.msra.mxu0 0
  %975 = vmatpush.bf16.msra.mxu0 0
  %976 = vmatpush.bf16.msra.mxu0 0
  %977 = vmatpush.bf16.msra.mxu0 0
  %978 = vmatpush.bf16.msra.mxu0 0
  %979 = vmatpush.bf16.msra.mxu0 0
  %980 = vmatpush.bf16.msra.mxu0 %v101
  %981 = vmatpush.bf16.msra.mxu0 %v100
  %982 = vmatmul.bf16.gmra.mxu0 %v972
  %v983 = vpop.f32.mrf.mxu0
  %v984 = vadd.f32 0.0, %v983
  %v985 = vpop.f32.mrf.mxu0
  %986 = vdwg.mxu0
  %v987 = vadd.f32 %v141, %v984
  %v988 = vmul.f32 %v987, %v26
  %v989 = vtanh.pop %v988
  %v990 = vmul.f32 %v989, %v26
  %v991 = vadd.f32 %v990, %v27
  %v992 = vmul.f32 %v991, %v918
  %994 = vrot.lane.b32.xlu0 %v991, 64
  %v995 = vpop.permute.xlu0 %994
  %v997 = vmul.f32 %v991, %v995
  %999 = vrot.lane.b32.xlu0 %v997, 32
  %v1000 = vpop.permute.xlu0 %999
  %v1002 = vadd.f32 %v992, %v1000
  %v1003 = vtanh.pop %v1002
  %1005 = vrot.lane.b32.xlu0 %v1003, 64
  %v1006 = vpop.permute.xlu0 %1005
  %v1008 = vmul.f32 %v991, %v1006
  %v1009 = vpack.c.bf16 %v966, %v966
  %1011 = vrot.lane.b32.xlu0 %v1009, 32
  %v1012 = vpop.permute.xlu0 %1011
  %v1014 = vsel %vm53, %v1012, 0
  %1016 = vmatpush.bf16.msra.mxu0 0
  %1017 = vmatpush.bf16.msra.mxu0 0
  %1018 = vmatpush.bf16.msra.mxu0 0
  %1019 = vmatpush.bf16.msra.mxu0 0
  %1020 = vmatpush.bf16.msra.mxu0 0
  %1021 = vmatpush.bf16.msra.mxu0 0
  %1022 = vmatpush.bf16.msra.mxu0 %v50
  %1023 = vmatpush.bf16.msra.mxu0 %v49
  %1024 = vmatmul.bf16.gmra.mxu0 %v1014
  %v1025 = vpop.f32.mrf.mxu0
  %v1026 = vadd.f32 0.0, %v1025
  %v1027 = vpop.f32.mrf.mxu0
  %1028 = vdwg.mxu0
  %v1029 = vadd.f32 %v39, %v1026
  %v1030 = vmul.f32 %v1029, %v26
  %v1031 = vtanh.pop %v1030
  %v1032 = vmul.f32 %v1031, %v26
  %v1033 = vadd.f32 %v1032, %v27
  %v1034 = vmul.f32 %v1033, %v960
  %1036 = vrot.lane.b32.xlu0 %v1033, 64
  %v1037 = vpop.permute.xlu0 %1036
  %v1039 = vmul.f32 %v1033, %v1037
  %1041 = vrot.lane.b32.xlu0 %v1039, 32
  %v1042 = vpop.permute.xlu0 %1041
  %v1044 = vadd.f32 %v1034, %v1042
  %v1045 = vtanh.pop %v1044
  %1047 = vrot.lane.b32.xlu0 %v1045, 64
  %v1048 = vpop.permute.xlu0 %1047
  %v1050 = vmul.f32 %v1033, %v1048
  %v1051 = vpack.c.bf16 %v1008, %v1008
  %1053 = vrot.lane.b32.xlu0 %v1051, 32
  %v1054 = vpop.permute.xlu0 %1053
  %v1056 = vsel %vm53, %v1054, 0
  %1058 = vmatpush.bf16.msra.mxu0 0
  %1059 = vmatpush.bf16.msra.mxu0 0
  %1060 = vmatpush.bf16.msra.mxu0 0
  %1061 = vmatpush.bf16.msra.mxu0 0
  %1062 = vmatpush.bf16.msra.mxu0 0
  %1063 = vmatpush.bf16.msra.mxu0 0
  %1064 = vmatpush.bf16.msra.mxu0 %v101
  %1065 = vmatpush.bf16.msra.mxu0 %v100
  %1066 = vmatmul.bf16.gmra.mxu0 %v1056
  %v1067 = vpop.f32.mrf.mxu0
  %v1068 = vadd.f32 0.0, %v1067
  %v1069 = vpop.f32.mrf.mxu0
  %1070 = vdwg.mxu0
  %v1071 = vadd.f32 %v37, %v1068
  %v1072 = vmul.f32 %v1071, %v26
  %v1073 = vtanh.pop %v1072
  %v1074 = vmul.f32 %v1073, %v26
  %v1075 = vadd.f32 %v1074, %v27
  %v1076 = vmul.f32 %v1075, %v1002
  %1078 = vrot.lane.b32.xlu0 %v1075, 64
  %v1079 = vpop.permute.xlu0 %1078
  %v1081 = vmul.f32 %v1075, %v1079
  %1083 = vrot.lane.b32.xlu0 %v1081, 32
  %v1084 = vpop.permute.xlu0 %1083
  %v1086 = vadd.f32 %v1076, %v1084
  %v1087 = vtanh.pop %v1086
  %1089 = vrot.lane.b32.xlu0 %v1087, 64
  %v1090 = vpop.permute.xlu0 %1089
  %v1092 = vmul.f32 %v1075, %v1090
  %1094 = vrot.lane.b32.xlu0 %v1050, 32
  %v1095 = vpop.permute.xlu0 %1094
  %1098 = vrot.lane.b32.xlu0 %v1092, 64
  %v1099 = vpop.permute.xlu0 %1098
  %v1101 = vsel %vm53, %v1095, %v1099
  %v1102 = vld [vmem:[%s3] sm:$0xff]
  %v1103 = vld [vmem:[%s3 + $0x8] sm:$0xff]
  %v1104 = vld [vmem:[%s3 + $0x10] sm:$0xff]
  %v1105 = vld [vmem:[%s3 + $0x18] sm:$0xff]
  %v1106 = vld [vmem:[%s3 + $0x20] sm:$0xff]
  %v1107 = vld [vmem:[%s3 + $0x28] sm:$0xff]
  %v1108 = vld [vmem:[%s3 + $0x30] sm:$0xff]
  %v1109 = vld [vmem:[%s3 + $0x38] sm:$0xff]
  %v1110 = vld [vmem:[%s4] sm:$0x1]
  %v1112 = vperm.slane %v1110, 0
  %vm1114 = vcmask 523264
  %v1116 = vsel %vm1114, %v1101, 0
  %1118 = vmatpush.msra.mxu0 0.0
  %1119 = vmatpush.msra.mxu0 0.0
  %1120 = vmatpush.msra.mxu0 0.0
  %1121 = vmatpush.msra.mxu0 0.0
  %1122 = vmatpush.msra.mxu0 0.0
  %1123 = vmatpush.msra.mxu0 0.0
  %1124 = vmatpush.msra.mxu0 0.0
  %1125 = vmatpush.msra.mxu0 0.0
  %1126 = vmatpush.msra.mxu0 %v1109
  %1127 = vmatpush.msra.mxu0 %v1108
  %1128 = vmatpush.msra.mxu0 %v1107
  %1129 = vmatpush.msra.mxu0 %v1106
  %1130 = vmatpush.msra.mxu0 %v1105
  %1131 = vmatpush.msra.mxu0 %v1104
  %1132 = vmatpush.msra.mxu0 %v1103
  %1133 = vmatpush.msra.mxu0 %v1102
  %1134 = vmatmul.f32.gmra.mxu0 %v1116
  %v1135 = vpop.f32.mrf.mxu0
  %v1136 = vadd.f32 %v1112, %v1135
  %1137 = vdwg.mxu0
  %1138 = vst [vmem:[%s5] sm:$0xff] %v1136
  // Predicated region
  $region22: #{cnn_lstm_forward.3} parent=0 // pred_check
    _
  $region23: #{cnn_lstm_forward.3} parent=0 // pred_check_branch
    %1140 = sbr.rel (0) target = $region25
  $region24: #{cnn_lstm_forward.3} parent=0 // pred_region
    _
  $region25: #{cnn_lstm_forward.3} parent=0 // pred_fallthru
    _
  // Predicated region
  $region26: #{cnn_lstm_forward.3} parent=0 // pred_check
    _
  $region27: #{cnn_lstm_forward.3} parent=0 // pred_check_branch
    %1142 = sbr.rel (0) target = $region29
  $region28: #{cnn_lstm_forward.3} parent=0 // pred_region
    _
  $region29: #{cnn_lstm_forward.3} parent=0 // pred_fallthru
    _

</llo_original>
